<compile_context>
chip_gen: v6e
topology: v6e:2x2x1
jax: 0.10.0
libtpu: 0.0.40
codegen_flags: <defaults>
</compile_context>

<pallas_src>
import functools

import numpy as np
import jax
import jax.numpy as jnp
from jax.experimental import pallas as pl
from jax.experimental.pallas import tpu as pltpu

# keep the pure-JAX reference (and in-kernel dots) at full f32 precision
jax.config.update("jax_default_matmul_precision", "highest")

TM = 128                          # node-tile (MXU M) per grid step
VMEM_LIMIT = 32 * 1024 * 1024     # safe on v5e (16 MiB default) / v6e / v7x (64 MiB)


# --------------------------------------------------------------------------- #
# kernels
# --------------------------------------------------------------------------- #
def _matmul_bias_act_kernel(*refs, pre_act):
    """out = [optional: LeakyReLU(x*scale + shift)] @ W + b  for one (TM, K) tile.

    pre_act=True fuses the previous layer's BatchNorm affine + LeakyReLU(0.2)
    into the input read (elementwise per channel, so gather-then-normalize is
    exactly normalize-then-gather).
    """
    if pre_act:
        x_ref, w_ref, b_ref, sc_ref, sh_ref, o_ref = refs
    else:
        x_ref, w_ref, b_ref, o_ref = refs
    x = x_ref[...].astype(jnp.float32)
    if pre_act:
        x = x * sc_ref[...] + sh_ref[...]
        x = jnp.where(x >= 0.0, x, 0.2 * x)
    acc = jnp.dot(x, w_ref[...].astype(jnp.float32),
                  preferred_element_type=jnp.float32)
    o_ref[...] = (acc + b_ref[...].astype(jnp.float32)).astype(o_ref.dtype)


def _scale_shift_lrelu_kernel(x_ref, sc_ref, sh_ref, o_ref):
    """Fused BatchNorm affine (precomputed scale/shift) + LeakyReLU(0.2)."""
    h = x_ref[...].astype(jnp.float32) * sc_ref[...] + sh_ref[...]
    o_ref[...] = jnp.where(h >= 0.0, h, 0.2 * h).astype(o_ref.dtype)


# --------------------------------------------------------------------------- #
# pallas_call wrappers
# --------------------------------------------------------------------------- #
def _fused_matmul(x2d, w, b, scale_row=None, shift_row=None):
    """(M, K) @ (K, N) + b, optionally with fused pre-activation. M % TM == 0."""
    M, K = x2d.shape
    Nf = w.shape[1]
    assert M % TM == 0
    pre_act = scale_row is not None
    b_row = b.reshape(1, Nf).astype(jnp.float32)

    in_specs = [
        pl.BlockSpec((TM, K), lambda i: (i, 0)),
        pl.BlockSpec((K, Nf), lambda i: (0, 0)),
        pl.BlockSpec((1, Nf), lambda i: (0, 0)),
    ]
    args = [x2d, w, b_row]
    if pre_act:
        in_specs += [pl.BlockSpec((1, K), lambda i: (0, 0)),
                     pl.BlockSpec((1, K), lambda i: (0, 0))]
        args += [scale_row.reshape(1, K).astype(jnp.float32),
                 shift_row.reshape(1, K).astype(jnp.float32)]

    return pl.pallas_call(
        functools.partial(_matmul_bias_act_kernel, pre_act=pre_act),
        out_shape=jax.ShapeDtypeStruct((M, Nf), x2d.dtype),
        grid=(M // TM,),
        in_specs=in_specs,
        out_specs=pl.BlockSpec((TM, Nf), lambda i: (i, 0)),
        compiler_params=pltpu.CompilerParams(
            dimension_semantics=("parallel",),
            vmem_limit_bytes=VMEM_LIMIT),
    )(*args)


def _bn_scale_shift(h_valid, gamma, beta, eps=1e-5):
    """BatchNorm1d (track_running_stats=False) -> per-channel scale/shift."""
    mean = jnp.mean(h_valid, axis=(0, 1))
    var = jnp.var(h_valid, axis=(0, 1))          # biased, like PyTorch normalization
    inv = gamma / jnp.sqrt(var + eps)
    return inv.astype(jnp.float32), (beta - mean * inv).astype(jnp.float32)


def _bn_lrelu_apply(h, scale, shift):
    """Apply per-channel scale/shift + LeakyReLU(0.2) on (B, Np, C), lane-dense."""
    B, Np, C = h.shape
    if (Np * C) % 128 == 0 and 128 % C == 0:
        lw = 128                                  # lane-dense reshape (free, contiguous)
    else:
        lw = C
    reps = lw // C
    h2 = h.reshape((B * Np * C) // lw, lw)
    sc = jnp.tile(scale, reps).reshape(1, lw)
    sh = jnp.tile(shift, reps).reshape(1, lw)
    rows = h2.shape[0]
    tr = rows if rows <= 1024 else 1024
    out = pl.pallas_call(
        _scale_shift_lrelu_kernel,
        out_shape=jax.ShapeDtypeStruct(h2.shape, h.dtype),
        grid=(pl.cdiv(rows, tr),),
        in_specs=[
            pl.BlockSpec((tr, lw), lambda i: (i, 0)),
            pl.BlockSpec((1, lw), lambda i: (0, 0)),
            pl.BlockSpec((1, lw), lambda i: (0, 0)),
        ],
        out_specs=pl.BlockSpec((tr, lw), lambda i: (i, 0)),
        compiler_params=pltpu.CompilerParams(
            dimension_semantics=("parallel",),
            vmem_limit_bytes=VMEM_LIMIT),
    )(h2, sc, sh)
    return out.reshape(B, Np, C)


# --------------------------------------------------------------------------- #
# full up_block_batch forward
# --------------------------------------------------------------------------- #
@jax.jit
def up_block_batch_pallas(x1, x2, params, center_idx, edge_idx, neigh_orders):
    """x1: (B, Cin, raw_nodes), x2: (B, Cout, new_nodes) -> (B, Cout, new_nodes)."""
    B, Cin, raw = x1.shape
    Cout = params["b1"].shape[0]
    new = 4 * raw - 6
    assert x2.shape == (B, Cout, new)

    # PyTorch channel-major -> TPU node-major (features on lanes)
    x1n = jnp.transpose(x1, (0, 2, 1))                      # (B, raw, Cin)
    x2n = jnp.transpose(x2, (0, 2, 1))                      # (B, new, Cout)

    raw_pad = pl.cdiv(raw, TM) * TM
    new_pad = pl.cdiv(new, TM) * TM

    # ---- upconv 1x1 conv: batch folded into the matmul M dimension ---------
    x1p = jnp.pad(x1n, ((0, 0), (0, raw_pad - raw), (0, 0)))
    y = _fused_matmul(x1p.reshape(B * raw_pad, Cin),
                      params["W_up"], params["b_up"])       # (B*raw_pad, 7*Cout)
    # free reshape: position p = node*7 + k, feature c (matches the PyTorch .view)
    y_flat = y.reshape(B, raw_pad * 7, Cout)

    # ---- center gather + edge-pair mean (vectorized XLA gather) ------------
    ia = jnp.concatenate([center_idx, edge_idx[0::2]]).astype(jnp.int32)
    ib = jnp.concatenate([center_idx, edge_idx[1::2]]).astype(jnp.int32)
    up = 0.5 * (jnp.take(y_flat, ia, axis=1) + jnp.take(y_flat, ib, axis=1))
    # centers have ia == ib, so 0.5*(a+a) == a exactly      # (B, new, Cout)

    # skip connection: channel concat in PyTorch == feature concat node-major
    h0 = jnp.concatenate([up, x2n], axis=-1)                # (B, new, 2*Cout)
    h0 = jnp.pad(h0, ((0, 0), (0, new_pad - new), (0, 0)))  # (B, new_pad, 2*Cout)

    # padded neighbour table; padded rows point at node 0 (valid, sliced off later)
    neigh2d = neigh_orders.astype(jnp.int32).reshape(new, 7)
    neigh2d = jnp.pad(neigh2d, ((0, new_pad - new), (0, 0)))

    # ---- onering conv 1: XLA gather feeds one fused K=7*2C Pallas matmul ----
    mat1 = jnp.take(h0, neigh2d, axis=1).reshape(B * new_pad, 7 * 2 * Cout)
    h1 = _fused_matmul(mat1, params["W1"], params["b1"]).reshape(B, new_pad, Cout)

    # BN1 statistics over valid nodes only
    sc1, sh1 = _bn_scale_shift(h1[:, :new, :], params["g1"], params["be1"])

    # ---- onering conv 2: BN1 affine + LeakyReLU fused into the input read ---
    mat2 = jnp.take(h1, neigh2d, axis=1).reshape(B * new_pad, 7 * Cout)
    h2 = _fused_matmul(mat2, params["W2"], params["b2"],
                       scale_row=jnp.tile(sc1, 7),
                       shift_row=jnp.tile(sh1, 7)).reshape(B, new_pad, Cout)

    # ---- BN2 + LeakyReLU: lane-dense elementwise Pallas pass ----------------
    sc2, sh2 = _bn_scale_shift(h2[:, :new, :], params["g2"], params["be2"])
    h2n = _bn_lrelu_apply(h2, sc2, sh2)

    return jnp.transpose(h2n[:, :new, :], (0, 2, 1))        # (B, Cout, new)


# --------------------------------------------------------------------------- #
# pure-JAX reference (mirrors the PyTorch forward op-for-op)
# --------------------------------------------------------------------------- #
def up_block_batch_ref(x1, x2, params, center_idx, edge_idx, neigh_orders):
    B, Cin, raw = x1.shape
    Cout = params["b1"].shape[0]

    # upconv_layer_batch
    y = jnp.einsum("bcn,cf->bfn", x1, params["W_up"]) + params["b_up"][None, :, None]
    y = jnp.transpose(y, (0, 2, 1)).reshape(B, raw * 7, Cout)
    y = jnp.transpose(y, (0, 2, 1))                         # (B, Cout, raw*7)
    x1g = y[:, :, center_idx]                               # (B, Cout, raw)
    x2g = y[:, :, edge_idx].reshape(B, Cout, -1, 2).mean(axis=3)
    up = jnp.concatenate([x1g, x2g], axis=2)                # (B, Cout, new)
    h = jnp.concatenate([up, x2], axis=1)                   # (B, 2*Cout, new)

    def onering(h, w_flat, b):
        Bc, C, N = h.shape
        mat = h[:, :, neigh_orders].reshape(Bc, C, N, 7)
        mat = jnp.transpose(mat, (0, 2, 3, 1)).reshape(Bc, N, 7 * C)
        return jnp.transpose(mat @ w_flat + b, (0, 2, 1))   # (B, Cout, N)

    def bn_lrelu(h, gamma, beta, eps=1e-5):
        mean = jnp.mean(h, axis=(0, 2), keepdims=True)
        var = jnp.var(h, axis=(0, 2), keepdims=True)
        hn = (h - mean) / jnp.sqrt(var + eps)
        hn = gamma[None, :, None] * hn + beta[None, :, None]
        return jnp.where(hn >= 0, hn, 0.2 * hn)

    h = bn_lrelu(onering(h, params["W1"], params["b1"]), params["g1"], params["be1"])
    h = bn_lrelu(onering(h, params["W2"], params["b2"]), params["g2"], params["be2"])
    return h


# --------------------------------------------------------------------------- #
if __name__ == "__main__":
    key = jax.random.PRNGKey(0)
    keys = jax.random.split(key, 11)

    B = 2
    in_features = 16           # channels of x1
    out_features = 8           # channels of x2 and of the output
    raw_nodes = 12             # icosphere level-0 node count
    new_nodes = 4 * raw_nodes - 6          # 42

    x1 = jax.random.normal(keys[0], (B, in_features, raw_nodes), jnp.float32)
    x2 = jax.random.normal(keys[1], (B, out_features, new_nodes), jnp.float32)

    center_idx = jax.random.randint(keys[2], (raw_nodes,), 0, raw_nodes * 7, jnp.int32)
    edge_idx = jax.random.randint(keys[3], (2 * (new_nodes - raw_nodes),), 0,
                                  raw_nodes * 7, jnp.int32)
    neigh_orders = jax.random.randint(keys[4], (new_nodes * 7,), 0, new_nodes, jnp.int32)

    params = {
        "W_up": 0.3 * jax.random.normal(keys[5], (in_features, 7 * out_features), jnp.float32),
        "b_up": 0.1 * jax.random.normal(keys[6], (7 * out_features,), jnp.float32),
        "W1": 0.3 * jax.random.normal(keys[7], (7 * 2 * out_features, out_features), jnp.float32),
        "b1": 0.1 * jax.random.normal(keys[8], (out_features,), jnp.float32),
        "W2": 0.3 * jax.random.normal(keys[9], (7 * out_features, out_features), jnp.float32),
        "b2": 0.1 * jax.random.normal(keys[10], (out_features,), jnp.float32),
        "g1": jnp.full((out_features,), 1.1, jnp.float32),
        "be1": jnp.full((out_features,), 0.05, jnp.float32),
        "g2": jnp.full((out_features,), 0.9, jnp.float32),
        "be2": jnp.full((out_features,), -0.02, jnp.float32),
    }

    out = up_block_batch_pallas(x1, x2, params, center_idx, edge_idx, neigh_orders)
    out = jax.block_until_ready(out)
    assert out.shape == (B, out_features, new_nodes)

    ref = up_block_batch_ref(x1, x2, params, center_idx, edge_idx, neigh_orders)
    # tolerance leaves headroom for MXU f32 accumulation vs. the "highest"-precision ref
    np.testing.assert_allclose(np.asarray(out), np.asarray(ref), rtol=2e-3, atol=2e-3)

    print("KERNEL_OK")
</pallas_src>

<mosaic_0001>
module attributes {stable_mosaic.version = 11 : i64} {
  func.func @_matmul_bias_act_kernel(%arg0: i32, %arg1: memref<128x16xf32, #tpu.memory_space<vmem>>, %arg2: memref<16x56xf32, #tpu.memory_space<vmem>>, %arg3: memref<1x56xf32, #tpu.memory_space<vmem>>, %arg4: memref<128x56xf32, #tpu.memory_space<vmem>>) attributes {dimension_semantics = [#tpu.dimension_semantics<parallel>], iteration_bounds = array<i64: 2>, scalar_prefetch = 0 : i64, scratch_operands = 0 : i64, tpu.core_type = #tpu.core_type<tc>, window_params = [{transform_indices = @transform_0, window_bounds = array<i64: 128, 16>}, {pipeline_mode = #tpu.pipeline_mode<synchronous>, transform_indices = @transform_1, window_bounds = array<i64: 16, 56>}, {pipeline_mode = #tpu.pipeline_mode<synchronous>, transform_indices = @transform_2, window_bounds = array<i64: 1, 56>}, {transform_indices = @transform_3, window_bounds = array<i64: 128, 56>}]} {
    %c0 = arith.constant 0 : index
    %c0_0 = arith.constant 0 : index
    %0 = vector.load %arg1[%c0, %c0_0] : memref<128x16xf32, #tpu.memory_space<vmem>>, vector<128x16xf32>
    %c0_1 = arith.constant 0 : index
    %c0_2 = arith.constant 0 : index
    %1 = vector.load %arg2[%c0_1, %c0_2] : memref<16x56xf32, #tpu.memory_space<vmem>>, vector<16x56xf32>
    %cst = arith.constant dense<0.000000e+00> : vector<128x56xf32>
    %2 = tpu.matmul %0, %1, %cst {dimension_numbers = #tpu.dot_dimension_numbers<[1], [0], [0], [1], [0, 0, 1, 1], [], []>, precision = #tpu.contract_precision<fp32>} : vector<128x16xf32>, vector<16x56xf32>, vector<128x56xf32> -> vector<128x56xf32>
    %c0_3 = arith.constant 0 : index
    %c0_4 = arith.constant 0 : index
    %3 = vector.load %arg3[%c0_3, %c0_4] : memref<1x56xf32, #tpu.memory_space<vmem>>, vector<1x56xf32>
    %4 = vector.broadcast %3 : vector<1x56xf32> to vector<128x56xf32>
    %5 = arith.addf %2, %4 : vector<128x56xf32>
    %c0_5 = arith.constant 0 : index
    %c0_6 = arith.constant 0 : index
    %6 = vector.load %arg4[%c0_5, %c0_6] : memref<128x56xf32, #tpu.memory_space<vmem>>, vector<128x56xf32>
    tpu.vector_store %arg4[%c0_5, %c0_6], %5 {strides = array<i32>} : memref<128x56xf32, #tpu.memory_space<vmem>>, vector<128x56xf32>,
    return
  }
  func.func @transform_0(%arg0: i32) -> (i32, i32) {
    %c0_i32 = arith.constant 0 : i32
    %c0_i32_0 = arith.constant 0 : i32
    return %arg0, %c0_i32 : i32, i32
  }
  func.func @transform_1(%arg0: i32) -> (i32, i32) {
    %c0_i32 = arith.constant 0 : i32
    %c0_i32_0 = arith.constant 0 : i32
    %c0_i32_1 = arith.constant 0 : i32
    return %c0_i32, %c0_i32_0 : i32, i32
  }
  func.func @transform_2(%arg0: i32) -> (i32, i32) {
    %c0_i32 = arith.constant 0 : i32
    %c0_i32_0 = arith.constant 0 : i32
    %c0_i32_1 = arith.constant 0 : i32
    return %c0_i32, %c0_i32_0 : i32, i32
  }
  func.func @transform_3(%arg0: i32) -> (i32, i32) {
    %c0_i32 = arith.constant 0 : i32
    %c0_i32_0 = arith.constant 0 : i32
    return %arg0, %c0_i32 : i32, i32
  }
}

module attributes {stable_mosaic.version = 11 : i64} {
  func.func @_matmul_bias_act_kernel(%arg0: i32, %arg1: memref<128x112xf32, #tpu.memory_space<vmem>>, %arg2: memref<112x8xf32, #tpu.memory_space<vmem>>, %arg3: memref<1x8xf32, #tpu.memory_space<vmem>>, %arg4: memref<128x8xf32, #tpu.memory_space<vmem>>) attributes {dimension_semantics = [#tpu.dimension_semantics<parallel>], iteration_bounds = array<i64: 2>, scalar_prefetch = 0 : i64, scratch_operands = 0 : i64, tpu.core_type = #tpu.core_type<tc>, window_params = [{transform_indices = @transform_0, window_bounds = array<i64: 128, 112>}, {pipeline_mode = #tpu.pipeline_mode<synchronous>, transform_indices = @transform_1, window_bounds = array<i64: 112, 8>}, {pipeline_mode = #tpu.pipeline_mode<synchronous>, transform_indices = @transform_2, window_bounds = array<i64: 1, 8>}, {transform_indices = @transform_3, window_bounds = array<i64: 128, 8>}]} {
    %c0 = arith.constant 0 : index
    %c0_0 = arith.constant 0 : index
    %0 = vector.load %arg1[%c0, %c0_0] : memref<128x112xf32, #tpu.memory_space<vmem>>, vector<128x112xf32>
    %c0_1 = arith.constant 0 : index
    %c0_2 = arith.constant 0 : index
    %1 = vector.load %arg2[%c0_1, %c0_2] : memref<112x8xf32, #tpu.memory_space<vmem>>, vector<112x8xf32>
    %cst = arith.constant dense<0.000000e+00> : vector<128x8xf32>
    %2 = tpu.matmul %0, %1, %cst {dimension_numbers = #tpu.dot_dimension_numbers<[1], [0], [0], [1], [0, 0, 1, 1], [], []>, precision = #tpu.contract_precision<fp32>} : vector<128x112xf32>, vector<112x8xf32>, vector<128x8xf32> -> vector<128x8xf32>
    %c0_3 = arith.constant 0 : index
    %c0_4 = arith.constant 0 : index
    %3 = vector.load %arg3[%c0_3, %c0_4] : memref<1x8xf32, #tpu.memory_space<vmem>>, vector<1x8xf32>
    %4 = vector.broadcast %3 : vector<1x8xf32> to vector<128x8xf32>
    %5 = arith.addf %2, %4 : vector<128x8xf32>
    %c0_5 = arith.constant 0 : index
    %c0_6 = arith.constant 0 : index
    %6 = vector.load %arg4[%c0_5, %c0_6] : memref<128x8xf32, #tpu.memory_space<vmem>>, vector<128x8xf32>
    tpu.vector_store %arg4[%c0_5, %c0_6], %5 {strides = array<i32>} : memref<128x8xf32, #tpu.memory_space<vmem>>, vector<128x8xf32>,
    return
  }
  func.func @transform_0(%arg0: i32) -> (i32, i32) {
    %c0_i32 = arith.constant 0 : i32
    %c0_i32_0 = arith.constant 0 : i32
    return %arg0, %c0_i32 : i32, i32
  }
  func.func @transform_1(%arg0: i32) -> (i32, i32) {
    %c0_i32 = arith.constant 0 : i32
    %c0_i32_0 = arith.constant 0 : i32
    %c0_i32_1 = arith.constant 0 : i32
    return %c0_i32, %c0_i32_0 : i32, i32
  }
  func.func @transform_2(%arg0: i32) -> (i32, i32) {
    %c0_i32 = arith.constant 0 : i32
    %c0_i32_0 = arith.constant 0 : i32
    %c0_i32_1 = arith.constant 0 : i32
    return %c0_i32, %c0_i32_0 : i32, i32
  }
  func.func @transform_3(%arg0: i32) -> (i32, i32) {
    %c0_i32 = arith.constant 0 : i32
    %c0_i32_0 = arith.constant 0 : i32
    return %arg0, %c0_i32 : i32, i32
  }
}

module attributes {stable_mosaic.version = 11 : i64} {
  func.func @_matmul_bias_act_kernel(%arg0: i32, %arg1: memref<128x56xf32, #tpu.memory_space<vmem>>, %arg2: memref<56x8xf32, #tpu.memory_space<vmem>>, %arg3: memref<1x8xf32, #tpu.memory_space<vmem>>, %arg4: memref<1x56xf32, #tpu.memory_space<vmem>>, %arg5: memref<1x56xf32, #tpu.memory_space<vmem>>, %arg6: memref<128x8xf32, #tpu.memory_space<vmem>>) attributes {dimension_semantics = [#tpu.dimension_semantics<parallel>], iteration_bounds = array<i64: 2>, scalar_prefetch = 0 : i64, scratch_operands = 0 : i64, tpu.core_type = #tpu.core_type<tc>, window_params = [{transform_indices = @transform_0, window_bounds = array<i64: 128, 56>}, {pipeline_mode = #tpu.pipeline_mode<synchronous>, transform_indices = @transform_1, window_bounds = array<i64: 56, 8>}, {pipeline_mode = #tpu.pipeline_mode<synchronous>, transform_indices = @transform_2, window_bounds = array<i64: 1, 8>}, {pipeline_mode = #tpu.pipeline_mode<synchronous>, transform_indices = @transform_3, window_bounds = array<i64: 1, 56>}, {pipeline_mode = #tpu.pipeline_mode<synchronous>, transform_indices = @transform_4, window_bounds = array<i64: 1, 56>}, {transform_indices = @transform_5, window_bounds = array<i64: 128, 8>}]} {
    %c0 = arith.constant 0 : index
    %c0_0 = arith.constant 0 : index
    %0 = vector.load %arg1[%c0, %c0_0] : memref<128x56xf32, #tpu.memory_space<vmem>>, vector<128x56xf32>
    %c0_1 = arith.constant 0 : index
    %c0_2 = arith.constant 0 : index
    %1 = vector.load %arg4[%c0_1, %c0_2] : memref<1x56xf32, #tpu.memory_space<vmem>>, vector<1x56xf32>
    %2 = vector.broadcast %1 : vector<1x56xf32> to vector<128x56xf32>
    %3 = arith.mulf %0, %2 : vector<128x56xf32>
    %c0_3 = arith.constant 0 : index
    %c0_4 = arith.constant 0 : index
    %4 = vector.load %arg5[%c0_3, %c0_4] : memref<1x56xf32, #tpu.memory_space<vmem>>, vector<1x56xf32>
    %5 = vector.broadcast %4 : vector<1x56xf32> to vector<128x56xf32>
    %6 = arith.addf %3, %5 : vector<128x56xf32>
    %cst = arith.constant 0.000000e+00 : f32
    %7 = vector.broadcast %cst : f32 to vector<128x56xf32>
    %8 = arith.cmpf oge, %6, %7 : vector<128x56xf32>
    %cst_5 = arith.constant 2.000000e-01 : f32
    %9 = vector.broadcast %cst_5 : f32 to vector<128x56xf32>
    %10 = arith.mulf %9, %6 : vector<128x56xf32>
    %11 = arith.select %8, %6, %10 : vector<128x56xi1>, vector<128x56xf32>
    %c0_6 = arith.constant 0 : index
    %c0_7 = arith.constant 0 : index
    %12 = vector.load %arg2[%c0_6, %c0_7] : memref<56x8xf32, #tpu.memory_space<vmem>>, vector<56x8xf32>
    %cst_8 = arith.constant dense<0.000000e+00> : vector<128x8xf32>
    %13 = tpu.matmul %11, %12, %cst_8 {dimension_numbers = #tpu.dot_dimension_numbers<[1], [0], [0], [1], [0, 0, 1, 1], [], []>, precision = #tpu.contract_precision<fp32>} : vector<128x56xf32>, vector<56x8xf32>, vector<128x8xf32> -> vector<128x8xf32>
    %c0_9 = arith.constant 0 : index
    %c0_10 = arith.constant 0 : index
    %14 = vector.load %arg3[%c0_9, %c0_10] : memref<1x8xf32, #tpu.memory_space<vmem>>, vector<1x8xf32>
    %15 = vector.broadcast %14 : vector<1x8xf32> to vector<128x8xf32>
    %16 = arith.addf %13, %15 : vector<128x8xf32>
    %c0_11 = arith.constant 0 : index
    %c0_12 = arith.constant 0 : index
    %17 = vector.load %arg6[%c0_11, %c0_12] : memref<128x8xf32, #tpu.memory_space<vmem>>, vector<128x8xf32>
    tpu.vector_store %arg6[%c0_11, %c0_12], %16 {strides = array<i32>} : memref<128x8xf32, #tpu.memory_space<vmem>>, vector<128x8xf32>,
    return
  }
  func.func @transform_0(%arg0: i32) -> (i32, i32) {
    %c0_i32 = arith.constant 0 : i32
    %c0_i32_0 = arith.constant 0 : i32
    return %arg0, %c0_i32 : i32, i32
  }
  func.func @transform_1(%arg0: i32) -> (i32, i32) {
    %c0_i32 = arith.constant 0 : i32
    %c0_i32_0 = arith.constant 0 : i32
    %c0_i32_1 = arith.constant 0 : i32
    return %c0_i32, %c0_i32_0 : i32, i32
  }
  func.func @transform_2(%arg0: i32) -> (i32, i32) {
    %c0_i32 = arith.constant 0 : i32
    %c0_i32_0 = arith.constant 0 : i32
    %c0_i32_1 = arith.constant 0 : i32
    return %c0_i32, %c0_i32_0 : i32, i32
  }
  func.func @transform_3(%arg0: i32) -> (i32, i32) {
    %c0_i32 = arith.constant 0 : i32
    %c0_i32_0 = arith.constant 0 : i32
    %c0_i32_1 = arith.constant 0 : i32
    return %c0_i32, %c0_i32_0 : i32, i32
  }
  func.func @transform_4(%arg0: i32) -> (i32, i32) {
    %c0_i32 = arith.constant 0 : i32
    %c0_i32_0 = arith.constant 0 : i32
    %c0_i32_1 = arith.constant 0 : i32
    return %c0_i32, %c0_i32_0 : i32, i32
  }
  func.func @transform_5(%arg0: i32) -> (i32, i32) {
    %c0_i32 = arith.constant 0 : i32
    %c0_i32_0 = arith.constant 0 : i32
    return %arg0, %c0_i32 : i32, i32
  }
}

module attributes {stable_mosaic.version = 11 : i64} {
  func.func @_scale_shift_lrelu_kernel(%arg0: i32, %arg1: memref<16x128xf32, #tpu.memory_space<vmem>>, %arg2: memref<1x128xf32, #tpu.memory_space<vmem>>, %arg3: memref<1x128xf32, #tpu.memory_space<vmem>>, %arg4: memref<16x128xf32, #tpu.memory_space<vmem>>) attributes {dimension_semantics = [#tpu.dimension_semantics<parallel>], iteration_bounds = array<i64: 1>, scalar_prefetch = 0 : i64, scratch_operands = 0 : i64, tpu.core_type = #tpu.core_type<tc>, window_params = [{transform_indices = @transform_0, window_bounds = array<i64: 16, 128>}, {pipeline_mode = #tpu.pipeline_mode<synchronous>, transform_indices = @transform_1, window_bounds = array<i64: 1, 128>}, {pipeline_mode = #tpu.pipeline_mode<synchronous>, transform_indices = @transform_2, window_bounds = array<i64: 1, 128>}, {transform_indices = @transform_3, window_bounds = array<i64: 16, 128>}]} {
    %c0 = arith.constant 0 : index
    %c0_0 = arith.constant 0 : index
    %0 = vector.load %arg1[%c0, %c0_0] : memref<16x128xf32, #tpu.memory_space<vmem>>, vector<16x128xf32>
    %c0_1 = arith.constant 0 : index
    %c0_2 = arith.constant 0 : index
    %1 = vector.load %arg2[%c0_1, %c0_2] : memref<1x128xf32, #tpu.memory_space<vmem>>, vector<1x128xf32>
    %2 = vector.broadcast %1 : vector<1x128xf32> to vector<16x128xf32>
    %3 = arith.mulf %0, %2 : vector<16x128xf32>
    %c0_3 = arith.constant 0 : index
    %c0_4 = arith.constant 0 : index
    %4 = vector.load %arg3[%c0_3, %c0_4] : memref<1x128xf32, #tpu.memory_space<vmem>>, vector<1x128xf32>
    %5 = vector.broadcast %4 : vector<1x128xf32> to vector<16x128xf32>
    %6 = arith.addf %3, %5 : vector<16x128xf32>
    %cst = arith.constant 0.000000e+00 : f32
    %7 = vector.broadcast %cst : f32 to vector<16x128xf32>
    %8 = arith.cmpf oge, %6, %7 : vector<16x128xf32>
    %cst_5 = arith.constant 2.000000e-01 : f32
    %9 = vector.broadcast %cst_5 : f32 to vector<16x128xf32>
    %10 = arith.mulf %9, %6 : vector<16x128xf32>
    %11 = arith.select %8, %6, %10 : vector<16x128xi1>, vector<16x128xf32>
    %c0_6 = arith.constant 0 : index
    %c0_7 = arith.constant 0 : index
    %12 = vector.load %arg4[%c0_6, %c0_7] : memref<16x128xf32, #tpu.memory_space<vmem>>, vector<16x128xf32>
    tpu.vector_store %arg4[%c0_6, %c0_7], %11 {strides = array<i32>} : memref<16x128xf32, #tpu.memory_space<vmem>>, vector<16x128xf32>,
    return
  }
  func.func @transform_0(%arg0: i32) -> (i32, i32) {
    %c0_i32 = arith.constant 0 : i32
    %c0_i32_0 = arith.constant 0 : i32
    return %arg0, %c0_i32 : i32, i32
  }
  func.func @transform_1(%arg0: i32) -> (i32, i32) {
    %c0_i32 = arith.constant 0 : i32
    %c0_i32_0 = arith.constant 0 : i32
    %c0_i32_1 = arith.constant 0 : i32
    return %c0_i32, %c0_i32_0 : i32, i32
  }
  func.func @transform_2(%arg0: i32) -> (i32, i32) {
    %c0_i32 = arith.constant 0 : i32
    %c0_i32_0 = arith.constant 0 : i32
    %c0_i32_1 = arith.constant 0 : i32
    return %c0_i32, %c0_i32_0 : i32, i32
  }
  func.func @transform_3(%arg0: i32) -> (i32, i32) {
    %c0_i32 = arith.constant 0 : i32
    %c0_i32_0 = arith.constant 0 : i32
    return %arg0, %c0_i32 : i32, i32
  }
}

</mosaic_0001>

<llo_original>
// kernel: up_block_batch_pallas.4
$region0: #{up_block_batch_pallas.4}
  #allocation0 [shape = 'u32[]', space=smem, size = 0x4, offset = 0x4, fixed_abs, tag = 'smem constant byte address 0x4 - core index']
  #allocation1 [shape = 'u32[144,128]{1,0:T(1,128)}', space=vmem, size = 0x12000, scoped, tag = 'internal scratch']
  %s0 = inlined_call_operand.vmem [shape: f32[256,16], index: 0, kind: input, shape index: {}]
  %s1 = inlined_call_operand.vmem [shape: f32[16,56], index: 1, kind: input, shape index: {}]
  %s2 = inlined_call_operand.vmem [shape: f32[1,56], index: 2, kind: input, shape index: {}]
  %s3 = inlined_call_operand.vmem [shape: f32[256,56], index: 3, kind: output, shape index: {}]
  %s4 = sld [smem:[#allocation0]]
  $region45: #{up_block_batch_pallas.4} parent=0
    _
  %s6 = ssub.s32 1, %s4
  %s7 = scalar_select 0, %s6, %s4
  loop: start=0, step=1, limit=4
  $region2: #{up_block_batch_pallas.4} parent=0 // loop_pre_header
    _
  $region3: #{up_block_batch_pallas.4} parent=0 // loop_header
    %s9 = sphi 0, %s13
    %p10 = scmp.ge.s32.totalorder %s9, 4
    %s19 = sphi 0, %s21
    %s22 = sphi 0, %s19
    %s23 = sphi 0, %s22
    %s39 = sphi 0, %s23
    %s43 = sphi 0, %s43
    %s45 = sphi 0, %s43
    %s46 = sphi 0, %s45
    %s60 = sphi 0, %s46
    %s64 = sphi 0, %s64
    %s66 = sphi 0, %s64
    %s67 = sphi 0, %s66
    %s81 = sphi 0, %s67
    %s87 = sphi 0, %s89
    %s90 = sphi 0, %s87
    %s91 = sphi 0, %s90
    %s107 = sphi 0, %s91
  $region4: #{up_block_batch_pallas.4} parent=0 // loop_header_branch
    %12 = sbr.rel (%p10) target = $region8
  $region5: #{up_block_batch_pallas.4} parent=0 // loop_body
    %s14 = ssub.s32 %s9, 1
    %s15 = ssub.s32 %s9, 2
    %s16 = sadd.s32 %s9, 1
    %s17 = ssub.s32 %s9, %s16
    %p18 = scmp.eq.s32.totalorder %s17, 0
    %s20 = sadd.s32 %s19, 1
    %s21 = scalar_select %p18, %s19, %s20
    %p24 = pneg %p18
    %p25 = scmp.eq.s32.totalorder %s9, 1
    %p26 = por %p24, %p25
    %p27 = scmp.ne.s32.totalorder %s19, %s22
    %p28 = scmp.eq.s32.totalorder %s9, 0
    %p29 = por %p27, %p28
    %p30 = scmp.ne.s32.totalorder %s19, %s22
    %p31 = scmp.eq.s32.totalorder %s14, 1
    %p32 = por %p30, %p31
    %p33 = scmp.ne.s32.totalorder %s22, %s23
    %p34 = scmp.eq.s32.totalorder %s14, 0
    %p35 = por %p33, %p34
    %p36 = scmp.ne.s32.totalorder %s22, %s23
    %p37 = scmp.eq.s32.totalorder %s15, 1
    %p38 = por %p36, %p37
    %p40 = scmp.ne.s32.totalorder %s23, %s39
    %p41 = scmp.eq.s32.totalorder %s15, 0
    %p42 = por %p40, %p41
    %s44 = sadd.s32 %s43, 1
    %p47 = scmp.eq.s32.totalorder %s9, 1
    %p48 = scmp.ne.s32.totalorder %s43, %s45
    %p49 = scmp.eq.s32.totalorder %s9, 0
    %p50 = por %p48, %p49
    %p51 = scmp.ne.s32.totalorder %s43, %s45
    %p52 = scmp.eq.s32.totalorder %s14, 1
    %p53 = por %p51, %p52
    %p54 = scmp.ne.s32.totalorder %s45, %s46
    %p55 = scmp.eq.s32.totalorder %s14, 0
    %p56 = por %p54, %p55
    %p57 = scmp.ne.s32.totalorder %s45, %s46
    %p58 = scmp.eq.s32.totalorder %s15, 1
    %p59 = por %p57, %p58
    %p61 = scmp.ne.s32.totalorder %s46, %s60
    %p62 = scmp.eq.s32.totalorder %s15, 0
    %p63 = por %p61, %p62
    %s65 = sadd.s32 %s64, 1
    %p68 = scmp.eq.s32.totalorder %s9, 1
    %p69 = scmp.ne.s32.totalorder %s64, %s66
    %p70 = scmp.eq.s32.totalorder %s9, 0
    %p71 = por %p69, %p70
    %p72 = scmp.ne.s32.totalorder %s64, %s66
    %p73 = scmp.eq.s32.totalorder %s14, 1
    %p74 = por %p72, %p73
    %p75 = scmp.ne.s32.totalorder %s66, %s67
    %p76 = scmp.eq.s32.totalorder %s14, 0
    %p77 = por %p75, %p76
    %p78 = scmp.ne.s32.totalorder %s66, %s67
    %p79 = scmp.eq.s32.totalorder %s15, 1
    %p80 = por %p78, %p79
    %p82 = scmp.ne.s32.totalorder %s67, %s81
    %p83 = scmp.eq.s32.totalorder %s15, 0
    %p84 = por %p82, %p83
    %s85 = ssub.s32 %s9, %s16
    %p86 = scmp.eq.s32.totalorder %s85, 0
    %s88 = sadd.s32 %s87, 1
    %s89 = scalar_select %p86, %s87, %s88
    %p92 = pneg %p86
    %p93 = scmp.eq.s32.totalorder %s9, 1
    %p94 = por %p92, %p93
    %p95 = scmp.ne.s32.totalorder %s87, %s90
    %p96 = scmp.eq.s32.totalorder %s9, 0
    %p97 = por %p95, %p96
    %p98 = scmp.ne.s32.totalorder %s87, %s90
    %p99 = scmp.eq.s32.totalorder %s14, 1
    %p100 = por %p98, %p99
    %p101 = scmp.ne.s32.totalorder %s90, %s91
    %p102 = scmp.eq.s32.totalorder %s14, 0
    %p103 = por %p101, %p102
    %p104 = scmp.ne.s32.totalorder %s90, %s91
    %p105 = scmp.eq.s32.totalorder %s15, 1
    %p106 = por %p104, %p105
    %p108 = scmp.ne.s32.totalorder %s91, %s107
    %p109 = scmp.eq.s32.totalorder %s15, 0
    %p110 = por %p108, %p109
    %p111 = scmp.le.s32.totalorder 1, %s9
    %p112 = scmp.lt.s32.totalorder %s9, 3
    %p113 = pnand %p111, %p112
    %p114 = pneg %p113
    // Predicated region
    $region9: #{up_block_batch_pallas.4} parent=5 // pred_check
      _
    $region10: #{up_block_batch_pallas.4} parent=5 // pred_check_branch
      %116 = sbr.rel (%p113) target = $region12
    $region11: #{up_block_batch_pallas.4} parent=5 // pred_region
      %s117 = ssub.s32 %s9, 1
      // Predicated region
      $region13: #{up_block_batch_pallas.4} parent=11 // pred_check
        %p118 = pneg %p56
      $region14: #{up_block_batch_pallas.4} parent=11 // pred_check_branch
        %120 = sbr.rel (%p118) target = $region16
      $region15: #{up_block_batch_pallas.4} parent=11 // pred_region
        _
      $region16: #{up_block_batch_pallas.4} parent=11 // pred_fallthru
        _
      // Predicated region
      $region17: #{up_block_batch_pallas.4} parent=11 // pred_check
        %p121 = pneg %p77
      $region18: #{up_block_batch_pallas.4} parent=11 // pred_check_branch
        %123 = sbr.rel (%p121) target = $region20
      $region19: #{up_block_batch_pallas.4} parent=11 // pred_region
        _
      $region20: #{up_block_batch_pallas.4} parent=11 // pred_fallthru
        _
    $region12: #{up_block_batch_pallas.4} parent=5 // pred_fallthru
      _
    %p124 = scmp.lt.s32.totalorder %s9, 2
    // Predicated region
    $region21: #{up_block_batch_pallas.4} parent=5 // pred_check
      %p125 = pneg %p124
    $region22: #{up_block_batch_pallas.4} parent=5 // pred_check_branch
      %127 = sbr.rel (%p125) target = $region24
    $region23: #{up_block_batch_pallas.4} parent=5 // pred_region
      // Predicated region
      $region25: #{up_block_batch_pallas.4} parent=23 // pred_check
        %p128 = pneg %p29
      $region26: #{up_block_batch_pallas.4} parent=23 // pred_check_branch
        %130 = sbr.rel (%p128) target = $region28
      $region27: #{up_block_batch_pallas.4} parent=23 // pred_region
        %s131 = smul.u32 16, %s9
        %p132 = scmp.lt.s32.totalorder %s131, 31
        %s133 = scalar_select %p132, %s131, 31
        %s134 = smul.addr %s133, 8
        %s135 = scalar_lea.vmem %s0, %s134
        %s136 = smul.u32 16, %s9
      $region28: #{up_block_batch_pallas.4} parent=23 // pred_fallthru
        _
    $region24: #{up_block_batch_pallas.4} parent=5 // pred_fallthru
      _
    %p137 = scmp.le.s32.totalorder 1, %s9
    %p138 = scmp.lt.s32.totalorder %s9, 3
    %p139 = pnand %p137, %p138
    %p140 = pneg %p139
    // Predicated region
    $region29: #{up_block_batch_pallas.4} parent=5 // pred_check
      _
    $region30: #{up_block_batch_pallas.4} parent=5 // pred_check_branch
      %142 = sbr.rel (%p139) target = $region32
    $region31: #{up_block_batch_pallas.4} parent=5 // pred_region
      %s143 = ssub.s32 %s9, 1
      %s144 = smul.u32 16, %s14
      %p145 = scmp.lt.s32.totalorder %s144, 31
      %s146 = scalar_select %p145, %s144, 31
      %s147 = smul.addr %s146, 8
      %s148 = scalar_lea.vmem %s0, %s147
      %p149 = pneg %p35
      %p150 = pneg %p32
      %p151 = pneg %p56
      %p152 = pneg %p53
      %p153 = pneg %p77
      %p154 = pneg %p74
      %p155 = pneg %p103
      %p156 = pneg %p100
      %s157 = smul.u32 16, %s14
      %p158 = scmp.lt.s32.totalorder %s157, 31
      %s159 = scalar_select %p158, %s157, 31
      %s160 = smul.addr %s159, 8
      %s161 = scalar_lea.vmem %s3, %s160
      %s162 = smul.u32 16, %s14
      %p163 = scmp.lt.s32.totalorder %s162, 31
      %s164 = scalar_select %p163, %s162, 31
      %s165 = smul.addr %s164, 8
      %s166 = scalar_lea.vmem %s0, %s165
      %s167 = smul.u32 16, %s14
      %s168 = smul.u32 16, %s14
      %p169 = scmp.lt.s32.totalorder %s168, 31
      %s170 = scalar_select %p169, %s168, 31
      %s171 = smul.addr %s170, 8
      %s172 = scalar_lea.vmem %s3, %s171
      %s173 = smul.u32 16, %s14
      %v174 = vld [vmem:[%s166] sm:$0xff]
      %v175 = vld [vmem:[%s166 + $0x8] sm:$0xff]
      %v176 = vld [vmem:[%s166 + $0x10] sm:$0xff]
      %v177 = vld [vmem:[%s166 + $0x18] sm:$0xff]
      %v178 = vld [vmem:[%s166 + $0x20] sm:$0xff]
      %v179 = vld [vmem:[%s166 + $0x28] sm:$0xff]
      %v180 = vld [vmem:[%s166 + $0x30] sm:$0xff]
      %v181 = vld [vmem:[%s166 + $0x38] sm:$0xff]
      %v182 = vld [vmem:[%s166 + $0x40] sm:$0xff]
      %v183 = vld [vmem:[%s166 + $0x48] sm:$0xff]
      %v184 = vld [vmem:[%s166 + $0x50] sm:$0xff]
      %v185 = vld [vmem:[%s166 + $0x58] sm:$0xff]
      %v186 = vld [vmem:[%s166 + $0x60] sm:$0xff]
      %v187 = vld [vmem:[%s166 + $0x68] sm:$0xff]
      %v188 = vld [vmem:[%s166 + $0x70] sm:$0xff]
      %v189 = vld [vmem:[%s166 + $0x78] sm:$0xff]
      %v190 = vld [vmem:[%s1] sm:$0xff]
      %v191 = vld [vmem:[%s1 + $0x8] sm:$0xff]
      %v192 = vld [vmem:[%s2] sm:$0x1]
      %v194 = vlaneseq
      %v195 = vshrl.u32 %v194, 7
      %v196 = vsub.s32 0, %v195
      %v197 = vrot.slane %v192, %v196
      %vm199 = vcmask 130048
      %v201 = vsel %vm199, %v174, 0
      %v204 = vsel %vm199, %v175, 0
      %v207 = vsel %vm199, %v176, 0
      %v210 = vsel %vm199, %v177, 0
      %v213 = vsel %vm199, %v178, 0
      %v216 = vsel %vm199, %v179, 0
      %v219 = vsel %vm199, %v180, 0
      %v222 = vsel %vm199, %v181, 0
      %v225 = vsel %vm199, %v182, 0
      %v228 = vsel %vm199, %v183, 0
      %v231 = vsel %vm199, %v184, 0
      %v234 = vsel %vm199, %v185, 0
      %v237 = vsel %vm199, %v186, 0
      %v240 = vsel %vm199, %v187, 0
      %v243 = vsel %vm199, %v188, 0
      %v246 = vsel %vm199, %v189, 0
      %248 = vmatprep.subr.mxu0 0.0
      %249 = vmatpush1.msra.mxu0 0.0
      %250 = vmatprep.subr.mxu0 0.0
      %251 = vmatpush1.msra.mxu0 0.0
      %252 = vmatprep.subr.mxu0 0.0
      %253 = vmatpush1.msra.mxu0 0.0
      %254 = vmatprep.subr.mxu0 0.0
      %255 = vmatpush1.msra.mxu0 0.0
      %256 = vmatprep.subr.mxu0 0.0
      %257 = vmatpush1.msra.mxu0 0.0
      %258 = vmatprep.subr.mxu0 0.0
      %259 = vmatpush1.msra.mxu0 0.0
      %260 = vmatprep.subr.mxu0 0.0
      %261 = vmatpush1.msra.mxu0 0.0
      %262 = vmatprep.subr.mxu0 0.0
      %263 = vmatpush1.msra.mxu0 0.0
      %264 = vmatprep.subr.mxu0 0.0
      %265 = vmatpush1.msra.mxu0 0.0
      %266 = vmatprep.subr.mxu0 0.0
      %267 = vmatpush1.msra.mxu0 0.0
      %268 = vmatprep.subr.mxu0 0.0
      %269 = vmatpush1.msra.mxu0 0.0
      %270 = vmatprep.subr.mxu0 0.0
      %271 = vmatpush1.msra.mxu0 0.0
      %272 = vmatprep.subr.mxu0 0.0
      %273 = vmatpush1.msra.mxu0 0.0
      %274 = vmatprep.subr.mxu0 0.0
      %275 = vmatpush1.msra.mxu0 0.0
      %276 = vmatprep.subr.mxu0 0.0
      %v277 = vand.u32 %v191, 4294901760
      %278 = vmatpush1.msra.mxu0 %v277
      %279 = vmatprep.subr.mxu0 0.0
      %v280 = vand.u32 %v190, 4294901760
      %281 = vmatpush1.msra.mxu0 %v280
      %282 = vmatprep.subr.mxu0 0.0
      %283 = vmatpush2.msra.mxu0 0.0
      %284 = vmatprep.subr.mxu0 0.0
      %285 = vmatpush2.msra.mxu0 0.0
      %286 = vmatprep.subr.mxu0 0.0
      %287 = vmatpush2.msra.mxu0 0.0
      %288 = vmatprep.subr.mxu0 0.0
      %289 = vmatpush2.msra.mxu0 0.0
      %290 = vmatprep.subr.mxu0 0.0
      %291 = vmatpush2.msra.mxu0 0.0
      %292 = vmatprep.subr.mxu0 0.0
      %293 = vmatpush2.msra.mxu0 0.0
      %294 = vmatprep.subr.mxu0 0.0
      %295 = vmatpush2.msra.mxu0 0.0
      %296 = vmatprep.subr.mxu0 0.0
      %297 = vmatpush2.msra.mxu0 0.0
      %298 = vmatprep.subr.mxu0 0.0
      %299 = vmatpush2.msra.mxu0 0.0
      %300 = vmatprep.subr.mxu0 0.0
      %301 = vmatpush2.msra.mxu0 0.0
      %302 = vmatprep.subr.mxu0 0.0
      %303 = vmatpush2.msra.mxu0 0.0
      %304 = vmatprep.subr.mxu0 0.0
      %305 = vmatpush2.msra.mxu0 0.0
      %306 = vmatprep.subr.mxu0 0.0
      %307 = vmatpush2.msra.mxu0 0.0
      %308 = vmatprep.subr.mxu0 0.0
      %309 = vmatpush2.msra.mxu0 0.0
      %310 = vmatprep.subr.mxu0 0.0
      %311 = vmatpush2.msra.mxu0 0.0
      %312 = vmatprep.subr.mxu0 0.0
      %313 = vmatpush2.msra.mxu0 0.0
      %314 = vmatprep.mubr.f32.mxu0 0.0
      %v315 = vand.u32 %v201, 4294901760
      %v316 = vsub.f32 %v201, %v315
      %v317 = vand.u32 %v316, 4294901760
      %v318 = vsub.f32 %v316, %v317
      %v319 = vand.u32 %v318, 4294901760
      %320 = vmatmul.mubr.f32.gmra.mxu0 %v319
      %v321 = vpop.f32.mrf.mxu0
      %v322 = vadd.f32 %v197, %v321
      %v323 = vpop.f32.mrf.mxu0
      %324 = vmatprep.mubr.f32.mxu0 0.0
      %v325 = vand.u32 %v204, 4294901760
      %v326 = vsub.f32 %v204, %v325
      %v327 = vand.u32 %v326, 4294901760
      %v328 = vsub.f32 %v326, %v327
      %v329 = vand.u32 %v328, 4294901760
      %330 = vmatmul.mubr.f32.gmra.mxu0 %v329
      %v331 = vpop.f32.mrf.mxu0
      %v332 = vadd.f32 %v197, %v331
      %v333 = vpop.f32.mrf.mxu0
      %334 = vmatprep.mubr.f32.mxu0 0.0
      %v335 = vand.u32 %v207, 4294901760
      %v336 = vsub.f32 %v207, %v335
      %v337 = vand.u32 %v336, 4294901760
      %v338 = vsub.f32 %v336, %v337
      %v339 = vand.u32 %v338, 4294901760
      %340 = vmatmul.mubr.f32.gmra.mxu0 %v339
      %v341 = vpop.f32.mrf.mxu0
      %v342 = vadd.f32 %v197, %v341
      %v343 = vpop.f32.mrf.mxu0
      %344 = vmatprep.mubr.f32.mxu0 0.0
      %v345 = vand.u32 %v210, 4294901760
      %v346 = vsub.f32 %v210, %v345
      %v347 = vand.u32 %v346, 4294901760
      %v348 = vsub.f32 %v346, %v347
      %v349 = vand.u32 %v348, 4294901760
      %350 = vmatmul.mubr.f32.gmra.mxu0 %v349
      %v351 = vpop.f32.mrf.mxu0
      %v352 = vadd.f32 %v197, %v351
      %v353 = vpop.f32.mrf.mxu0
      %354 = vmatprep.mubr.f32.mxu0 0.0
      %v355 = vand.u32 %v213, 4294901760
      %v356 = vsub.f32 %v213, %v355
      %v357 = vand.u32 %v356, 4294901760
      %v358 = vsub.f32 %v356, %v357
      %v359 = vand.u32 %v358, 4294901760
      %360 = vmatmul.mubr.f32.gmra.mxu0 %v359
      %v361 = vpop.f32.mrf.mxu0
      %v362 = vadd.f32 %v197, %v361
      %v363 = vpop.f32.mrf.mxu0
      %364 = vmatprep.mubr.f32.mxu0 0.0
      %v365 = vand.u32 %v216, 4294901760
      %v366 = vsub.f32 %v216, %v365
      %v367 = vand.u32 %v366, 4294901760
      %v368 = vsub.f32 %v366, %v367
      %v369 = vand.u32 %v368, 4294901760
      %370 = vmatmul.mubr.f32.gmra.mxu0 %v369
      %v371 = vpop.f32.mrf.mxu0
      %v372 = vadd.f32 %v197, %v371
      %v373 = vpop.f32.mrf.mxu0
      %374 = vmatprep.mubr.f32.mxu0 0.0
      %v375 = vand.u32 %v219, 4294901760
      %v376 = vsub.f32 %v219, %v375
      %v377 = vand.u32 %v376, 4294901760
      %v378 = vsub.f32 %v376, %v377
      %v379 = vand.u32 %v378, 4294901760
      %380 = vmatmul.mubr.f32.gmra.mxu0 %v379
      %v381 = vpop.f32.mrf.mxu0
      %v382 = vadd.f32 %v197, %v381
      %v383 = vpop.f32.mrf.mxu0
      %384 = vmatprep.mubr.f32.mxu0 0.0
      %v385 = vand.u32 %v222, 4294901760
      %v386 = vsub.f32 %v222, %v385
      %v387 = vand.u32 %v386, 4294901760
      %v388 = vsub.f32 %v386, %v387
      %v389 = vand.u32 %v388, 4294901760
      %390 = vmatmul.mubr.f32.gmra.mxu0 %v389
      %v391 = vpop.f32.mrf.mxu0
      %v392 = vadd.f32 %v197, %v391
      %v393 = vpop.f32.mrf.mxu0
      %394 = vmatprep.mubr.f32.mxu0 0.0
      %v395 = vand.u32 %v225, 4294901760
      %v396 = vsub.f32 %v225, %v395
      %v397 = vand.u32 %v396, 4294901760
      %v398 = vsub.f32 %v396, %v397
      %v399 = vand.u32 %v398, 4294901760
      %400 = vmatmul.mubr.f32.gmra.mxu0 %v399
      %v401 = vpop.f32.mrf.mxu0
      %v402 = vadd.f32 %v197, %v401
      %v403 = vpop.f32.mrf.mxu0
      %404 = vmatprep.mubr.f32.mxu0 0.0
      %v405 = vand.u32 %v228, 4294901760
      %v406 = vsub.f32 %v228, %v405
      %v407 = vand.u32 %v406, 4294901760
      %v408 = vsub.f32 %v406, %v407
      %v409 = vand.u32 %v408, 4294901760
      %410 = vmatmul.mubr.f32.gmra.mxu0 %v409
      %v411 = vpop.f32.mrf.mxu0
      %v412 = vadd.f32 %v197, %v411
      %v413 = vpop.f32.mrf.mxu0
      %414 = vmatprep.mubr.f32.mxu0 0.0
      %v415 = vand.u32 %v231, 4294901760
      %v416 = vsub.f32 %v231, %v415
      %v417 = vand.u32 %v416, 4294901760
      %v418 = vsub.f32 %v416, %v417
      %v419 = vand.u32 %v418, 4294901760
      %420 = vmatmul.mubr.f32.gmra.mxu0 %v419
      %v421 = vpop.f32.mrf.mxu0
      %v422 = vadd.f32 %v197, %v421
      %v423 = vpop.f32.mrf.mxu0
      %424 = vmatprep.mubr.f32.mxu0 0.0
      %v425 = vand.u32 %v234, 4294901760
      %v426 = vsub.f32 %v234, %v425
      %v427 = vand.u32 %v426, 4294901760
      %v428 = vsub.f32 %v426, %v427
      %v429 = vand.u32 %v428, 4294901760
      %430 = vmatmul.mubr.f32.gmra.mxu0 %v429
      %v431 = vpop.f32.mrf.mxu0
      %v432 = vadd.f32 %v197, %v431
      %v433 = vpop.f32.mrf.mxu0
      %434 = vmatprep.mubr.f32.mxu0 0.0
      %v435 = vand.u32 %v237, 4294901760
      %v436 = vsub.f32 %v237, %v435
      %v437 = vand.u32 %v436, 4294901760
      %v438 = vsub.f32 %v436, %v437
      %v439 = vand.u32 %v438, 4294901760
      %440 = vmatmul.mubr.f32.gmra.mxu0 %v439
      %v441 = vpop.f32.mrf.mxu0
      %v442 = vadd.f32 %v197, %v441
      %v443 = vpop.f32.mrf.mxu0
      %444 = vmatprep.mubr.f32.mxu0 0.0
      %v445 = vand.u32 %v240, 4294901760
      %v446 = vsub.f32 %v240, %v445
      %v447 = vand.u32 %v446, 4294901760
      %v448 = vsub.f32 %v446, %v447
      %v449 = vand.u32 %v448, 4294901760
      %450 = vmatmul.mubr.f32.gmra.mxu0 %v449
      %v451 = vpop.f32.mrf.mxu0
      %v452 = vadd.f32 %v197, %v451
      %v453 = vpop.f32.mrf.mxu0
      %454 = vmatprep.mubr.f32.mxu0 0.0
      %v455 = vand.u32 %v243, 4294901760
      %v456 = vsub.f32 %v243, %v455
      %v457 = vand.u32 %v456, 4294901760
      %v458 = vsub.f32 %v456, %v457
      %v459 = vand.u32 %v458, 4294901760
      %460 = vmatmul.mubr.f32.gmra.mxu0 %v459
      %v461 = vpop.f32.mrf.mxu0
      %v462 = vadd.f32 %v197, %v461
      %v463 = vpop.f32.mrf.mxu0
      %464 = vmatprep.mubr.f32.mxu0 0.0
      %v465 = vand.u32 %v246, 4294901760
      %v466 = vsub.f32 %v246, %v465
      %v467 = vand.u32 %v466, 4294901760
      %v468 = vsub.f32 %v466, %v467
      %v469 = vand.u32 %v468, 4294901760
      %470 = vmatmul.mubr.f32.gmra.mxu0 %v469
      %v471 = vpop.f32.mrf.mxu0
      %v472 = vadd.f32 %v197, %v471
      %v473 = vpop.f32.mrf.mxu0
      %474 = vdwg.mxu0
      %475 = vmatprep.subr.mxu0 0.0
      %476 = vmatpush1.msra.mxu0 0.0
      %477 = vmatprep.subr.mxu0 0.0
      %478 = vmatpush1.msra.mxu0 0.0
      %479 = vmatprep.subr.mxu0 0.0
      %480 = vmatpush1.msra.mxu0 0.0
      %481 = vmatprep.subr.mxu0 0.0
      %482 = vmatpush1.msra.mxu0 0.0
      %483 = vmatprep.subr.mxu0 0.0
      %484 = vmatpush1.msra.mxu0 0.0
      %485 = vmatprep.subr.mxu0 0.0
      %486 = vmatpush1.msra.mxu0 0.0
      %487 = vmatprep.subr.mxu0 0.0
      %488 = vmatpush1.msra.mxu0 0.0
      %489 = vmatprep.subr.mxu0 0.0
      %490 = vmatpush1.msra.mxu0 0.0
      %491 = vmatprep.subr.mxu0 0.0
      %492 = vmatpush1.msra.mxu0 0.0
      %493 = vmatprep.subr.mxu0 0.0
      %494 = vmatpush1.msra.mxu0 0.0
      %495 = vmatprep.subr.mxu0 0.0
      %496 = vmatpush1.msra.mxu0 0.0
      %497 = vmatprep.subr.mxu0 0.0
      %498 = vmatpush1.msra.mxu0 0.0
      %499 = vmatprep.subr.mxu0 0.0
      %500 = vmatpush1.msra.mxu0 0.0
      %501 = vmatprep.subr.mxu0 0.0
      %502 = vmatpush1.msra.mxu0 0.0
      %503 = vmatprep.subr.mxu0 0.0
      %v504 = vand.u32 %v191, 4294901760
      %v505 = vsub.f32 %v191, %v504
      %v506 = vand.u32 %v505, 4294901760
      %v507 = vsub.f32 %v505, %v506
      %v508 = vand.u32 %v507, 4294901760
      %509 = vmatpush1.msra.mxu0 %v508
      %510 = vmatprep.subr.mxu0 0.0
      %v511 = vand.u32 %v190, 4294901760
      %v512 = vsub.f32 %v190, %v511
      %v513 = vand.u32 %v512, 4294901760
      %v514 = vsub.f32 %v512, %v513
      %v515 = vand.u32 %v514, 4294901760
      %516 = vmatpush1.msra.mxu0 %v515
      %517 = vmatprep.subr.mxu0 0.0
      %518 = vmatpush2.msra.mxu0 0.0
      %519 = vmatprep.subr.mxu0 0.0
      %520 = vmatpush2.msra.mxu0 0.0
      %521 = vmatprep.subr.mxu0 0.0
      %522 = vmatpush2.msra.mxu0 0.0
      %523 = vmatprep.subr.mxu0 0.0
      %524 = vmatpush2.msra.mxu0 0.0
      %525 = vmatprep.subr.mxu0 0.0
      %526 = vmatpush2.msra.mxu0 0.0
      %527 = vmatprep.subr.mxu0 0.0
      %528 = vmatpush2.msra.mxu0 0.0
      %529 = vmatprep.subr.mxu0 0.0
      %530 = vmatpush2.msra.mxu0 0.0
      %531 = vmatprep.subr.mxu0 0.0
      %532 = vmatpush2.msra.mxu0 0.0
      %533 = vmatprep.subr.mxu0 0.0
      %534 = vmatpush2.msra.mxu0 0.0
      %535 = vmatprep.subr.mxu0 0.0
      %536 = vmatpush2.msra.mxu0 0.0
      %537 = vmatprep.subr.mxu0 0.0
      %538 = vmatpush2.msra.mxu0 0.0
      %539 = vmatprep.subr.mxu0 0.0
      %540 = vmatpush2.msra.mxu0 0.0
      %541 = vmatprep.subr.mxu0 0.0
      %542 = vmatpush2.msra.mxu0 0.0
      %543 = vmatprep.subr.mxu0 0.0
      %544 = vmatpush2.msra.mxu0 0.0
      %545 = vmatprep.subr.mxu0 0.0
      %546 = vmatpush2.msra.mxu0 0.0
      %547 = vmatprep.subr.mxu0 0.0
      %548 = vmatpush2.msra.mxu0 0.0
      %549 = vmatprep.mubr.f32.mxu0 0.0
      %v550 = vand.u32 %v201, 4294901760
      %551 = vmatmul.mubr.f32.gmra.mxu0 %v550
      %v552 = vpop.f32.mrf.mxu0
      %v553 = vadd.f32 %v322, %v552
      %v554 = vpop.f32.mrf.mxu0
      %555 = vmatprep.mubr.f32.mxu0 0.0
      %v556 = vand.u32 %v204, 4294901760
      %557 = vmatmul.mubr.f32.gmra.mxu0 %v556
      %v558 = vpop.f32.mrf.mxu0
      %v559 = vadd.f32 %v332, %v558
      %v560 = vpop.f32.mrf.mxu0
      %561 = vmatprep.mubr.f32.mxu0 0.0
      %v562 = vand.u32 %v207, 4294901760
      %563 = vmatmul.mubr.f32.gmra.mxu0 %v562
      %v564 = vpop.f32.mrf.mxu0
      %v565 = vadd.f32 %v342, %v564
      %v566 = vpop.f32.mrf.mxu0
      %567 = vmatprep.mubr.f32.mxu0 0.0
      %v568 = vand.u32 %v210, 4294901760
      %569 = vmatmul.mubr.f32.gmra.mxu0 %v568
      %v570 = vpop.f32.mrf.mxu0
      %v571 = vadd.f32 %v352, %v570
      %v572 = vpop.f32.mrf.mxu0
      %573 = vmatprep.mubr.f32.mxu0 0.0
      %v574 = vand.u32 %v213, 4294901760
      %575 = vmatmul.mubr.f32.gmra.mxu0 %v574
      %v576 = vpop.f32.mrf.mxu0
      %v577 = vadd.f32 %v362, %v576
      %v578 = vpop.f32.mrf.mxu0
      %579 = vmatprep.mubr.f32.mxu0 0.0
      %v580 = vand.u32 %v216, 4294901760
      %581 = vmatmul.mubr.f32.gmra.mxu0 %v580
      %v582 = vpop.f32.mrf.mxu0
      %v583 = vadd.f32 %v372, %v582
      %v584 = vpop.f32.mrf.mxu0
      %585 = vmatprep.mubr.f32.mxu0 0.0
      %v586 = vand.u32 %v219, 4294901760
      %587 = vmatmul.mubr.f32.gmra.mxu0 %v586
      %v588 = vpop.f32.mrf.mxu0
      %v589 = vadd.f32 %v382, %v588
      %v590 = vpop.f32.mrf.mxu0
      %591 = vmatprep.mubr.f32.mxu0 0.0
      %v592 = vand.u32 %v222, 4294901760
      %593 = vmatmul.mubr.f32.gmra.mxu0 %v592
      %v594 = vpop.f32.mrf.mxu0
      %v595 = vadd.f32 %v392, %v594
      %v596 = vpop.f32.mrf.mxu0
      %597 = vmatprep.mubr.f32.mxu0 0.0
      %v598 = vand.u32 %v225, 4294901760
      %599 = vmatmul.mubr.f32.gmra.mxu0 %v598
      %v600 = vpop.f32.mrf.mxu0
      %v601 = vadd.f32 %v402, %v600
      %v602 = vpop.f32.mrf.mxu0
      %603 = vmatprep.mubr.f32.mxu0 0.0
      %v604 = vand.u32 %v228, 4294901760
      %605 = vmatmul.mubr.f32.gmra.mxu0 %v604
      %v606 = vpop.f32.mrf.mxu0
      %v607 = vadd.f32 %v412, %v606
      %v608 = vpop.f32.mrf.mxu0
      %609 = vmatprep.mubr.f32.mxu0 0.0
      %v610 = vand.u32 %v231, 4294901760
      %611 = vmatmul.mubr.f32.gmra.mxu0 %v610
      %v612 = vpop.f32.mrf.mxu0
      %v613 = vadd.f32 %v422, %v612
      %v614 = vpop.f32.mrf.mxu0
      %615 = vmatprep.mubr.f32.mxu0 0.0
      %v616 = vand.u32 %v234, 4294901760
      %617 = vmatmul.mubr.f32.gmra.mxu0 %v616
      %v618 = vpop.f32.mrf.mxu0
      %v619 = vadd.f32 %v432, %v618
      %v620 = vpop.f32.mrf.mxu0
      %621 = vmatprep.mubr.f32.mxu0 0.0
      %v622 = vand.u32 %v237, 4294901760
      %623 = vmatmul.mubr.f32.gmra.mxu0 %v622
      %v624 = vpop.f32.mrf.mxu0
      %v625 = vadd.f32 %v442, %v624
      %v626 = vpop.f32.mrf.mxu0
      %627 = vmatprep.mubr.f32.mxu0 0.0
      %v628 = vand.u32 %v240, 4294901760
      %629 = vmatmul.mubr.f32.gmra.mxu0 %v628
      %v630 = vpop.f32.mrf.mxu0
      %v631 = vadd.f32 %v452, %v630
      %v632 = vpop.f32.mrf.mxu0
      %633 = vmatprep.mubr.f32.mxu0 0.0
      %v634 = vand.u32 %v243, 4294901760
      %635 = vmatmul.mubr.f32.gmra.mxu0 %v634
      %v636 = vpop.f32.mrf.mxu0
      %v637 = vadd.f32 %v462, %v636
      %v638 = vpop.f32.mrf.mxu0
      %639 = vmatprep.mubr.f32.mxu0 0.0
      %v640 = vand.u32 %v246, 4294901760
      %641 = vmatmul.mubr.f32.gmra.mxu0 %v640
      %v642 = vpop.f32.mrf.mxu0
      %v643 = vadd.f32 %v472, %v642
      %v644 = vpop.f32.mrf.mxu0
      %645 = vdwg.mxu0
      %646 = vmatprep.subr.mxu0 0.0
      %647 = vmatpush1.msra.mxu0 0.0
      %648 = vmatprep.subr.mxu0 0.0
      %649 = vmatpush1.msra.mxu0 0.0
      %650 = vmatprep.subr.mxu0 0.0
      %651 = vmatpush1.msra.mxu0 0.0
      %652 = vmatprep.subr.mxu0 0.0
      %653 = vmatpush1.msra.mxu0 0.0
      %654 = vmatprep.subr.mxu0 0.0
      %655 = vmatpush1.msra.mxu0 0.0
      %656 = vmatprep.subr.mxu0 0.0
      %657 = vmatpush1.msra.mxu0 0.0
      %658 = vmatprep.subr.mxu0 0.0
      %659 = vmatpush1.msra.mxu0 0.0
      %660 = vmatprep.subr.mxu0 0.0
      %661 = vmatpush1.msra.mxu0 0.0
      %662 = vmatprep.subr.mxu0 0.0
      %663 = vmatpush1.msra.mxu0 0.0
      %664 = vmatprep.subr.mxu0 0.0
      %665 = vmatpush1.msra.mxu0 0.0
      %666 = vmatprep.subr.mxu0 0.0
      %667 = vmatpush1.msra.mxu0 0.0
      %668 = vmatprep.subr.mxu0 0.0
      %669 = vmatpush1.msra.mxu0 0.0
      %670 = vmatprep.subr.mxu0 0.0
      %671 = vmatpush1.msra.mxu0 0.0
      %672 = vmatprep.subr.mxu0 0.0
      %673 = vmatpush1.msra.mxu0 0.0
      %674 = vmatprep.subr.mxu0 0.0
      %v675 = vand.u32 %v191, 4294901760
      %v676 = vsub.f32 %v191, %v675
      %677 = vmatpush1.msra.mxu0 %v676
      %678 = vmatprep.subr.mxu0 0.0
      %v679 = vand.u32 %v190, 4294901760
      %v680 = vsub.f32 %v190, %v679
      %681 = vmatpush1.msra.mxu0 %v680
      %682 = vmatprep.subr.mxu0 0.0
      %683 = vmatpush2.msra.mxu0 0.0
      %684 = vmatprep.subr.mxu0 0.0
      %685 = vmatpush2.msra.mxu0 0.0
      %686 = vmatprep.subr.mxu0 0.0
      %687 = vmatpush2.msra.mxu0 0.0
      %688 = vmatprep.subr.mxu0 0.0
      %689 = vmatpush2.msra.mxu0 0.0
      %690 = vmatprep.subr.mxu0 0.0
      %691 = vmatpush2.msra.mxu0 0.0
      %692 = vmatprep.subr.mxu0 0.0
      %693 = vmatpush2.msra.mxu0 0.0
      %694 = vmatprep.subr.mxu0 0.0
      %695 = vmatpush2.msra.mxu0 0.0
      %696 = vmatprep.subr.mxu0 0.0
      %697 = vmatpush2.msra.mxu0 0.0
      %698 = vmatprep.subr.mxu0 0.0
      %699 = vmatpush2.msra.mxu0 0.0
      %700 = vmatprep.subr.mxu0 0.0
      %701 = vmatpush2.msra.mxu0 0.0
      %702 = vmatprep.subr.mxu0 0.0
      %703 = vmatpush2.msra.mxu0 0.0
      %704 = vmatprep.subr.mxu0 0.0
      %705 = vmatpush2.msra.mxu0 0.0
      %706 = vmatprep.subr.mxu0 0.0
      %707 = vmatpush2.msra.mxu0 0.0
      %708 = vmatprep.subr.mxu0 0.0
      %709 = vmatpush2.msra.mxu0 0.0
      %710 = vmatprep.subr.mxu0 0.0
      %711 = vmatpush2.msra.mxu0 0.0
      %712 = vmatprep.subr.mxu0 0.0
      %713 = vmatpush2.msra.mxu0 0.0
      %714 = vmatprep.mubr.f32.mxu0 0.0
      %v715 = vand.u32 %v201, 4294901760
      %v716 = vsub.f32 %v201, %v715
      %717 = vmatmul.mubr.f32.gmra.mxu0 %v716
      %v718 = vpop.f32.mrf.mxu0
      %v719 = vadd.f32 %v553, %v718
      %v720 = vpop.f32.mrf.mxu0
      %721 = vmatprep.mubr.f32.mxu0 0.0
      %v722 = vand.u32 %v204, 4294901760
      %v723 = vsub.f32 %v204, %v722
      %724 = vmatmul.mubr.f32.gmra.mxu0 %v723
      %v725 = vpop.f32.mrf.mxu0
      %v726 = vadd.f32 %v559, %v725
      %v727 = vpop.f32.mrf.mxu0
      %728 = vmatprep.mubr.f32.mxu0 0.0
      %v729 = vand.u32 %v207, 4294901760
      %v730 = vsub.f32 %v207, %v729
      %731 = vmatmul.mubr.f32.gmra.mxu0 %v730
      %v732 = vpop.f32.mrf.mxu0
      %v733 = vadd.f32 %v565, %v732
      %v734 = vpop.f32.mrf.mxu0
      %735 = vmatprep.mubr.f32.mxu0 0.0
      %v736 = vand.u32 %v210, 4294901760
      %v737 = vsub.f32 %v210, %v736
      %738 = vmatmul.mubr.f32.gmra.mxu0 %v737
      %v739 = vpop.f32.mrf.mxu0
      %v740 = vadd.f32 %v571, %v739
      %v741 = vpop.f32.mrf.mxu0
      %742 = vmatprep.mubr.f32.mxu0 0.0
      %v743 = vand.u32 %v213, 4294901760
      %v744 = vsub.f32 %v213, %v743
      %745 = vmatmul.mubr.f32.gmra.mxu0 %v744
      %v746 = vpop.f32.mrf.mxu0
      %v747 = vadd.f32 %v577, %v746
      %v748 = vpop.f32.mrf.mxu0
      %749 = vmatprep.mubr.f32.mxu0 0.0
      %v750 = vand.u32 %v216, 4294901760
      %v751 = vsub.f32 %v216, %v750
      %752 = vmatmul.mubr.f32.gmra.mxu0 %v751
      %v753 = vpop.f32.mrf.mxu0
      %v754 = vadd.f32 %v583, %v753
      %v755 = vpop.f32.mrf.mxu0
      %756 = vmatprep.mubr.f32.mxu0 0.0
      %v757 = vand.u32 %v219, 4294901760
      %v758 = vsub.f32 %v219, %v757
      %759 = vmatmul.mubr.f32.gmra.mxu0 %v758
      %v760 = vpop.f32.mrf.mxu0
      %v761 = vadd.f32 %v589, %v760
      %v762 = vpop.f32.mrf.mxu0
      %763 = vmatprep.mubr.f32.mxu0 0.0
      %v764 = vand.u32 %v222, 4294901760
      %v765 = vsub.f32 %v222, %v764
      %766 = vmatmul.mubr.f32.gmra.mxu0 %v765
      %v767 = vpop.f32.mrf.mxu0
      %v768 = vadd.f32 %v595, %v767
      %v769 = vpop.f32.mrf.mxu0
      %770 = vmatprep.mubr.f32.mxu0 0.0
      %v771 = vand.u32 %v225, 4294901760
      %v772 = vsub.f32 %v225, %v771
      %773 = vmatmul.mubr.f32.gmra.mxu0 %v772
      %v774 = vpop.f32.mrf.mxu0
      %v775 = vadd.f32 %v601, %v774
      %v776 = vpop.f32.mrf.mxu0
      %777 = vmatprep.mubr.f32.mxu0 0.0
      %v778 = vand.u32 %v228, 4294901760
      %v779 = vsub.f32 %v228, %v778
      %780 = vmatmul.mubr.f32.gmra.mxu0 %v779
      %v781 = vpop.f32.mrf.mxu0
      %v782 = vadd.f32 %v607, %v781
      %v783 = vpop.f32.mrf.mxu0
      %784 = vmatprep.mubr.f32.mxu0 0.0
      %v785 = vand.u32 %v231, 4294901760
      %v786 = vsub.f32 %v231, %v785
      %787 = vmatmul.mubr.f32.gmra.mxu0 %v786
      %v788 = vpop.f32.mrf.mxu0
      %v789 = vadd.f32 %v613, %v788
      %v790 = vpop.f32.mrf.mxu0
      %791 = vmatprep.mubr.f32.mxu0 0.0
      %v792 = vand.u32 %v234, 4294901760
      %v793 = vsub.f32 %v234, %v792
      %794 = vmatmul.mubr.f32.gmra.mxu0 %v793
      %v795 = vpop.f32.mrf.mxu0
      %v796 = vadd.f32 %v619, %v795
      %v797 = vpop.f32.mrf.mxu0
      %798 = vmatprep.mubr.f32.mxu0 0.0
      %v799 = vand.u32 %v237, 4294901760
      %v800 = vsub.f32 %v237, %v799
      %801 = vmatmul.mubr.f32.gmra.mxu0 %v800
      %v802 = vpop.f32.mrf.mxu0
      %v803 = vadd.f32 %v625, %v802
      %v804 = vpop.f32.mrf.mxu0
      %805 = vmatprep.mubr.f32.mxu0 0.0
      %v806 = vand.u32 %v240, 4294901760
      %v807 = vsub.f32 %v240, %v806
      %808 = vmatmul.mubr.f32.gmra.mxu0 %v807
      %v809 = vpop.f32.mrf.mxu0
      %v810 = vadd.f32 %v631, %v809
      %v811 = vpop.f32.mrf.mxu0
      %812 = vmatprep.mubr.f32.mxu0 0.0
      %v813 = vand.u32 %v243, 4294901760
      %v814 = vsub.f32 %v243, %v813
      %815 = vmatmul.mubr.f32.gmra.mxu0 %v814
      %v816 = vpop.f32.mrf.mxu0
      %v817 = vadd.f32 %v637, %v816
      %v818 = vpop.f32.mrf.mxu0
      %819 = vmatprep.mubr.f32.mxu0 0.0
      %v820 = vand.u32 %v246, 4294901760
      %v821 = vsub.f32 %v246, %v820
      %822 = vmatmul.mubr.f32.gmra.mxu0 %v821
      %v823 = vpop.f32.mrf.mxu0
      %v824 = vadd.f32 %v643, %v823
      %v825 = vpop.f32.mrf.mxu0
      %826 = vdwg.mxu0
      %827 = vmatprep.subr.mxu0 0.0
      %828 = vmatpush1.msra.mxu0 0.0
      %829 = vmatprep.subr.mxu0 0.0
      %830 = vmatpush1.msra.mxu0 0.0
      %831 = vmatprep.subr.mxu0 0.0
      %832 = vmatpush1.msra.mxu0 0.0
      %833 = vmatprep.subr.mxu0 0.0
      %834 = vmatpush1.msra.mxu0 0.0
      %835 = vmatprep.subr.mxu0 0.0
      %836 = vmatpush1.msra.mxu0 0.0
      %837 = vmatprep.subr.mxu0 0.0
      %838 = vmatpush1.msra.mxu0 0.0
      %839 = vmatprep.subr.mxu0 0.0
      %840 = vmatpush1.msra.mxu0 0.0
      %841 = vmatprep.subr.mxu0 0.0
      %842 = vmatpush1.msra.mxu0 0.0
      %843 = vmatprep.subr.mxu0 0.0
      %844 = vmatpush1.msra.mxu0 0.0
      %845 = vmatprep.subr.mxu0 0.0
      %846 = vmatpush1.msra.mxu0 0.0
      %847 = vmatprep.subr.mxu0 0.0
      %848 = vmatpush1.msra.mxu0 0.0
      %849 = vmatprep.subr.mxu0 0.0
      %850 = vmatpush1.msra.mxu0 0.0
      %851 = vmatprep.subr.mxu0 0.0
      %852 = vmatpush1.msra.mxu0 0.0
      %853 = vmatprep.subr.mxu0 0.0
      %854 = vmatpush1.msra.mxu0 0.0
      %855 = vmatprep.subr.mxu0 0.0
      %v856 = vand.u32 %v191, 4294901760
      %857 = vmatpush1.msra.mxu0 %v856
      %858 = vmatprep.subr.mxu0 0.0
      %v859 = vand.u32 %v190, 4294901760
      %860 = vmatpush1.msra.mxu0 %v859
      %861 = vmatprep.subr.mxu0 0.0
      %862 = vmatpush2.msra.mxu0 0.0
      %863 = vmatprep.subr.mxu0 0.0
      %864 = vmatpush2.msra.mxu0 0.0
      %865 = vmatprep.subr.mxu0 0.0
      %866 = vmatpush2.msra.mxu0 0.0
      %867 = vmatprep.subr.mxu0 0.0
      %868 = vmatpush2.msra.mxu0 0.0
      %869 = vmatprep.subr.mxu0 0.0
      %870 = vmatpush2.msra.mxu0 0.0
      %871 = vmatprep.subr.mxu0 0.0
      %872 = vmatpush2.msra.mxu0 0.0
      %873 = vmatprep.subr.mxu0 0.0
      %874 = vmatpush2.msra.mxu0 0.0
      %875 = vmatprep.subr.mxu0 0.0
      %876 = vmatpush2.msra.mxu0 0.0
      %877 = vmatprep.subr.mxu0 0.0
      %878 = vmatpush2.msra.mxu0 0.0
      %879 = vmatprep.subr.mxu0 0.0
      %880 = vmatpush2.msra.mxu0 0.0
      %881 = vmatprep.subr.mxu0 0.0
      %882 = vmatpush2.msra.mxu0 0.0
      %883 = vmatprep.subr.mxu0 0.0
      %884 = vmatpush2.msra.mxu0 0.0
      %885 = vmatprep.subr.mxu0 0.0
      %886 = vmatpush2.msra.mxu0 0.0
      %887 = vmatprep.subr.mxu0 0.0
      %888 = vmatpush2.msra.mxu0 0.0
      %889 = vmatprep.subr.mxu0 0.0
      %890 = vmatpush2.msra.mxu0 0.0
      %891 = vmatprep.subr.mxu0 0.0
      %892 = vmatpush2.msra.mxu0 0.0
      %893 = vmatprep.mubr.f32.mxu0 0.0
      %v894 = vand.u32 %v201, 4294901760
      %v895 = vsub.f32 %v201, %v894
      %v896 = vand.u32 %v895, 4294901760
      %897 = vmatmul.mubr.f32.gmra.mxu0 %v896
      %v898 = vpop.f32.mrf.mxu0
      %v899 = vadd.f32 %v719, %v898
      %v900 = vpop.f32.mrf.mxu0
      %901 = vmatprep.mubr.f32.mxu0 0.0
      %v902 = vand.u32 %v204, 4294901760
      %v903 = vsub.f32 %v204, %v902
      %v904 = vand.u32 %v903, 4294901760
      %905 = vmatmul.mubr.f32.gmra.mxu0 %v904
      %v906 = vpop.f32.mrf.mxu0
      %v907 = vadd.f32 %v726, %v906
      %v908 = vpop.f32.mrf.mxu0
      %909 = vmatprep.mubr.f32.mxu0 0.0
      %v910 = vand.u32 %v207, 4294901760
      %v911 = vsub.f32 %v207, %v910
      %v912 = vand.u32 %v911, 4294901760
      %913 = vmatmul.mubr.f32.gmra.mxu0 %v912
      %v914 = vpop.f32.mrf.mxu0
      %v915 = vadd.f32 %v733, %v914
      %v916 = vpop.f32.mrf.mxu0
      %917 = vmatprep.mubr.f32.mxu0 0.0
      %v918 = vand.u32 %v210, 4294901760
      %v919 = vsub.f32 %v210, %v918
      %v920 = vand.u32 %v919, 4294901760
      %921 = vmatmul.mubr.f32.gmra.mxu0 %v920
      %v922 = vpop.f32.mrf.mxu0
      %v923 = vadd.f32 %v740, %v922
      %v924 = vpop.f32.mrf.mxu0
      %925 = vmatprep.mubr.f32.mxu0 0.0
      %v926 = vand.u32 %v213, 4294901760
      %v927 = vsub.f32 %v213, %v926
      %v928 = vand.u32 %v927, 4294901760
      %929 = vmatmul.mubr.f32.gmra.mxu0 %v928
      %v930 = vpop.f32.mrf.mxu0
      %v931 = vadd.f32 %v747, %v930
      %v932 = vpop.f32.mrf.mxu0
      %933 = vmatprep.mubr.f32.mxu0 0.0
      %v934 = vand.u32 %v216, 4294901760
      %v935 = vsub.f32 %v216, %v934
      %v936 = vand.u32 %v935, 4294901760
      %937 = vmatmul.mubr.f32.gmra.mxu0 %v936
      %v938 = vpop.f32.mrf.mxu0
      %v939 = vadd.f32 %v754, %v938
      %v940 = vpop.f32.mrf.mxu0
      %941 = vmatprep.mubr.f32.mxu0 0.0
      %v942 = vand.u32 %v219, 4294901760
      %v943 = vsub.f32 %v219, %v942
      %v944 = vand.u32 %v943, 4294901760
      %945 = vmatmul.mubr.f32.gmra.mxu0 %v944
      %v946 = vpop.f32.mrf.mxu0
      %v947 = vadd.f32 %v761, %v946
      %v948 = vpop.f32.mrf.mxu0
      %949 = vmatprep.mubr.f32.mxu0 0.0
      %v950 = vand.u32 %v222, 4294901760
      %v951 = vsub.f32 %v222, %v950
      %v952 = vand.u32 %v951, 4294901760
      %953 = vmatmul.mubr.f32.gmra.mxu0 %v952
      %v954 = vpop.f32.mrf.mxu0
      %v955 = vadd.f32 %v768, %v954
      %v956 = vpop.f32.mrf.mxu0
      %957 = vmatprep.mubr.f32.mxu0 0.0
      %v958 = vand.u32 %v225, 4294901760
      %v959 = vsub.f32 %v225, %v958
      %v960 = vand.u32 %v959, 4294901760
      %961 = vmatmul.mubr.f32.gmra.mxu0 %v960
      %v962 = vpop.f32.mrf.mxu0
      %v963 = vadd.f32 %v775, %v962
      %v964 = vpop.f32.mrf.mxu0
      %965 = vmatprep.mubr.f32.mxu0 0.0
      %v966 = vand.u32 %v228, 4294901760
      %v967 = vsub.f32 %v228, %v966
      %v968 = vand.u32 %v967, 4294901760
      %969 = vmatmul.mubr.f32.gmra.mxu0 %v968
      %v970 = vpop.f32.mrf.mxu0
      %v971 = vadd.f32 %v782, %v970
      %v972 = vpop.f32.mrf.mxu0
      %973 = vmatprep.mubr.f32.mxu0 0.0
      %v974 = vand.u32 %v231, 4294901760
      %v975 = vsub.f32 %v231, %v974
      %v976 = vand.u32 %v975, 4294901760
      %977 = vmatmul.mubr.f32.gmra.mxu0 %v976
      %v978 = vpop.f32.mrf.mxu0
      %v979 = vadd.f32 %v789, %v978
      %v980 = vpop.f32.mrf.mxu0
      %981 = vmatprep.mubr.f32.mxu0 0.0
      %v982 = vand.u32 %v234, 4294901760
      %v983 = vsub.f32 %v234, %v982
      %v984 = vand.u32 %v983, 4294901760
      %985 = vmatmul.mubr.f32.gmra.mxu0 %v984
      %v986 = vpop.f32.mrf.mxu0
      %v987 = vadd.f32 %v796, %v986
      %v988 = vpop.f32.mrf.mxu0
      %989 = vmatprep.mubr.f32.mxu0 0.0
      %v990 = vand.u32 %v237, 4294901760
      %v991 = vsub.f32 %v237, %v990
      %v992 = vand.u32 %v991, 4294901760
      %993 = vmatmul.mubr.f32.gmra.mxu0 %v992
      %v994 = vpop.f32.mrf.mxu0
      %v995 = vadd.f32 %v803, %v994
      %v996 = vpop.f32.mrf.mxu0
      %997 = vmatprep.mubr.f32.mxu0 0.0
      %v998 = vand.u32 %v240, 4294901760
      %v999 = vsub.f32 %v240, %v998
      %v1000 = vand.u32 %v999, 4294901760
      %1001 = vmatmul.mubr.f32.gmra.mxu0 %v1000
      %v1002 = vpop.f32.mrf.mxu0
      %v1003 = vadd.f32 %v810, %v1002
      %v1004 = vpop.f32.mrf.mxu0
      %1005 = vmatprep.mubr.f32.mxu0 0.0
      %v1006 = vand.u32 %v243, 4294901760
      %v1007 = vsub.f32 %v243, %v1006
      %v1008 = vand.u32 %v1007, 4294901760
      %1009 = vmatmul.mubr.f32.gmra.mxu0 %v1008
      %v1010 = vpop.f32.mrf.mxu0
      %v1011 = vadd.f32 %v817, %v1010
      %v1012 = vpop.f32.mrf.mxu0
      %1013 = vmatprep.mubr.f32.mxu0 0.0
      %v1014 = vand.u32 %v246, 4294901760
      %v1015 = vsub.f32 %v246, %v1014
      %v1016 = vand.u32 %v1015, 4294901760
      %1017 = vmatmul.mubr.f32.gmra.mxu0 %v1016
      %v1018 = vpop.f32.mrf.mxu0
      %v1019 = vadd.f32 %v824, %v1018
      %v1020 = vpop.f32.mrf.mxu0
      %1021 = vdwg.mxu0
      %1022 = vmatprep.subr.mxu0 0.0
      %1023 = vmatpush1.msra.mxu0 0.0
      %1024 = vmatprep.subr.mxu0 0.0
      %1025 = vmatpush1.msra.mxu0 0.0
      %1026 = vmatprep.subr.mxu0 0.0
      %1027 = vmatpush1.msra.mxu0 0.0
      %1028 = vmatprep.subr.mxu0 0.0
      %1029 = vmatpush1.msra.mxu0 0.0
      %1030 = vmatprep.subr.mxu0 0.0
      %1031 = vmatpush1.msra.mxu0 0.0
      %1032 = vmatprep.subr.mxu0 0.0
      %1033 = vmatpush1.msra.mxu0 0.0
      %1034 = vmatprep.subr.mxu0 0.0
      %1035 = vmatpush1.msra.mxu0 0.0
      %1036 = vmatprep.subr.mxu0 0.0
      %1037 = vmatpush1.msra.mxu0 0.0
      %1038 = vmatprep.subr.mxu0 0.0
      %1039 = vmatpush1.msra.mxu0 0.0
      %1040 = vmatprep.subr.mxu0 0.0
      %1041 = vmatpush1.msra.mxu0 0.0
      %1042 = vmatprep.subr.mxu0 0.0
      %1043 = vmatpush1.msra.mxu0 0.0
      %1044 = vmatprep.subr.mxu0 0.0
      %1045 = vmatpush1.msra.mxu0 0.0
      %1046 = vmatprep.subr.mxu0 0.0
      %1047 = vmatpush1.msra.mxu0 0.0
      %1048 = vmatprep.subr.mxu0 0.0
      %1049 = vmatpush1.msra.mxu0 0.0
      %1050 = vmatprep.subr.mxu0 0.0
      %v1051 = vand.u32 %v191, 4294901760
      %v1052 = vsub.f32 %v191, %v1051
      %v1053 = vand.u32 %v1052, 4294901760
      %1054 = vmatpush1.msra.mxu0 %v1053
      %1055 = vmatprep.subr.mxu0 0.0
      %v1056 = vand.u32 %v190, 4294901760
      %v1057 = vsub.f32 %v190, %v1056
      %v1058 = vand.u32 %v1057, 4294901760
      %1059 = vmatpush1.msra.mxu0 %v1058
      %1060 = vmatprep.subr.mxu0 0.0
      %1061 = vmatpush2.msra.mxu0 0.0
      %1062 = vmatprep.subr.mxu0 0.0
      %1063 = vmatpush2.msra.mxu0 0.0
      %1064 = vmatprep.subr.mxu0 0.0
      %1065 = vmatpush2.msra.mxu0 0.0
      %1066 = vmatprep.subr.mxu0 0.0
      %1067 = vmatpush2.msra.mxu0 0.0
      %1068 = vmatprep.subr.mxu0 0.0
      %1069 = vmatpush2.msra.mxu0 0.0
      %1070 = vmatprep.subr.mxu0 0.0
      %1071 = vmatpush2.msra.mxu0 0.0
      %1072 = vmatprep.subr.mxu0 0.0
      %1073 = vmatpush2.msra.mxu0 0.0
      %1074 = vmatprep.subr.mxu0 0.0
      %1075 = vmatpush2.msra.mxu0 0.0
      %1076 = vmatprep.subr.mxu0 0.0
      %1077 = vmatpush2.msra.mxu0 0.0
      %1078 = vmatprep.subr.mxu0 0.0
      %1079 = vmatpush2.msra.mxu0 0.0
      %1080 = vmatprep.subr.mxu0 0.0
      %1081 = vmatpush2.msra.mxu0 0.0
      %1082 = vmatprep.subr.mxu0 0.0
      %1083 = vmatpush2.msra.mxu0 0.0
      %1084 = vmatprep.subr.mxu0 0.0
      %1085 = vmatpush2.msra.mxu0 0.0
      %1086 = vmatprep.subr.mxu0 0.0
      %1087 = vmatpush2.msra.mxu0 0.0
      %1088 = vmatprep.subr.mxu0 0.0
      %1089 = vmatpush2.msra.mxu0 0.0
      %1090 = vmatprep.subr.mxu0 0.0
      %1091 = vmatpush2.msra.mxu0 0.0
      %1092 = vmatprep.mubr.f32.mxu0 0.0
      %v1093 = vand.u32 %v201, 4294901760
      %1094 = vmatmul.mubr.f32.gmra.mxu0 %v1093
      %v1095 = vpop.f32.mrf.mxu0
      %v1096 = vadd.f32 %v899, %v1095
      %v1097 = vpop.f32.mrf.mxu0
      %1098 = vmatprep.mubr.f32.mxu0 0.0
      %v1099 = vand.u32 %v204, 4294901760
      %1100 = vmatmul.mubr.f32.gmra.mxu0 %v1099
      %v1101 = vpop.f32.mrf.mxu0
      %v1102 = vadd.f32 %v907, %v1101
      %v1103 = vpop.f32.mrf.mxu0
      %1104 = vmatprep.mubr.f32.mxu0 0.0
      %v1105 = vand.u32 %v207, 4294901760
      %1106 = vmatmul.mubr.f32.gmra.mxu0 %v1105
      %v1107 = vpop.f32.mrf.mxu0
      %v1108 = vadd.f32 %v915, %v1107
      %v1109 = vpop.f32.mrf.mxu0
      %1110 = vmatprep.mubr.f32.mxu0 0.0
      %v1111 = vand.u32 %v210, 4294901760
      %1112 = vmatmul.mubr.f32.gmra.mxu0 %v1111
      %v1113 = vpop.f32.mrf.mxu0
      %v1114 = vadd.f32 %v923, %v1113
      %v1115 = vpop.f32.mrf.mxu0
      %1116 = vmatprep.mubr.f32.mxu0 0.0
      %v1117 = vand.u32 %v213, 4294901760
      %1118 = vmatmul.mubr.f32.gmra.mxu0 %v1117
      %v1119 = vpop.f32.mrf.mxu0
      %v1120 = vadd.f32 %v931, %v1119
      %v1121 = vpop.f32.mrf.mxu0
      %1122 = vmatprep.mubr.f32.mxu0 0.0
      %v1123 = vand.u32 %v216, 4294901760
      %1124 = vmatmul.mubr.f32.gmra.mxu0 %v1123
      %v1125 = vpop.f32.mrf.mxu0
      %v1126 = vadd.f32 %v939, %v1125
      %v1127 = vpop.f32.mrf.mxu0
      %1128 = vmatprep.mubr.f32.mxu0 0.0
      %v1129 = vand.u32 %v219, 4294901760
      %1130 = vmatmul.mubr.f32.gmra.mxu0 %v1129
      %v1131 = vpop.f32.mrf.mxu0
      %v1132 = vadd.f32 %v947, %v1131
      %v1133 = vpop.f32.mrf.mxu0
      %1134 = vmatprep.mubr.f32.mxu0 0.0
      %v1135 = vand.u32 %v222, 4294901760
      %1136 = vmatmul.mubr.f32.gmra.mxu0 %v1135
      %v1137 = vpop.f32.mrf.mxu0
      %v1138 = vadd.f32 %v955, %v1137
      %v1139 = vpop.f32.mrf.mxu0
      %1140 = vmatprep.mubr.f32.mxu0 0.0
      %v1141 = vand.u32 %v225, 4294901760
      %1142 = vmatmul.mubr.f32.gmra.mxu0 %v1141
      %v1143 = vpop.f32.mrf.mxu0
      %v1144 = vadd.f32 %v963, %v1143
      %v1145 = vpop.f32.mrf.mxu0
      %1146 = vmatprep.mubr.f32.mxu0 0.0
      %v1147 = vand.u32 %v228, 4294901760
      %1148 = vmatmul.mubr.f32.gmra.mxu0 %v1147
      %v1149 = vpop.f32.mrf.mxu0
      %v1150 = vadd.f32 %v971, %v1149
      %v1151 = vpop.f32.mrf.mxu0
      %1152 = vmatprep.mubr.f32.mxu0 0.0
      %v1153 = vand.u32 %v231, 4294901760
      %1154 = vmatmul.mubr.f32.gmra.mxu0 %v1153
      %v1155 = vpop.f32.mrf.mxu0
      %v1156 = vadd.f32 %v979, %v1155
      %v1157 = vpop.f32.mrf.mxu0
      %1158 = vmatprep.mubr.f32.mxu0 0.0
      %v1159 = vand.u32 %v234, 4294901760
      %1160 = vmatmul.mubr.f32.gmra.mxu0 %v1159
      %v1161 = vpop.f32.mrf.mxu0
      %v1162 = vadd.f32 %v987, %v1161
      %v1163 = vpop.f32.mrf.mxu0
      %1164 = vmatprep.mubr.f32.mxu0 0.0
      %v1165 = vand.u32 %v237, 4294901760
      %1166 = vmatmul.mubr.f32.gmra.mxu0 %v1165
      %v1167 = vpop.f32.mrf.mxu0
      %v1168 = vadd.f32 %v995, %v1167
      %v1169 = vpop.f32.mrf.mxu0
      %1170 = vmatprep.mubr.f32.mxu0 0.0
      %v1171 = vand.u32 %v240, 4294901760
      %1172 = vmatmul.mubr.f32.gmra.mxu0 %v1171
      %v1173 = vpop.f32.mrf.mxu0
      %v1174 = vadd.f32 %v1003, %v1173
      %v1175 = vpop.f32.mrf.mxu0
      %1176 = vmatprep.mubr.f32.mxu0 0.0
      %v1177 = vand.u32 %v243, 4294901760
      %1178 = vmatmul.mubr.f32.gmra.mxu0 %v1177
      %v1179 = vpop.f32.mrf.mxu0
      %v1180 = vadd.f32 %v1011, %v1179
      %v1181 = vpop.f32.mrf.mxu0
      %1182 = vmatprep.mubr.f32.mxu0 0.0
      %v1183 = vand.u32 %v246, 4294901760
      %1184 = vmatmul.mubr.f32.gmra.mxu0 %v1183
      %v1185 = vpop.f32.mrf.mxu0
      %v1186 = vadd.f32 %v1019, %v1185
      %v1187 = vpop.f32.mrf.mxu0
      %1188 = vdwg.mxu0
      %1189 = vmatprep.subr.mxu0 0.0
      %1190 = vmatpush1.msra.mxu0 0.0
      %1191 = vmatprep.subr.mxu0 0.0
      %1192 = vmatpush1.msra.mxu0 0.0
      %1193 = vmatprep.subr.mxu0 0.0
      %1194 = vmatpush1.msra.mxu0 0.0
      %1195 = vmatprep.subr.mxu0 0.0
      %1196 = vmatpush1.msra.mxu0 0.0
      %1197 = vmatprep.subr.mxu0 0.0
      %1198 = vmatpush1.msra.mxu0 0.0
      %1199 = vmatprep.subr.mxu0 0.0
      %1200 = vmatpush1.msra.mxu0 0.0
      %1201 = vmatprep.subr.mxu0 0.0
      %1202 = vmatpush1.msra.mxu0 0.0
      %1203 = vmatprep.subr.mxu0 0.0
      %1204 = vmatpush1.msra.mxu0 0.0
      %1205 = vmatprep.subr.mxu0 0.0
      %1206 = vmatpush1.msra.mxu0 0.0
      %1207 = vmatprep.subr.mxu0 0.0
      %1208 = vmatpush1.msra.mxu0 0.0
      %1209 = vmatprep.subr.mxu0 0.0
      %1210 = vmatpush1.msra.mxu0 0.0
      %1211 = vmatprep.subr.mxu0 0.0
      %1212 = vmatpush1.msra.mxu0 0.0
      %1213 = vmatprep.subr.mxu0 0.0
      %1214 = vmatpush1.msra.mxu0 0.0
      %1215 = vmatprep.subr.mxu0 0.0
      %1216 = vmatpush1.msra.mxu0 0.0
      %1217 = vmatprep.subr.mxu0 0.0
      %v1218 = vand.u32 %v191, 4294901760
      %1219 = vmatpush1.msra.mxu0 %v1218
      %1220 = vmatprep.subr.mxu0 0.0
      %v1221 = vand.u32 %v190, 4294901760
      %1222 = vmatpush1.msra.mxu0 %v1221
      %1223 = vmatprep.subr.mxu0 0.0
      %1224 = vmatpush2.msra.mxu0 0.0
      %1225 = vmatprep.subr.mxu0 0.0
      %1226 = vmatpush2.msra.mxu0 0.0
      %1227 = vmatprep.subr.mxu0 0.0
      %1228 = vmatpush2.msra.mxu0 0.0
      %1229 = vmatprep.subr.mxu0 0.0
      %1230 = vmatpush2.msra.mxu0 0.0
      %1231 = vmatprep.subr.mxu0 0.0
      %1232 = vmatpush2.msra.mxu0 0.0
      %1233 = vmatprep.subr.mxu0 0.0
      %1234 = vmatpush2.msra.mxu0 0.0
      %1235 = vmatprep.subr.mxu0 0.0
      %1236 = vmatpush2.msra.mxu0 0.0
      %1237 = vmatprep.subr.mxu0 0.0
      %1238 = vmatpush2.msra.mxu0 0.0
      %1239 = vmatprep.subr.mxu0 0.0
      %1240 = vmatpush2.msra.mxu0 0.0
      %1241 = vmatprep.subr.mxu0 0.0
      %1242 = vmatpush2.msra.mxu0 0.0
      %1243 = vmatprep.subr.mxu0 0.0
      %1244 = vmatpush2.msra.mxu0 0.0
      %1245 = vmatprep.subr.mxu0 0.0
      %1246 = vmatpush2.msra.mxu0 0.0
      %1247 = vmatprep.subr.mxu0 0.0
      %1248 = vmatpush2.msra.mxu0 0.0
      %1249 = vmatprep.subr.mxu0 0.0
      %1250 = vmatpush2.msra.mxu0 0.0
      %1251 = vmatprep.subr.mxu0 0.0
      %1252 = vmatpush2.msra.mxu0 0.0
      %1253 = vmatprep.subr.mxu0 0.0
      %1254 = vmatpush2.msra.mxu0 0.0
      %1255 = vmatprep.mubr.f32.mxu0 0.0
      %v1256 = vand.u32 %v201, 4294901760
      %1257 = vmatmul.mubr.f32.gmra.mxu0 %v1256
      %v1258 = vpop.f32.mrf.mxu0
      %v1259 = vadd.f32 %v1096, %v1258
      %v1260 = vpop.f32.mrf.mxu0
      %1261 = vmatprep.mubr.f32.mxu0 0.0
      %v1262 = vand.u32 %v204, 4294901760
      %1263 = vmatmul.mubr.f32.gmra.mxu0 %v1262
      %v1264 = vpop.f32.mrf.mxu0
      %v1265 = vadd.f32 %v1102, %v1264
      %v1266 = vpop.f32.mrf.mxu0
      %1267 = vmatprep.mubr.f32.mxu0 0.0
      %v1268 = vand.u32 %v207, 4294901760
      %1269 = vmatmul.mubr.f32.gmra.mxu0 %v1268
      %v1270 = vpop.f32.mrf.mxu0
      %v1271 = vadd.f32 %v1108, %v1270
      %v1272 = vpop.f32.mrf.mxu0
      %1273 = vmatprep.mubr.f32.mxu0 0.0
      %v1274 = vand.u32 %v210, 4294901760
      %1275 = vmatmul.mubr.f32.gmra.mxu0 %v1274
      %v1276 = vpop.f32.mrf.mxu0
      %v1277 = vadd.f32 %v1114, %v1276
      %v1278 = vpop.f32.mrf.mxu0
      %1279 = vmatprep.mubr.f32.mxu0 0.0
      %v1280 = vand.u32 %v213, 4294901760
      %1281 = vmatmul.mubr.f32.gmra.mxu0 %v1280
      %v1282 = vpop.f32.mrf.mxu0
      %v1283 = vadd.f32 %v1120, %v1282
      %v1284 = vpop.f32.mrf.mxu0
      %1285 = vmatprep.mubr.f32.mxu0 0.0
      %v1286 = vand.u32 %v216, 4294901760
      %1287 = vmatmul.mubr.f32.gmra.mxu0 %v1286
      %v1288 = vpop.f32.mrf.mxu0
      %v1289 = vadd.f32 %v1126, %v1288
      %v1290 = vpop.f32.mrf.mxu0
      %1291 = vmatprep.mubr.f32.mxu0 0.0
      %v1292 = vand.u32 %v219, 4294901760
      %1293 = vmatmul.mubr.f32.gmra.mxu0 %v1292
      %v1294 = vpop.f32.mrf.mxu0
      %v1295 = vadd.f32 %v1132, %v1294
      %v1296 = vpop.f32.mrf.mxu0
      %1297 = vmatprep.mubr.f32.mxu0 0.0
      %v1298 = vand.u32 %v222, 4294901760
      %1299 = vmatmul.mubr.f32.gmra.mxu0 %v1298
      %v1300 = vpop.f32.mrf.mxu0
      %v1301 = vadd.f32 %v1138, %v1300
      %v1302 = vpop.f32.mrf.mxu0
      %1303 = vmatprep.mubr.f32.mxu0 0.0
      %v1304 = vand.u32 %v225, 4294901760
      %1305 = vmatmul.mubr.f32.gmra.mxu0 %v1304
      %v1306 = vpop.f32.mrf.mxu0
      %v1307 = vadd.f32 %v1144, %v1306
      %v1308 = vpop.f32.mrf.mxu0
      %1309 = vmatprep.mubr.f32.mxu0 0.0
      %v1310 = vand.u32 %v228, 4294901760
      %1311 = vmatmul.mubr.f32.gmra.mxu0 %v1310
      %v1312 = vpop.f32.mrf.mxu0
      %v1313 = vadd.f32 %v1150, %v1312
      %v1314 = vpop.f32.mrf.mxu0
      %1315 = vmatprep.mubr.f32.mxu0 0.0
      %v1316 = vand.u32 %v231, 4294901760
      %1317 = vmatmul.mubr.f32.gmra.mxu0 %v1316
      %v1318 = vpop.f32.mrf.mxu0
      %v1319 = vadd.f32 %v1156, %v1318
      %v1320 = vpop.f32.mrf.mxu0
      %1321 = vmatprep.mubr.f32.mxu0 0.0
      %v1322 = vand.u32 %v234, 4294901760
      %1323 = vmatmul.mubr.f32.gmra.mxu0 %v1322
      %v1324 = vpop.f32.mrf.mxu0
      %v1325 = vadd.f32 %v1162, %v1324
      %v1326 = vpop.f32.mrf.mxu0
      %1327 = vmatprep.mubr.f32.mxu0 0.0
      %v1328 = vand.u32 %v237, 4294901760
      %1329 = vmatmul.mubr.f32.gmra.mxu0 %v1328
      %v1330 = vpop.f32.mrf.mxu0
      %v1331 = vadd.f32 %v1168, %v1330
      %v1332 = vpop.f32.mrf.mxu0
      %1333 = vmatprep.mubr.f32.mxu0 0.0
      %v1334 = vand.u32 %v240, 4294901760
      %1335 = vmatmul.mubr.f32.gmra.mxu0 %v1334
      %v1336 = vpop.f32.mrf.mxu0
      %v1337 = vadd.f32 %v1174, %v1336
      %v1338 = vpop.f32.mrf.mxu0
      %1339 = vmatprep.mubr.f32.mxu0 0.0
      %v1340 = vand.u32 %v243, 4294901760
      %1341 = vmatmul.mubr.f32.gmra.mxu0 %v1340
      %v1342 = vpop.f32.mrf.mxu0
      %v1343 = vadd.f32 %v1180, %v1342
      %v1344 = vpop.f32.mrf.mxu0
      %1345 = vmatprep.mubr.f32.mxu0 0.0
      %v1346 = vand.u32 %v246, 4294901760
      %1347 = vmatmul.mubr.f32.gmra.mxu0 %v1346
      %v1348 = vpop.f32.mrf.mxu0
      %v1349 = vadd.f32 %v1186, %v1348
      %v1350 = vpop.f32.mrf.mxu0
      %1351 = vdwg.mxu0
      %vm1352 = vcmask 457728
      %1353 = vst.msk [vmem:[%s172] sm:$0xff] %vm1352, %v1259
      %1354 = vst.msk [vmem:[%s172 + $0x8] sm:$0xff] %vm1352, %v1265
      %1355 = vst.msk [vmem:[%s172 + $0x10] sm:$0xff] %vm1352, %v1271
      %1356 = vst.msk [vmem:[%s172 + $0x18] sm:$0xff] %vm1352, %v1277
      %1357 = vst.msk [vmem:[%s172 + $0x20] sm:$0xff] %vm1352, %v1283
      %1358 = vst.msk [vmem:[%s172 + $0x28] sm:$0xff] %vm1352, %v1289
      %1359 = vst.msk [vmem:[%s172 + $0x30] sm:$0xff] %vm1352, %v1295
      %1360 = vst.msk [vmem:[%s172 + $0x38] sm:$0xff] %vm1352, %v1301
      %1361 = vst.msk [vmem:[%s172 + $0x40] sm:$0xff] %vm1352, %v1307
      %1362 = vst.msk [vmem:[%s172 + $0x48] sm:$0xff] %vm1352, %v1313
      %1363 = vst.msk [vmem:[%s172 + $0x50] sm:$0xff] %vm1352, %v1319
      %1364 = vst.msk [vmem:[%s172 + $0x58] sm:$0xff] %vm1352, %v1325
      %1365 = vst.msk [vmem:[%s172 + $0x60] sm:$0xff] %vm1352, %v1331
      %1366 = vst.msk [vmem:[%s172 + $0x68] sm:$0xff] %vm1352, %v1337
      %1367 = vst.msk [vmem:[%s172 + $0x70] sm:$0xff] %vm1352, %v1343
      %1368 = vst.msk [vmem:[%s172 + $0x78] sm:$0xff] %vm1352, %v1349
      %s1369 = smul.u32 16, %s14
      %p1370 = scmp.lt.s32.totalorder %s1369, 31
      %s1371 = scalar_select %p1370, %s1369, 31
      %s1372 = smul.addr %s1371, 8
      %s1373 = scalar_lea.vmem %s3, %s1372
      // Predicated region
      $region33: #{up_block_batch_pallas.4} parent=31 // pred_check
        %p1374 = pneg %p100
      $region34: #{up_block_batch_pallas.4} parent=31 // pred_check_branch
        %1376 = sbr.rel (%p1374) target = $region36
      $region35: #{up_block_batch_pallas.4} parent=31 // pred_region
        %s1377 = smul.u32 16, %s14
      $region36: #{up_block_batch_pallas.4} parent=31 // pred_fallthru
        _
    $region32: #{up_block_batch_pallas.4} parent=5 // pred_fallthru
      _
    %p1378 = scmp.le.s32.totalorder 2, %s9
    // Predicated region
    $region37: #{up_block_batch_pallas.4} parent=5 // pred_check
      %p1379 = pneg %p1378
    $region38: #{up_block_batch_pallas.4} parent=5 // pred_check_branch
      %1381 = sbr.rel (%p1379) target = $region40
    $region39: #{up_block_batch_pallas.4} parent=5 // pred_region
      %s1382 = ssub.s32 %s9, 2
      // Predicated region
      $region41: #{up_block_batch_pallas.4} parent=39 // pred_check
        %p1383 = pneg %p106
      $region42: #{up_block_batch_pallas.4} parent=39 // pred_check_branch
        %1385 = sbr.rel (%p1383) target = $region44
      $region43: #{up_block_batch_pallas.4} parent=39 // pred_region
        %s1386 = smul.u32 16, %s15
        %p1387 = scmp.lt.s32.totalorder %s1386, 31
        %s1388 = scalar_select %p1387, %s1386, 31
        %s1389 = smul.addr %s1388, 8
        %s1390 = scalar_lea.vmem %s3, %s1389
      $region44: #{up_block_batch_pallas.4} parent=39 // pred_fallthru
        _
    $region40: #{up_block_batch_pallas.4} parent=5 // pred_fallthru
      _
  $region6: #{up_block_batch_pallas.4} parent=0 // loop_footer
    %s13 = sadd.s32 1, %s9
  $region7: #{up_block_batch_pallas.4} parent=0 // loop_footer_branch
    %8 = sbr.rel target = $region3
  $region8: #{up_block_batch_pallas.4} parent=0 // loop_exit
    _

// kernel: tile.23
$region0: #{tile.23}
  #allocation0 [shape = 's32[1]{0}', space=sflag, size = 0x4, scoped, tag = 'scoped memory for tile.23']
  %s0 = inlined_call_operand.vmem [shape: f32[8], index: 0, kind: input, shape index: {}]
  %s1 = inlined_call_operand.vmem [shape: f32[7,8], index: 1, kind: output, shape index: {}]
  // Predicated region
  $region2: #{tile.23} parent=0 // pred_check
    _
  $region3: #{tile.23} parent=0 // pred_check_branch
    %3 = sbr.rel (0) target = $region5
  $region4: #{tile.23} parent=0 // pred_region
    _
  $region5: #{tile.23} parent=0 // pred_fallthru
    _
  %v4 = vld [vmem:[%s0] ss:$0 sm:$0xff]
  %5 = vst [vmem:[%s1] sm:$0xff] %v4

// kernel: tile.28
$region0: #{tile.28}
  %s0 = inlined_call_operand.vmem [shape: f32[7,8], index: 0, kind: input, shape index: {}]
  %s1 = inlined_call_operand.vmem [shape: f32[1,56], index: 1, kind: output, shape index: {}]
  $region1: #{tile.28} parent=0
    #allocation0 [shape = 'u8[4096]{0}', space=vmem, size = 0x1000, scoped, tag = 'scoped mem for output reshape']
    %v2 = vld [vmem:[%s0] sm:$0x1]
    %vm3 = vcmask 64512
    %4 = vst.msk [vmem:[#allocation0] sm:$0x1] %vm3, %v2
    %s5 = scalar_lea.vmem %s0, 6
    %v6 = vld [vmem:[%s5] sm:$0x1]
    %7 = vrot.lane.b32.xlu0 %v6, 48
    %v8 = vpop.permute.xlu0 %7
    %vm9 = vcmask 458112
    %10 = vst.msk [vmem:[#allocation0] sm:$0x1] %vm9, %v8
    %s11 = scalar_lea.vmem %s0, 5
    %v12 = vld [vmem:[%s11] sm:$0x1]
    %13 = vrot.lane.b32.xlu0 %v12, 40
    %v14 = vpop.permute.xlu0 %13
    %vm15 = vcmask 392512
    %16 = vst.msk [vmem:[#allocation0] sm:$0x1] %vm15, %v14
    %s17 = scalar_lea.vmem %s0, 4
    %v18 = vld [vmem:[%s17] sm:$0x1]
    %19 = vrot.lane.b32.xlu0 %v18, 32
    %v20 = vpop.permute.xlu0 %19
    %vm21 = vcmask 326912
    %22 = vst.msk [vmem:[#allocation0] sm:$0x1] %vm21, %v20
    %s23 = scalar_lea.vmem %s0, 3
    %v24 = vld [vmem:[%s23] sm:$0x1]
    %25 = vrot.lane.b32.xlu0 %v24, 24
    %v26 = vpop.permute.xlu0 %25
    %vm27 = vcmask 261312
    %28 = vst.msk [vmem:[#allocation0] sm:$0x1] %vm27, %v26
    %s29 = scalar_lea.vmem %s0, 2
    %v30 = vld [vmem:[%s29] sm:$0x1]
    %31 = vrot.lane.b32.xlu0 %v30, 16
    %v32 = vpop.permute.xlu0 %31
    %vm33 = vcmask 195712
    %34 = vst.msk [vmem:[#allocation0] sm:$0x1] %vm33, %v32
    %s35 = scalar_lea.vmem %s0, 1
    %v36 = vld [vmem:[%s35] sm:$0x1]
    %37 = vrot.lane.b32.xlu0 %v36, 8
    %v38 = vpop.permute.xlu0 %37
    %vm39 = vcmask 130112
    %40 = vst.msk [vmem:[#allocation0] sm:$0x1] %vm39, %v38
    %s42 = sshll.u32 1, 1
    %s43 = ssub.s32 %s42, 1
    %v45 = vld [vmem:[#allocation0] sm:%s43]
    %s46 = sshll.u32 1, 1
    %s47 = ssub.s32 %s46, 1
    %48 = vst [vmem:[%s1] sm:%s47] %v45

// kernel: up_block_batch_pallas.5
$region0: #{up_block_batch_pallas.5}
  #allocation0 [shape = 'u32[]', space=smem, size = 0x4, offset = 0x4, fixed_abs, tag = 'smem constant byte address 0x4 - core index']
  #allocation1 [shape = 'u32[144,128]{1,0:T(1,128)}', space=vmem, size = 0x12000, scoped, tag = 'internal scratch']
  %s0 = inlined_call_operand.vmem [shape: f32[256,112], index: 0, kind: input, shape index: {}]
  %s1 = inlined_call_operand.vmem [shape: f32[112,8], index: 1, kind: input, shape index: {}]
  %s2 = inlined_call_operand.vmem [shape: f32[1,8], index: 2, kind: input, shape index: {}]
  %s3 = inlined_call_operand.vmem [shape: f32[256,8], index: 3, kind: output, shape index: {}]
  %s4 = sld [smem:[#allocation0]]
  $region45: #{up_block_batch_pallas.5} parent=0
    _
  %s6 = ssub.s32 1, %s4
  %s7 = scalar_select 0, %s6, %s4
  loop: start=0, step=1, limit=4
  $region2: #{up_block_batch_pallas.5} parent=0 // loop_pre_header
    _
  $region3: #{up_block_batch_pallas.5} parent=0 // loop_header
    %s9 = sphi 0, %s13
    %p10 = scmp.ge.s32.totalorder %s9, 4
    %s19 = sphi 0, %s21
    %s22 = sphi 0, %s19
    %s23 = sphi 0, %s22
    %s39 = sphi 0, %s23
    %s43 = sphi 0, %s43
    %s45 = sphi 0, %s43
    %s46 = sphi 0, %s45
    %s60 = sphi 0, %s46
    %s64 = sphi 0, %s64
    %s66 = sphi 0, %s64
    %s67 = sphi 0, %s66
    %s81 = sphi 0, %s67
    %s87 = sphi 0, %s89
    %s90 = sphi 0, %s87
    %s91 = sphi 0, %s90
    %s107 = sphi 0, %s91
  $region4: #{up_block_batch_pallas.5} parent=0 // loop_header_branch
    %12 = sbr.rel (%p10) target = $region8
  $region5: #{up_block_batch_pallas.5} parent=0 // loop_body
    %s14 = ssub.s32 %s9, 1
    %s15 = ssub.s32 %s9, 2
    %s16 = sadd.s32 %s9, 1
    %s17 = ssub.s32 %s9, %s16
    %p18 = scmp.eq.s32.totalorder %s17, 0
    %s20 = sadd.s32 %s19, 1
    %s21 = scalar_select %p18, %s19, %s20
    %p24 = pneg %p18
    %p25 = scmp.eq.s32.totalorder %s9, 1
    %p26 = por %p24, %p25
    %p27 = scmp.ne.s32.totalorder %s19, %s22
    %p28 = scmp.eq.s32.totalorder %s9, 0
    %p29 = por %p27, %p28
    %p30 = scmp.ne.s32.totalorder %s19, %s22
    %p31 = scmp.eq.s32.totalorder %s14, 1
    %p32 = por %p30, %p31
    %p33 = scmp.ne.s32.totalorder %s22, %s23
    %p34 = scmp.eq.s32.totalorder %s14, 0
    %p35 = por %p33, %p34
    %p36 = scmp.ne.s32.totalorder %s22, %s23
    %p37 = scmp.eq.s32.totalorder %s15, 1
    %p38 = por %p36, %p37
    %p40 = scmp.ne.s32.totalorder %s23, %s39
    %p41 = scmp.eq.s32.totalorder %s15, 0
    %p42 = por %p40, %p41
    %s44 = sadd.s32 %s43, 1
    %p47 = scmp.eq.s32.totalorder %s9, 1
    %p48 = scmp.ne.s32.totalorder %s43, %s45
    %p49 = scmp.eq.s32.totalorder %s9, 0
    %p50 = por %p48, %p49
    %p51 = scmp.ne.s32.totalorder %s43, %s45
    %p52 = scmp.eq.s32.totalorder %s14, 1
    %p53 = por %p51, %p52
    %p54 = scmp.ne.s32.totalorder %s45, %s46
    %p55 = scmp.eq.s32.totalorder %s14, 0
    %p56 = por %p54, %p55
    %p57 = scmp.ne.s32.totalorder %s45, %s46
    %p58 = scmp.eq.s32.totalorder %s15, 1
    %p59 = por %p57, %p58
    %p61 = scmp.ne.s32.totalorder %s46, %s60
    %p62 = scmp.eq.s32.totalorder %s15, 0
    %p63 = por %p61, %p62
    %s65 = sadd.s32 %s64, 1
    %p68 = scmp.eq.s32.totalorder %s9, 1
    %p69 = scmp.ne.s32.totalorder %s64, %s66
    %p70 = scmp.eq.s32.totalorder %s9, 0
    %p71 = por %p69, %p70
    %p72 = scmp.ne.s32.totalorder %s64, %s66
    %p73 = scmp.eq.s32.totalorder %s14, 1
    %p74 = por %p72, %p73
    %p75 = scmp.ne.s32.totalorder %s66, %s67
    %p76 = scmp.eq.s32.totalorder %s14, 0
    %p77 = por %p75, %p76
    %p78 = scmp.ne.s32.totalorder %s66, %s67
    %p79 = scmp.eq.s32.totalorder %s15, 1
    %p80 = por %p78, %p79
    %p82 = scmp.ne.s32.totalorder %s67, %s81
    %p83 = scmp.eq.s32.totalorder %s15, 0
    %p84 = por %p82, %p83
    %s85 = ssub.s32 %s9, %s16
    %p86 = scmp.eq.s32.totalorder %s85, 0
    %s88 = sadd.s32 %s87, 1
    %s89 = scalar_select %p86, %s87, %s88
    %p92 = pneg %p86
    %p93 = scmp.eq.s32.totalorder %s9, 1
    %p94 = por %p92, %p93
    %p95 = scmp.ne.s32.totalorder %s87, %s90
    %p96 = scmp.eq.s32.totalorder %s9, 0
    %p97 = por %p95, %p96
    %p98 = scmp.ne.s32.totalorder %s87, %s90
    %p99 = scmp.eq.s32.totalorder %s14, 1
    %p100 = por %p98, %p99
    %p101 = scmp.ne.s32.totalorder %s90, %s91
    %p102 = scmp.eq.s32.totalorder %s14, 0
    %p103 = por %p101, %p102
    %p104 = scmp.ne.s32.totalorder %s90, %s91
    %p105 = scmp.eq.s32.totalorder %s15, 1
    %p106 = por %p104, %p105
    %p108 = scmp.ne.s32.totalorder %s91, %s107
    %p109 = scmp.eq.s32.totalorder %s15, 0
    %p110 = por %p108, %p109
    %p111 = scmp.le.s32.totalorder 1, %s9
    %p112 = scmp.lt.s32.totalorder %s9, 3
    %p113 = pnand %p111, %p112
    %p114 = pneg %p113
    // Predicated region
    $region9: #{up_block_batch_pallas.5} parent=5 // pred_check
      _
    $region10: #{up_block_batch_pallas.5} parent=5 // pred_check_branch
      %116 = sbr.rel (%p113) target = $region12
    $region11: #{up_block_batch_pallas.5} parent=5 // pred_region
      %s117 = ssub.s32 %s9, 1
      // Predicated region
      $region13: #{up_block_batch_pallas.5} parent=11 // pred_check
        %p118 = pneg %p56
      $region14: #{up_block_batch_pallas.5} parent=11 // pred_check_branch
        %120 = sbr.rel (%p118) target = $region16
      $region15: #{up_block_batch_pallas.5} parent=11 // pred_region
        _
      $region16: #{up_block_batch_pallas.5} parent=11 // pred_fallthru
        _
      // Predicated region
      $region17: #{up_block_batch_pallas.5} parent=11 // pred_check
        %p121 = pneg %p77
      $region18: #{up_block_batch_pallas.5} parent=11 // pred_check_branch
        %123 = sbr.rel (%p121) target = $region20
      $region19: #{up_block_batch_pallas.5} parent=11 // pred_region
        _
      $region20: #{up_block_batch_pallas.5} parent=11 // pred_fallthru
        _
    $region12: #{up_block_batch_pallas.5} parent=5 // pred_fallthru
      _
    %p124 = scmp.lt.s32.totalorder %s9, 2
    // Predicated region
    $region21: #{up_block_batch_pallas.5} parent=5 // pred_check
      %p125 = pneg %p124
    $region22: #{up_block_batch_pallas.5} parent=5 // pred_check_branch
      %127 = sbr.rel (%p125) target = $region24
    $region23: #{up_block_batch_pallas.5} parent=5 // pred_region
      // Predicated region
      $region25: #{up_block_batch_pallas.5} parent=23 // pred_check
        %p128 = pneg %p29
      $region26: #{up_block_batch_pallas.5} parent=23 // pred_check_branch
        %130 = sbr.rel (%p128) target = $region28
      $region27: #{up_block_batch_pallas.5} parent=23 // pred_region
        %s131 = smul.u32 16, %s9
        %p132 = scmp.lt.s32.totalorder %s131, 31
        %s133 = scalar_select %p132, %s131, 31
        %s134 = smul.addr %s133, 8
        %s135 = scalar_lea.vmem %s0, %s134
        %s136 = smul.u32 16, %s9
      $region28: #{up_block_batch_pallas.5} parent=23 // pred_fallthru
        _
    $region24: #{up_block_batch_pallas.5} parent=5 // pred_fallthru
      _
    %p137 = scmp.le.s32.totalorder 1, %s9
    %p138 = scmp.lt.s32.totalorder %s9, 3
    %p139 = pnand %p137, %p138
    %p140 = pneg %p139
    // Predicated region
    $region29: #{up_block_batch_pallas.5} parent=5 // pred_check
      _
    $region30: #{up_block_batch_pallas.5} parent=5 // pred_check_branch
      %142 = sbr.rel (%p139) target = $region32
    $region31: #{up_block_batch_pallas.5} parent=5 // pred_region
      %s143 = ssub.s32 %s9, 1
      %s144 = smul.u32 16, %s14
      %p145 = scmp.lt.s32.totalorder %s144, 31
      %s146 = scalar_select %p145, %s144, 31
      %s147 = smul.addr %s146, 8
      %s148 = scalar_lea.vmem %s0, %s147
      %p149 = pneg %p35
      %p150 = pneg %p32
      %p151 = pneg %p56
      %p152 = pneg %p53
      %p153 = pneg %p77
      %p154 = pneg %p74
      %p155 = pneg %p103
      %p156 = pneg %p100
      %s157 = smul.u32 16, %s14
      %p158 = scmp.lt.s32.totalorder %s157, 31
      %s159 = scalar_select %p158, %s157, 31
      %s160 = smul.addr %s159, 8
      %s161 = scalar_lea.vmem %s3, %s160
      %s162 = smul.u32 16, %s14
      %p163 = scmp.lt.s32.totalorder %s162, 31
      %s164 = scalar_select %p163, %s162, 31
      %s165 = smul.addr %s164, 8
      %s166 = scalar_lea.vmem %s0, %s165
      %s167 = smul.u32 16, %s14
      %s168 = smul.u32 16, %s14
      %p169 = scmp.lt.s32.totalorder %s168, 31
      %s170 = scalar_select %p169, %s168, 31
      %s171 = smul.addr %s170, 8
      %s172 = scalar_lea.vmem %s3, %s171
      %s173 = smul.u32 16, %s14
      %v174 = vld [vmem:[%s166] sm:$0xff]
      %v175 = vld [vmem:[%s166 + $0x8] sm:$0xff]
      %v176 = vld [vmem:[%s166 + $0x10] sm:$0xff]
      %v177 = vld [vmem:[%s166 + $0x18] sm:$0xff]
      %v178 = vld [vmem:[%s166 + $0x20] sm:$0xff]
      %v179 = vld [vmem:[%s166 + $0x28] sm:$0xff]
      %v180 = vld [vmem:[%s166 + $0x30] sm:$0xff]
      %v181 = vld [vmem:[%s166 + $0x38] sm:$0xff]
      %v182 = vld [vmem:[%s166 + $0x40] sm:$0xff]
      %v183 = vld [vmem:[%s166 + $0x48] sm:$0xff]
      %v184 = vld [vmem:[%s166 + $0x50] sm:$0xff]
      %v185 = vld [vmem:[%s166 + $0x58] sm:$0xff]
      %v186 = vld [vmem:[%s166 + $0x60] sm:$0xff]
      %v187 = vld [vmem:[%s166 + $0x68] sm:$0xff]
      %v188 = vld [vmem:[%s166 + $0x70] sm:$0xff]
      %v189 = vld [vmem:[%s166 + $0x78] sm:$0xff]
      %v190 = vld [vmem:[%s1] sm:$0xff]
      %v191 = vld [vmem:[%s1 + $0x8] sm:$0xff]
      %v192 = vld [vmem:[%s1 + $0x10] sm:$0xff]
      %v193 = vld [vmem:[%s1 + $0x18] sm:$0xff]
      %v194 = vld [vmem:[%s1 + $0x20] sm:$0xff]
      %v195 = vld [vmem:[%s1 + $0x28] sm:$0xff]
      %v196 = vld [vmem:[%s1 + $0x30] sm:$0xff]
      %v197 = vld [vmem:[%s1 + $0x38] sm:$0xff]
      %v198 = vld [vmem:[%s1 + $0x40] sm:$0xff]
      %v199 = vld [vmem:[%s1 + $0x48] sm:$0xff]
      %v200 = vld [vmem:[%s1 + $0x50] sm:$0xff]
      %v201 = vld [vmem:[%s1 + $0x58] sm:$0xff]
      %v202 = vld [vmem:[%s1 + $0x60] sm:$0xff]
      %v203 = vld [vmem:[%s1 + $0x68] sm:$0xff]
      %v204 = vld [vmem:[%s2] sm:$0x1]
      %v206 = vlaneseq
      %v207 = vshrl.u32 %v206, 7
      %v208 = vsub.s32 0, %v207
      %v209 = vrot.slane %v204, %v208
      %vm211 = vcmask 916480
      %v213 = vsel %vm211, %v174, 0
      %v216 = vsel %vm211, %v175, 0
      %v219 = vsel %vm211, %v176, 0
      %v222 = vsel %vm211, %v177, 0
      %v225 = vsel %vm211, %v178, 0
      %v228 = vsel %vm211, %v179, 0
      %v231 = vsel %vm211, %v180, 0
      %v234 = vsel %vm211, %v181, 0
      %v237 = vsel %vm211, %v182, 0
      %v240 = vsel %vm211, %v183, 0
      %v243 = vsel %vm211, %v184, 0
      %v246 = vsel %vm211, %v185, 0
      %v249 = vsel %vm211, %v186, 0
      %v252 = vsel %vm211, %v187, 0
      %v255 = vsel %vm211, %v188, 0
      %v258 = vsel %vm211, %v189, 0
      %260 = vmatprep.subr.mxu0 0.0
      %261 = vmatpush1.msra.mxu0 0.0
      %262 = vmatprep.subr.mxu0 0.0
      %263 = vmatpush1.msra.mxu0 0.0
      %264 = vmatprep.subr.mxu0 0.0
      %v265 = vand.u32 %v203, 4294901760
      %266 = vmatpush1.msra.mxu0 %v265
      %267 = vmatprep.subr.mxu0 0.0
      %v268 = vand.u32 %v202, 4294901760
      %269 = vmatpush1.msra.mxu0 %v268
      %270 = vmatprep.subr.mxu0 0.0
      %v271 = vand.u32 %v201, 4294901760
      %272 = vmatpush1.msra.mxu0 %v271
      %273 = vmatprep.subr.mxu0 0.0
      %v274 = vand.u32 %v200, 4294901760
      %275 = vmatpush1.msra.mxu0 %v274
      %276 = vmatprep.subr.mxu0 0.0
      %v277 = vand.u32 %v199, 4294901760
      %278 = vmatpush1.msra.mxu0 %v277
      %279 = vmatprep.subr.mxu0 0.0
      %v280 = vand.u32 %v198, 4294901760
      %281 = vmatpush1.msra.mxu0 %v280
      %282 = vmatprep.subr.mxu0 0.0
      %v283 = vand.u32 %v197, 4294901760
      %284 = vmatpush1.msra.mxu0 %v283
      %285 = vmatprep.subr.mxu0 0.0
      %v286 = vand.u32 %v196, 4294901760
      %287 = vmatpush1.msra.mxu0 %v286
      %288 = vmatprep.subr.mxu0 0.0
      %v289 = vand.u32 %v195, 4294901760
      %290 = vmatpush1.msra.mxu0 %v289
      %291 = vmatprep.subr.mxu0 0.0
      %v292 = vand.u32 %v194, 4294901760
      %293 = vmatpush1.msra.mxu0 %v292
      %294 = vmatprep.subr.mxu0 0.0
      %v295 = vand.u32 %v193, 4294901760
      %296 = vmatpush1.msra.mxu0 %v295
      %297 = vmatprep.subr.mxu0 0.0
      %v298 = vand.u32 %v192, 4294901760
      %299 = vmatpush1.msra.mxu0 %v298
      %300 = vmatprep.subr.mxu0 0.0
      %v301 = vand.u32 %v191, 4294901760
      %302 = vmatpush1.msra.mxu0 %v301
      %303 = vmatprep.subr.mxu0 0.0
      %v304 = vand.u32 %v190, 4294901760
      %305 = vmatpush1.msra.mxu0 %v304
      %306 = vmatprep.subr.mxu0 0.0
      %307 = vmatpush2.msra.mxu0 0.0
      %308 = vmatprep.subr.mxu0 0.0
      %309 = vmatpush2.msra.mxu0 0.0
      %310 = vmatprep.subr.mxu0 0.0
      %311 = vmatpush2.msra.mxu0 0.0
      %312 = vmatprep.subr.mxu0 0.0
      %313 = vmatpush2.msra.mxu0 0.0
      %314 = vmatprep.subr.mxu0 0.0
      %315 = vmatpush2.msra.mxu0 0.0
      %316 = vmatprep.subr.mxu0 0.0
      %317 = vmatpush2.msra.mxu0 0.0
      %318 = vmatprep.subr.mxu0 0.0
      %319 = vmatpush2.msra.mxu0 0.0
      %320 = vmatprep.subr.mxu0 0.0
      %321 = vmatpush2.msra.mxu0 0.0
      %322 = vmatprep.subr.mxu0 0.0
      %323 = vmatpush2.msra.mxu0 0.0
      %324 = vmatprep.subr.mxu0 0.0
      %325 = vmatpush2.msra.mxu0 0.0
      %326 = vmatprep.subr.mxu0 0.0
      %327 = vmatpush2.msra.mxu0 0.0
      %328 = vmatprep.subr.mxu0 0.0
      %329 = vmatpush2.msra.mxu0 0.0
      %330 = vmatprep.subr.mxu0 0.0
      %331 = vmatpush2.msra.mxu0 0.0
      %332 = vmatprep.subr.mxu0 0.0
      %333 = vmatpush2.msra.mxu0 0.0
      %334 = vmatprep.subr.mxu0 0.0
      %335 = vmatpush2.msra.mxu0 0.0
      %336 = vmatprep.subr.mxu0 0.0
      %337 = vmatpush2.msra.mxu0 0.0
      %338 = vmatprep.mubr.f32.mxu0 0.0
      %v339 = vand.u32 %v213, 4294901760
      %v340 = vsub.f32 %v213, %v339
      %v341 = vand.u32 %v340, 4294901760
      %v342 = vsub.f32 %v340, %v341
      %v343 = vand.u32 %v342, 4294901760
      %344 = vmatmul.mubr.f32.gmra.mxu0 %v343
      %v345 = vpop.f32.mrf.mxu0
      %v346 = vadd.f32 %v209, %v345
      %v347 = vpop.f32.mrf.mxu0
      %348 = vmatprep.mubr.f32.mxu0 0.0
      %v349 = vand.u32 %v216, 4294901760
      %v350 = vsub.f32 %v216, %v349
      %v351 = vand.u32 %v350, 4294901760
      %v352 = vsub.f32 %v350, %v351
      %v353 = vand.u32 %v352, 4294901760
      %354 = vmatmul.mubr.f32.gmra.mxu0 %v353
      %v355 = vpop.f32.mrf.mxu0
      %v356 = vadd.f32 %v209, %v355
      %v357 = vpop.f32.mrf.mxu0
      %358 = vmatprep.mubr.f32.mxu0 0.0
      %v359 = vand.u32 %v219, 4294901760
      %v360 = vsub.f32 %v219, %v359
      %v361 = vand.u32 %v360, 4294901760
      %v362 = vsub.f32 %v360, %v361
      %v363 = vand.u32 %v362, 4294901760
      %364 = vmatmul.mubr.f32.gmra.mxu0 %v363
      %v365 = vpop.f32.mrf.mxu0
      %v366 = vadd.f32 %v209, %v365
      %v367 = vpop.f32.mrf.mxu0
      %368 = vmatprep.mubr.f32.mxu0 0.0
      %v369 = vand.u32 %v222, 4294901760
      %v370 = vsub.f32 %v222, %v369
      %v371 = vand.u32 %v370, 4294901760
      %v372 = vsub.f32 %v370, %v371
      %v373 = vand.u32 %v372, 4294901760
      %374 = vmatmul.mubr.f32.gmra.mxu0 %v373
      %v375 = vpop.f32.mrf.mxu0
      %v376 = vadd.f32 %v209, %v375
      %v377 = vpop.f32.mrf.mxu0
      %378 = vmatprep.mubr.f32.mxu0 0.0
      %v379 = vand.u32 %v225, 4294901760
      %v380 = vsub.f32 %v225, %v379
      %v381 = vand.u32 %v380, 4294901760
      %v382 = vsub.f32 %v380, %v381
      %v383 = vand.u32 %v382, 4294901760
      %384 = vmatmul.mubr.f32.gmra.mxu0 %v383
      %v385 = vpop.f32.mrf.mxu0
      %v386 = vadd.f32 %v209, %v385
      %v387 = vpop.f32.mrf.mxu0
      %388 = vmatprep.mubr.f32.mxu0 0.0
      %v389 = vand.u32 %v228, 4294901760
      %v390 = vsub.f32 %v228, %v389
      %v391 = vand.u32 %v390, 4294901760
      %v392 = vsub.f32 %v390, %v391
      %v393 = vand.u32 %v392, 4294901760
      %394 = vmatmul.mubr.f32.gmra.mxu0 %v393
      %v395 = vpop.f32.mrf.mxu0
      %v396 = vadd.f32 %v209, %v395
      %v397 = vpop.f32.mrf.mxu0
      %398 = vmatprep.mubr.f32.mxu0 0.0
      %v399 = vand.u32 %v231, 4294901760
      %v400 = vsub.f32 %v231, %v399
      %v401 = vand.u32 %v400, 4294901760
      %v402 = vsub.f32 %v400, %v401
      %v403 = vand.u32 %v402, 4294901760
      %404 = vmatmul.mubr.f32.gmra.mxu0 %v403
      %v405 = vpop.f32.mrf.mxu0
      %v406 = vadd.f32 %v209, %v405
      %v407 = vpop.f32.mrf.mxu0
      %408 = vmatprep.mubr.f32.mxu0 0.0
      %v409 = vand.u32 %v234, 4294901760
      %v410 = vsub.f32 %v234, %v409
      %v411 = vand.u32 %v410, 4294901760
      %v412 = vsub.f32 %v410, %v411
      %v413 = vand.u32 %v412, 4294901760
      %414 = vmatmul.mubr.f32.gmra.mxu0 %v413
      %v415 = vpop.f32.mrf.mxu0
      %v416 = vadd.f32 %v209, %v415
      %v417 = vpop.f32.mrf.mxu0
      %418 = vmatprep.mubr.f32.mxu0 0.0
      %v419 = vand.u32 %v237, 4294901760
      %v420 = vsub.f32 %v237, %v419
      %v421 = vand.u32 %v420, 4294901760
      %v422 = vsub.f32 %v420, %v421
      %v423 = vand.u32 %v422, 4294901760
      %424 = vmatmul.mubr.f32.gmra.mxu0 %v423
      %v425 = vpop.f32.mrf.mxu0
      %v426 = vadd.f32 %v209, %v425
      %v427 = vpop.f32.mrf.mxu0
      %428 = vmatprep.mubr.f32.mxu0 0.0
      %v429 = vand.u32 %v240, 4294901760
      %v430 = vsub.f32 %v240, %v429
      %v431 = vand.u32 %v430, 4294901760
      %v432 = vsub.f32 %v430, %v431
      %v433 = vand.u32 %v432, 4294901760
      %434 = vmatmul.mubr.f32.gmra.mxu0 %v433
      %v435 = vpop.f32.mrf.mxu0
      %v436 = vadd.f32 %v209, %v435
      %v437 = vpop.f32.mrf.mxu0
      %438 = vmatprep.mubr.f32.mxu0 0.0
      %v439 = vand.u32 %v243, 4294901760
      %v440 = vsub.f32 %v243, %v439
      %v441 = vand.u32 %v440, 4294901760
      %v442 = vsub.f32 %v440, %v441
      %v443 = vand.u32 %v442, 4294901760
      %444 = vmatmul.mubr.f32.gmra.mxu0 %v443
      %v445 = vpop.f32.mrf.mxu0
      %v446 = vadd.f32 %v209, %v445
      %v447 = vpop.f32.mrf.mxu0
      %448 = vmatprep.mubr.f32.mxu0 0.0
      %v449 = vand.u32 %v246, 4294901760
      %v450 = vsub.f32 %v246, %v449
      %v451 = vand.u32 %v450, 4294901760
      %v452 = vsub.f32 %v450, %v451
      %v453 = vand.u32 %v452, 4294901760
      %454 = vmatmul.mubr.f32.gmra.mxu0 %v453
      %v455 = vpop.f32.mrf.mxu0
      %v456 = vadd.f32 %v209, %v455
      %v457 = vpop.f32.mrf.mxu0
      %458 = vmatprep.mubr.f32.mxu0 0.0
      %v459 = vand.u32 %v249, 4294901760
      %v460 = vsub.f32 %v249, %v459
      %v461 = vand.u32 %v460, 4294901760
      %v462 = vsub.f32 %v460, %v461
      %v463 = vand.u32 %v462, 4294901760
      %464 = vmatmul.mubr.f32.gmra.mxu0 %v463
      %v465 = vpop.f32.mrf.mxu0
      %v466 = vadd.f32 %v209, %v465
      %v467 = vpop.f32.mrf.mxu0
      %468 = vmatprep.mubr.f32.mxu0 0.0
      %v469 = vand.u32 %v252, 4294901760
      %v470 = vsub.f32 %v252, %v469
      %v471 = vand.u32 %v470, 4294901760
      %v472 = vsub.f32 %v470, %v471
      %v473 = vand.u32 %v472, 4294901760
      %474 = vmatmul.mubr.f32.gmra.mxu0 %v473
      %v475 = vpop.f32.mrf.mxu0
      %v476 = vadd.f32 %v209, %v475
      %v477 = vpop.f32.mrf.mxu0
      %478 = vmatprep.mubr.f32.mxu0 0.0
      %v479 = vand.u32 %v255, 4294901760
      %v480 = vsub.f32 %v255, %v479
      %v481 = vand.u32 %v480, 4294901760
      %v482 = vsub.f32 %v480, %v481
      %v483 = vand.u32 %v482, 4294901760
      %484 = vmatmul.mubr.f32.gmra.mxu0 %v483
      %v485 = vpop.f32.mrf.mxu0
      %v486 = vadd.f32 %v209, %v485
      %v487 = vpop.f32.mrf.mxu0
      %488 = vmatprep.mubr.f32.mxu0 0.0
      %v489 = vand.u32 %v258, 4294901760
      %v490 = vsub.f32 %v258, %v489
      %v491 = vand.u32 %v490, 4294901760
      %v492 = vsub.f32 %v490, %v491
      %v493 = vand.u32 %v492, 4294901760
      %494 = vmatmul.mubr.f32.gmra.mxu0 %v493
      %v495 = vpop.f32.mrf.mxu0
      %v496 = vadd.f32 %v209, %v495
      %v497 = vpop.f32.mrf.mxu0
      %498 = vdwg.mxu0
      %499 = vmatprep.subr.mxu0 0.0
      %500 = vmatpush1.msra.mxu0 0.0
      %501 = vmatprep.subr.mxu0 0.0
      %502 = vmatpush1.msra.mxu0 0.0
      %503 = vmatprep.subr.mxu0 0.0
      %v504 = vand.u32 %v203, 4294901760
      %v505 = vsub.f32 %v203, %v504
      %v506 = vand.u32 %v505, 4294901760
      %v507 = vsub.f32 %v505, %v506
      %v508 = vand.u32 %v507, 4294901760
      %509 = vmatpush1.msra.mxu0 %v508
      %510 = vmatprep.subr.mxu0 0.0
      %v511 = vand.u32 %v202, 4294901760
      %v512 = vsub.f32 %v202, %v511
      %v513 = vand.u32 %v512, 4294901760
      %v514 = vsub.f32 %v512, %v513
      %v515 = vand.u32 %v514, 4294901760
      %516 = vmatpush1.msra.mxu0 %v515
      %517 = vmatprep.subr.mxu0 0.0
      %v518 = vand.u32 %v201, 4294901760
      %v519 = vsub.f32 %v201, %v518
      %v520 = vand.u32 %v519, 4294901760
      %v521 = vsub.f32 %v519, %v520
      %v522 = vand.u32 %v521, 4294901760
      %523 = vmatpush1.msra.mxu0 %v522
      %524 = vmatprep.subr.mxu0 0.0
      %v525 = vand.u32 %v200, 4294901760
      %v526 = vsub.f32 %v200, %v525
      %v527 = vand.u32 %v526, 4294901760
      %v528 = vsub.f32 %v526, %v527
      %v529 = vand.u32 %v528, 4294901760
      %530 = vmatpush1.msra.mxu0 %v529
      %531 = vmatprep.subr.mxu0 0.0
      %v532 = vand.u32 %v199, 4294901760
      %v533 = vsub.f32 %v199, %v532
      %v534 = vand.u32 %v533, 4294901760
      %v535 = vsub.f32 %v533, %v534
      %v536 = vand.u32 %v535, 4294901760
      %537 = vmatpush1.msra.mxu0 %v536
      %538 = vmatprep.subr.mxu0 0.0
      %v539 = vand.u32 %v198, 4294901760
      %v540 = vsub.f32 %v198, %v539
      %v541 = vand.u32 %v540, 4294901760
      %v542 = vsub.f32 %v540, %v541
      %v543 = vand.u32 %v542, 4294901760
      %544 = vmatpush1.msra.mxu0 %v543
      %545 = vmatprep.subr.mxu0 0.0
      %v546 = vand.u32 %v197, 4294901760
      %v547 = vsub.f32 %v197, %v546
      %v548 = vand.u32 %v547, 4294901760
      %v549 = vsub.f32 %v547, %v548
      %v550 = vand.u32 %v549, 4294901760
      %551 = vmatpush1.msra.mxu0 %v550
      %552 = vmatprep.subr.mxu0 0.0
      %v553 = vand.u32 %v196, 4294901760
      %v554 = vsub.f32 %v196, %v553
      %v555 = vand.u32 %v554, 4294901760
      %v556 = vsub.f32 %v554, %v555
      %v557 = vand.u32 %v556, 4294901760
      %558 = vmatpush1.msra.mxu0 %v557
      %559 = vmatprep.subr.mxu0 0.0
      %v560 = vand.u32 %v195, 4294901760
      %v561 = vsub.f32 %v195, %v560
      %v562 = vand.u32 %v561, 4294901760
      %v563 = vsub.f32 %v561, %v562
      %v564 = vand.u32 %v563, 4294901760
      %565 = vmatpush1.msra.mxu0 %v564
      %566 = vmatprep.subr.mxu0 0.0
      %v567 = vand.u32 %v194, 4294901760
      %v568 = vsub.f32 %v194, %v567
      %v569 = vand.u32 %v568, 4294901760
      %v570 = vsub.f32 %v568, %v569
      %v571 = vand.u32 %v570, 4294901760
      %572 = vmatpush1.msra.mxu0 %v571
      %573 = vmatprep.subr.mxu0 0.0
      %v574 = vand.u32 %v193, 4294901760
      %v575 = vsub.f32 %v193, %v574
      %v576 = vand.u32 %v575, 4294901760
      %v577 = vsub.f32 %v575, %v576
      %v578 = vand.u32 %v577, 4294901760
      %579 = vmatpush1.msra.mxu0 %v578
      %580 = vmatprep.subr.mxu0 0.0
      %v581 = vand.u32 %v192, 4294901760
      %v582 = vsub.f32 %v192, %v581
      %v583 = vand.u32 %v582, 4294901760
      %v584 = vsub.f32 %v582, %v583
      %v585 = vand.u32 %v584, 4294901760
      %586 = vmatpush1.msra.mxu0 %v585
      %587 = vmatprep.subr.mxu0 0.0
      %v588 = vand.u32 %v191, 4294901760
      %v589 = vsub.f32 %v191, %v588
      %v590 = vand.u32 %v589, 4294901760
      %v591 = vsub.f32 %v589, %v590
      %v592 = vand.u32 %v591, 4294901760
      %593 = vmatpush1.msra.mxu0 %v592
      %594 = vmatprep.subr.mxu0 0.0
      %v595 = vand.u32 %v190, 4294901760
      %v596 = vsub.f32 %v190, %v595
      %v597 = vand.u32 %v596, 4294901760
      %v598 = vsub.f32 %v596, %v597
      %v599 = vand.u32 %v598, 4294901760
      %600 = vmatpush1.msra.mxu0 %v599
      %601 = vmatprep.subr.mxu0 0.0
      %602 = vmatpush2.msra.mxu0 0.0
      %603 = vmatprep.subr.mxu0 0.0
      %604 = vmatpush2.msra.mxu0 0.0
      %605 = vmatprep.subr.mxu0 0.0
      %606 = vmatpush2.msra.mxu0 0.0
      %607 = vmatprep.subr.mxu0 0.0
      %608 = vmatpush2.msra.mxu0 0.0
      %609 = vmatprep.subr.mxu0 0.0
      %610 = vmatpush2.msra.mxu0 0.0
      %611 = vmatprep.subr.mxu0 0.0
      %612 = vmatpush2.msra.mxu0 0.0
      %613 = vmatprep.subr.mxu0 0.0
      %614 = vmatpush2.msra.mxu0 0.0
      %615 = vmatprep.subr.mxu0 0.0
      %616 = vmatpush2.msra.mxu0 0.0
      %617 = vmatprep.subr.mxu0 0.0
      %618 = vmatpush2.msra.mxu0 0.0
      %619 = vmatprep.subr.mxu0 0.0
      %620 = vmatpush2.msra.mxu0 0.0
      %621 = vmatprep.subr.mxu0 0.0
      %622 = vmatpush2.msra.mxu0 0.0
      %623 = vmatprep.subr.mxu0 0.0
      %624 = vmatpush2.msra.mxu0 0.0
      %625 = vmatprep.subr.mxu0 0.0
      %626 = vmatpush2.msra.mxu0 0.0
      %627 = vmatprep.subr.mxu0 0.0
      %628 = vmatpush2.msra.mxu0 0.0
      %629 = vmatprep.subr.mxu0 0.0
      %630 = vmatpush2.msra.mxu0 0.0
      %631 = vmatprep.subr.mxu0 0.0
      %632 = vmatpush2.msra.mxu0 0.0
      %633 = vmatprep.mubr.f32.mxu0 0.0
      %v634 = vand.u32 %v213, 4294901760
      %635 = vmatmul.mubr.f32.gmra.mxu0 %v634
      %v636 = vpop.f32.mrf.mxu0
      %v637 = vadd.f32 %v346, %v636
      %v638 = vpop.f32.mrf.mxu0
      %639 = vmatprep.mubr.f32.mxu0 0.0
      %v640 = vand.u32 %v216, 4294901760
      %641 = vmatmul.mubr.f32.gmra.mxu0 %v640
      %v642 = vpop.f32.mrf.mxu0
      %v643 = vadd.f32 %v356, %v642
      %v644 = vpop.f32.mrf.mxu0
      %645 = vmatprep.mubr.f32.mxu0 0.0
      %v646 = vand.u32 %v219, 4294901760
      %647 = vmatmul.mubr.f32.gmra.mxu0 %v646
      %v648 = vpop.f32.mrf.mxu0
      %v649 = vadd.f32 %v366, %v648
      %v650 = vpop.f32.mrf.mxu0
      %651 = vmatprep.mubr.f32.mxu0 0.0
      %v652 = vand.u32 %v222, 4294901760
      %653 = vmatmul.mubr.f32.gmra.mxu0 %v652
      %v654 = vpop.f32.mrf.mxu0
      %v655 = vadd.f32 %v376, %v654
      %v656 = vpop.f32.mrf.mxu0
      %657 = vmatprep.mubr.f32.mxu0 0.0
      %v658 = vand.u32 %v225, 4294901760
      %659 = vmatmul.mubr.f32.gmra.mxu0 %v658
      %v660 = vpop.f32.mrf.mxu0
      %v661 = vadd.f32 %v386, %v660
      %v662 = vpop.f32.mrf.mxu0
      %663 = vmatprep.mubr.f32.mxu0 0.0
      %v664 = vand.u32 %v228, 4294901760
      %665 = vmatmul.mubr.f32.gmra.mxu0 %v664
      %v666 = vpop.f32.mrf.mxu0
      %v667 = vadd.f32 %v396, %v666
      %v668 = vpop.f32.mrf.mxu0
      %669 = vmatprep.mubr.f32.mxu0 0.0
      %v670 = vand.u32 %v231, 4294901760
      %671 = vmatmul.mubr.f32.gmra.mxu0 %v670
      %v672 = vpop.f32.mrf.mxu0
      %v673 = vadd.f32 %v406, %v672
      %v674 = vpop.f32.mrf.mxu0
      %675 = vmatprep.mubr.f32.mxu0 0.0
      %v676 = vand.u32 %v234, 4294901760
      %677 = vmatmul.mubr.f32.gmra.mxu0 %v676
      %v678 = vpop.f32.mrf.mxu0
      %v679 = vadd.f32 %v416, %v678
      %v680 = vpop.f32.mrf.mxu0
      %681 = vmatprep.mubr.f32.mxu0 0.0
      %v682 = vand.u32 %v237, 4294901760
      %683 = vmatmul.mubr.f32.gmra.mxu0 %v682
      %v684 = vpop.f32.mrf.mxu0
      %v685 = vadd.f32 %v426, %v684
      %v686 = vpop.f32.mrf.mxu0
      %687 = vmatprep.mubr.f32.mxu0 0.0
      %v688 = vand.u32 %v240, 4294901760
      %689 = vmatmul.mubr.f32.gmra.mxu0 %v688
      %v690 = vpop.f32.mrf.mxu0
      %v691 = vadd.f32 %v436, %v690
      %v692 = vpop.f32.mrf.mxu0
      %693 = vmatprep.mubr.f32.mxu0 0.0
      %v694 = vand.u32 %v243, 4294901760
      %695 = vmatmul.mubr.f32.gmra.mxu0 %v694
      %v696 = vpop.f32.mrf.mxu0
      %v697 = vadd.f32 %v446, %v696
      %v698 = vpop.f32.mrf.mxu0
      %699 = vmatprep.mubr.f32.mxu0 0.0
      %v700 = vand.u32 %v246, 4294901760
      %701 = vmatmul.mubr.f32.gmra.mxu0 %v700
      %v702 = vpop.f32.mrf.mxu0
      %v703 = vadd.f32 %v456, %v702
      %v704 = vpop.f32.mrf.mxu0
      %705 = vmatprep.mubr.f32.mxu0 0.0
      %v706 = vand.u32 %v249, 4294901760
      %707 = vmatmul.mubr.f32.gmra.mxu0 %v706
      %v708 = vpop.f32.mrf.mxu0
      %v709 = vadd.f32 %v466, %v708
      %v710 = vpop.f32.mrf.mxu0
      %711 = vmatprep.mubr.f32.mxu0 0.0
      %v712 = vand.u32 %v252, 4294901760
      %713 = vmatmul.mubr.f32.gmra.mxu0 %v712
      %v714 = vpop.f32.mrf.mxu0
      %v715 = vadd.f32 %v476, %v714
      %v716 = vpop.f32.mrf.mxu0
      %717 = vmatprep.mubr.f32.mxu0 0.0
      %v718 = vand.u32 %v255, 4294901760
      %719 = vmatmul.mubr.f32.gmra.mxu0 %v718
      %v720 = vpop.f32.mrf.mxu0
      %v721 = vadd.f32 %v486, %v720
      %v722 = vpop.f32.mrf.mxu0
      %723 = vmatprep.mubr.f32.mxu0 0.0
      %v724 = vand.u32 %v258, 4294901760
      %725 = vmatmul.mubr.f32.gmra.mxu0 %v724
      %v726 = vpop.f32.mrf.mxu0
      %v727 = vadd.f32 %v496, %v726
      %v728 = vpop.f32.mrf.mxu0
      %729 = vdwg.mxu0
      %730 = vmatprep.subr.mxu0 0.0
      %731 = vmatpush1.msra.mxu0 0.0
      %732 = vmatprep.subr.mxu0 0.0
      %733 = vmatpush1.msra.mxu0 0.0
      %734 = vmatprep.subr.mxu0 0.0
      %v735 = vand.u32 %v203, 4294901760
      %v736 = vsub.f32 %v203, %v735
      %737 = vmatpush1.msra.mxu0 %v736
      %738 = vmatprep.subr.mxu0 0.0
      %v739 = vand.u32 %v202, 4294901760
      %v740 = vsub.f32 %v202, %v739
      %741 = vmatpush1.msra.mxu0 %v740
      %742 = vmatprep.subr.mxu0 0.0
      %v743 = vand.u32 %v201, 4294901760
      %v744 = vsub.f32 %v201, %v743
      %745 = vmatpush1.msra.mxu0 %v744
      %746 = vmatprep.subr.mxu0 0.0
      %v747 = vand.u32 %v200, 4294901760
      %v748 = vsub.f32 %v200, %v747
      %749 = vmatpush1.msra.mxu0 %v748
      %750 = vmatprep.subr.mxu0 0.0
      %v751 = vand.u32 %v199, 4294901760
      %v752 = vsub.f32 %v199, %v751
      %753 = vmatpush1.msra.mxu0 %v752
      %754 = vmatprep.subr.mxu0 0.0
      %v755 = vand.u32 %v198, 4294901760
      %v756 = vsub.f32 %v198, %v755
      %757 = vmatpush1.msra.mxu0 %v756
      %758 = vmatprep.subr.mxu0 0.0
      %v759 = vand.u32 %v197, 4294901760
      %v760 = vsub.f32 %v197, %v759
      %761 = vmatpush1.msra.mxu0 %v760
      %762 = vmatprep.subr.mxu0 0.0
      %v763 = vand.u32 %v196, 4294901760
      %v764 = vsub.f32 %v196, %v763
      %765 = vmatpush1.msra.mxu0 %v764
      %766 = vmatprep.subr.mxu0 0.0
      %v767 = vand.u32 %v195, 4294901760
      %v768 = vsub.f32 %v195, %v767
      %769 = vmatpush1.msra.mxu0 %v768
      %770 = vmatprep.subr.mxu0 0.0
      %v771 = vand.u32 %v194, 4294901760
      %v772 = vsub.f32 %v194, %v771
      %773 = vmatpush1.msra.mxu0 %v772
      %774 = vmatprep.subr.mxu0 0.0
      %v775 = vand.u32 %v193, 4294901760
      %v776 = vsub.f32 %v193, %v775
      %777 = vmatpush1.msra.mxu0 %v776
      %778 = vmatprep.subr.mxu0 0.0
      %v779 = vand.u32 %v192, 4294901760
      %v780 = vsub.f32 %v192, %v779
      %781 = vmatpush1.msra.mxu0 %v780
      %782 = vmatprep.subr.mxu0 0.0
      %v783 = vand.u32 %v191, 4294901760
      %v784 = vsub.f32 %v191, %v783
      %785 = vmatpush1.msra.mxu0 %v784
      %786 = vmatprep.subr.mxu0 0.0
      %v787 = vand.u32 %v190, 4294901760
      %v788 = vsub.f32 %v190, %v787
      %789 = vmatpush1.msra.mxu0 %v788
      %790 = vmatprep.subr.mxu0 0.0
      %791 = vmatpush2.msra.mxu0 0.0
      %792 = vmatprep.subr.mxu0 0.0
      %793 = vmatpush2.msra.mxu0 0.0
      %794 = vmatprep.subr.mxu0 0.0
      %795 = vmatpush2.msra.mxu0 0.0
      %796 = vmatprep.subr.mxu0 0.0
      %797 = vmatpush2.msra.mxu0 0.0
      %798 = vmatprep.subr.mxu0 0.0
      %799 = vmatpush2.msra.mxu0 0.0
      %800 = vmatprep.subr.mxu0 0.0
      %801 = vmatpush2.msra.mxu0 0.0
      %802 = vmatprep.subr.mxu0 0.0
      %803 = vmatpush2.msra.mxu0 0.0
      %804 = vmatprep.subr.mxu0 0.0
      %805 = vmatpush2.msra.mxu0 0.0
      %806 = vmatprep.subr.mxu0 0.0
      %807 = vmatpush2.msra.mxu0 0.0
      %808 = vmatprep.subr.mxu0 0.0
      %809 = vmatpush2.msra.mxu0 0.0
      %810 = vmatprep.subr.mxu0 0.0
      %811 = vmatpush2.msra.mxu0 0.0
      %812 = vmatprep.subr.mxu0 0.0
      %813 = vmatpush2.msra.mxu0 0.0
      %814 = vmatprep.subr.mxu0 0.0
      %815 = vmatpush2.msra.mxu0 0.0
      %816 = vmatprep.subr.mxu0 0.0
      %817 = vmatpush2.msra.mxu0 0.0
      %818 = vmatprep.subr.mxu0 0.0
      %819 = vmatpush2.msra.mxu0 0.0
      %820 = vmatprep.subr.mxu0 0.0
      %821 = vmatpush2.msra.mxu0 0.0
      %822 = vmatprep.mubr.f32.mxu0 0.0
      %v823 = vand.u32 %v213, 4294901760
      %v824 = vsub.f32 %v213, %v823
      %825 = vmatmul.mubr.f32.gmra.mxu0 %v824
      %v826 = vpop.f32.mrf.mxu0
      %v827 = vadd.f32 %v637, %v826
      %v828 = vpop.f32.mrf.mxu0
      %829 = vmatprep.mubr.f32.mxu0 0.0
      %v830 = vand.u32 %v216, 4294901760
      %v831 = vsub.f32 %v216, %v830
      %832 = vmatmul.mubr.f32.gmra.mxu0 %v831
      %v833 = vpop.f32.mrf.mxu0
      %v834 = vadd.f32 %v643, %v833
      %v835 = vpop.f32.mrf.mxu0
      %836 = vmatprep.mubr.f32.mxu0 0.0
      %v837 = vand.u32 %v219, 4294901760
      %v838 = vsub.f32 %v219, %v837
      %839 = vmatmul.mubr.f32.gmra.mxu0 %v838
      %v840 = vpop.f32.mrf.mxu0
      %v841 = vadd.f32 %v649, %v840
      %v842 = vpop.f32.mrf.mxu0
      %843 = vmatprep.mubr.f32.mxu0 0.0
      %v844 = vand.u32 %v222, 4294901760
      %v845 = vsub.f32 %v222, %v844
      %846 = vmatmul.mubr.f32.gmra.mxu0 %v845
      %v847 = vpop.f32.mrf.mxu0
      %v848 = vadd.f32 %v655, %v847
      %v849 = vpop.f32.mrf.mxu0
      %850 = vmatprep.mubr.f32.mxu0 0.0
      %v851 = vand.u32 %v225, 4294901760
      %v852 = vsub.f32 %v225, %v851
      %853 = vmatmul.mubr.f32.gmra.mxu0 %v852
      %v854 = vpop.f32.mrf.mxu0
      %v855 = vadd.f32 %v661, %v854
      %v856 = vpop.f32.mrf.mxu0
      %857 = vmatprep.mubr.f32.mxu0 0.0
      %v858 = vand.u32 %v228, 4294901760
      %v859 = vsub.f32 %v228, %v858
      %860 = vmatmul.mubr.f32.gmra.mxu0 %v859
      %v861 = vpop.f32.mrf.mxu0
      %v862 = vadd.f32 %v667, %v861
      %v863 = vpop.f32.mrf.mxu0
      %864 = vmatprep.mubr.f32.mxu0 0.0
      %v865 = vand.u32 %v231, 4294901760
      %v866 = vsub.f32 %v231, %v865
      %867 = vmatmul.mubr.f32.gmra.mxu0 %v866
      %v868 = vpop.f32.mrf.mxu0
      %v869 = vadd.f32 %v673, %v868
      %v870 = vpop.f32.mrf.mxu0
      %871 = vmatprep.mubr.f32.mxu0 0.0
      %v872 = vand.u32 %v234, 4294901760
      %v873 = vsub.f32 %v234, %v872
      %874 = vmatmul.mubr.f32.gmra.mxu0 %v873
      %v875 = vpop.f32.mrf.mxu0
      %v876 = vadd.f32 %v679, %v875
      %v877 = vpop.f32.mrf.mxu0
      %878 = vmatprep.mubr.f32.mxu0 0.0
      %v879 = vand.u32 %v237, 4294901760
      %v880 = vsub.f32 %v237, %v879
      %881 = vmatmul.mubr.f32.gmra.mxu0 %v880
      %v882 = vpop.f32.mrf.mxu0
      %v883 = vadd.f32 %v685, %v882
      %v884 = vpop.f32.mrf.mxu0
      %885 = vmatprep.mubr.f32.mxu0 0.0
      %v886 = vand.u32 %v240, 4294901760
      %v887 = vsub.f32 %v240, %v886
      %888 = vmatmul.mubr.f32.gmra.mxu0 %v887
      %v889 = vpop.f32.mrf.mxu0
      %v890 = vadd.f32 %v691, %v889
      %v891 = vpop.f32.mrf.mxu0
      %892 = vmatprep.mubr.f32.mxu0 0.0
      %v893 = vand.u32 %v243, 4294901760
      %v894 = vsub.f32 %v243, %v893
      %895 = vmatmul.mubr.f32.gmra.mxu0 %v894
      %v896 = vpop.f32.mrf.mxu0
      %v897 = vadd.f32 %v697, %v896
      %v898 = vpop.f32.mrf.mxu0
      %899 = vmatprep.mubr.f32.mxu0 0.0
      %v900 = vand.u32 %v246, 4294901760
      %v901 = vsub.f32 %v246, %v900
      %902 = vmatmul.mubr.f32.gmra.mxu0 %v901
      %v903 = vpop.f32.mrf.mxu0
      %v904 = vadd.f32 %v703, %v903
      %v905 = vpop.f32.mrf.mxu0
      %906 = vmatprep.mubr.f32.mxu0 0.0
      %v907 = vand.u32 %v249, 4294901760
      %v908 = vsub.f32 %v249, %v907
      %909 = vmatmul.mubr.f32.gmra.mxu0 %v908
      %v910 = vpop.f32.mrf.mxu0
      %v911 = vadd.f32 %v709, %v910
      %v912 = vpop.f32.mrf.mxu0
      %913 = vmatprep.mubr.f32.mxu0 0.0
      %v914 = vand.u32 %v252, 4294901760
      %v915 = vsub.f32 %v252, %v914
      %916 = vmatmul.mubr.f32.gmra.mxu0 %v915
      %v917 = vpop.f32.mrf.mxu0
      %v918 = vadd.f32 %v715, %v917
      %v919 = vpop.f32.mrf.mxu0
      %920 = vmatprep.mubr.f32.mxu0 0.0
      %v921 = vand.u32 %v255, 4294901760
      %v922 = vsub.f32 %v255, %v921
      %923 = vmatmul.mubr.f32.gmra.mxu0 %v922
      %v924 = vpop.f32.mrf.mxu0
      %v925 = vadd.f32 %v721, %v924
      %v926 = vpop.f32.mrf.mxu0
      %927 = vmatprep.mubr.f32.mxu0 0.0
      %v928 = vand.u32 %v258, 4294901760
      %v929 = vsub.f32 %v258, %v928
      %930 = vmatmul.mubr.f32.gmra.mxu0 %v929
      %v931 = vpop.f32.mrf.mxu0
      %v932 = vadd.f32 %v727, %v931
      %v933 = vpop.f32.mrf.mxu0
      %934 = vdwg.mxu0
      %935 = vmatprep.subr.mxu0 0.0
      %936 = vmatpush1.msra.mxu0 0.0
      %937 = vmatprep.subr.mxu0 0.0
      %938 = vmatpush1.msra.mxu0 0.0
      %939 = vmatprep.subr.mxu0 0.0
      %v940 = vand.u32 %v203, 4294901760
      %941 = vmatpush1.msra.mxu0 %v940
      %942 = vmatprep.subr.mxu0 0.0
      %v943 = vand.u32 %v202, 4294901760
      %944 = vmatpush1.msra.mxu0 %v943
      %945 = vmatprep.subr.mxu0 0.0
      %v946 = vand.u32 %v201, 4294901760
      %947 = vmatpush1.msra.mxu0 %v946
      %948 = vmatprep.subr.mxu0 0.0
      %v949 = vand.u32 %v200, 4294901760
      %950 = vmatpush1.msra.mxu0 %v949
      %951 = vmatprep.subr.mxu0 0.0
      %v952 = vand.u32 %v199, 4294901760
      %953 = vmatpush1.msra.mxu0 %v952
      %954 = vmatprep.subr.mxu0 0.0
      %v955 = vand.u32 %v198, 4294901760
      %956 = vmatpush1.msra.mxu0 %v955
      %957 = vmatprep.subr.mxu0 0.0
      %v958 = vand.u32 %v197, 4294901760
      %959 = vmatpush1.msra.mxu0 %v958
      %960 = vmatprep.subr.mxu0 0.0
      %v961 = vand.u32 %v196, 4294901760
      %962 = vmatpush1.msra.mxu0 %v961
      %963 = vmatprep.subr.mxu0 0.0
      %v964 = vand.u32 %v195, 4294901760
      %965 = vmatpush1.msra.mxu0 %v964
      %966 = vmatprep.subr.mxu0 0.0
      %v967 = vand.u32 %v194, 4294901760
      %968 = vmatpush1.msra.mxu0 %v967
      %969 = vmatprep.subr.mxu0 0.0
      %v970 = vand.u32 %v193, 4294901760
      %971 = vmatpush1.msra.mxu0 %v970
      %972 = vmatprep.subr.mxu0 0.0
      %v973 = vand.u32 %v192, 4294901760
      %974 = vmatpush1.msra.mxu0 %v973
      %975 = vmatprep.subr.mxu0 0.0
      %v976 = vand.u32 %v191, 4294901760
      %977 = vmatpush1.msra.mxu0 %v976
      %978 = vmatprep.subr.mxu0 0.0
      %v979 = vand.u32 %v190, 4294901760
      %980 = vmatpush1.msra.mxu0 %v979
      %981 = vmatprep.subr.mxu0 0.0
      %982 = vmatpush2.msra.mxu0 0.0
      %983 = vmatprep.subr.mxu0 0.0
      %984 = vmatpush2.msra.mxu0 0.0
      %985 = vmatprep.subr.mxu0 0.0
      %986 = vmatpush2.msra.mxu0 0.0
      %987 = vmatprep.subr.mxu0 0.0
      %988 = vmatpush2.msra.mxu0 0.0
      %989 = vmatprep.subr.mxu0 0.0
      %990 = vmatpush2.msra.mxu0 0.0
      %991 = vmatprep.subr.mxu0 0.0
      %992 = vmatpush2.msra.mxu0 0.0
      %993 = vmatprep.subr.mxu0 0.0
      %994 = vmatpush2.msra.mxu0 0.0
      %995 = vmatprep.subr.mxu0 0.0
      %996 = vmatpush2.msra.mxu0 0.0
      %997 = vmatprep.subr.mxu0 0.0
      %998 = vmatpush2.msra.mxu0 0.0
      %999 = vmatprep.subr.mxu0 0.0
      %1000 = vmatpush2.msra.mxu0 0.0
      %1001 = vmatprep.subr.mxu0 0.0
      %1002 = vmatpush2.msra.mxu0 0.0
      %1003 = vmatprep.subr.mxu0 0.0
      %1004 = vmatpush2.msra.mxu0 0.0
      %1005 = vmatprep.subr.mxu0 0.0
      %1006 = vmatpush2.msra.mxu0 0.0
      %1007 = vmatprep.subr.mxu0 0.0
      %1008 = vmatpush2.msra.mxu0 0.0
      %1009 = vmatprep.subr.mxu0 0.0
      %1010 = vmatpush2.msra.mxu0 0.0
      %1011 = vmatprep.subr.mxu0 0.0
      %1012 = vmatpush2.msra.mxu0 0.0
      %1013 = vmatprep.mubr.f32.mxu0 0.0
      %v1014 = vand.u32 %v213, 4294901760
      %v1015 = vsub.f32 %v213, %v1014
      %v1016 = vand.u32 %v1015, 4294901760
      %1017 = vmatmul.mubr.f32.gmra.mxu0 %v1016
      %v1018 = vpop.f32.mrf.mxu0
      %v1019 = vadd.f32 %v827, %v1018
      %v1020 = vpop.f32.mrf.mxu0
      %1021 = vmatprep.mubr.f32.mxu0 0.0
      %v1022 = vand.u32 %v216, 4294901760
      %v1023 = vsub.f32 %v216, %v1022
      %v1024 = vand.u32 %v1023, 4294901760
      %1025 = vmatmul.mubr.f32.gmra.mxu0 %v1024
      %v1026 = vpop.f32.mrf.mxu0
      %v1027 = vadd.f32 %v834, %v1026
      %v1028 = vpop.f32.mrf.mxu0
      %1029 = vmatprep.mubr.f32.mxu0 0.0
      %v1030 = vand.u32 %v219, 4294901760
      %v1031 = vsub.f32 %v219, %v1030
      %v1032 = vand.u32 %v1031, 4294901760
      %1033 = vmatmul.mubr.f32.gmra.mxu0 %v1032
      %v1034 = vpop.f32.mrf.mxu0
      %v1035 = vadd.f32 %v841, %v1034
      %v1036 = vpop.f32.mrf.mxu0
      %1037 = vmatprep.mubr.f32.mxu0 0.0
      %v1038 = vand.u32 %v222, 4294901760
      %v1039 = vsub.f32 %v222, %v1038
      %v1040 = vand.u32 %v1039, 4294901760
      %1041 = vmatmul.mubr.f32.gmra.mxu0 %v1040
      %v1042 = vpop.f32.mrf.mxu0
      %v1043 = vadd.f32 %v848, %v1042
      %v1044 = vpop.f32.mrf.mxu0
      %1045 = vmatprep.mubr.f32.mxu0 0.0
      %v1046 = vand.u32 %v225, 4294901760
      %v1047 = vsub.f32 %v225, %v1046
      %v1048 = vand.u32 %v1047, 4294901760
      %1049 = vmatmul.mubr.f32.gmra.mxu0 %v1048
      %v1050 = vpop.f32.mrf.mxu0
      %v1051 = vadd.f32 %v855, %v1050
      %v1052 = vpop.f32.mrf.mxu0
      %1053 = vmatprep.mubr.f32.mxu0 0.0
      %v1054 = vand.u32 %v228, 4294901760
      %v1055 = vsub.f32 %v228, %v1054
      %v1056 = vand.u32 %v1055, 4294901760
      %1057 = vmatmul.mubr.f32.gmra.mxu0 %v1056
      %v1058 = vpop.f32.mrf.mxu0
      %v1059 = vadd.f32 %v862, %v1058
      %v1060 = vpop.f32.mrf.mxu0
      %1061 = vmatprep.mubr.f32.mxu0 0.0
      %v1062 = vand.u32 %v231, 4294901760
      %v1063 = vsub.f32 %v231, %v1062
      %v1064 = vand.u32 %v1063, 4294901760
      %1065 = vmatmul.mubr.f32.gmra.mxu0 %v1064
      %v1066 = vpop.f32.mrf.mxu0
      %v1067 = vadd.f32 %v869, %v1066
      %v1068 = vpop.f32.mrf.mxu0
      %1069 = vmatprep.mubr.f32.mxu0 0.0
      %v1070 = vand.u32 %v234, 4294901760
      %v1071 = vsub.f32 %v234, %v1070
      %v1072 = vand.u32 %v1071, 4294901760
      %1073 = vmatmul.mubr.f32.gmra.mxu0 %v1072
      %v1074 = vpop.f32.mrf.mxu0
      %v1075 = vadd.f32 %v876, %v1074
      %v1076 = vpop.f32.mrf.mxu0
      %1077 = vmatprep.mubr.f32.mxu0 0.0
      %v1078 = vand.u32 %v237, 4294901760
      %v1079 = vsub.f32 %v237, %v1078
      %v1080 = vand.u32 %v1079, 4294901760
      %1081 = vmatmul.mubr.f32.gmra.mxu0 %v1080
      %v1082 = vpop.f32.mrf.mxu0
      %v1083 = vadd.f32 %v883, %v1082
      %v1084 = vpop.f32.mrf.mxu0
      %1085 = vmatprep.mubr.f32.mxu0 0.0
      %v1086 = vand.u32 %v240, 4294901760
      %v1087 = vsub.f32 %v240, %v1086
      %v1088 = vand.u32 %v1087, 4294901760
      %1089 = vmatmul.mubr.f32.gmra.mxu0 %v1088
      %v1090 = vpop.f32.mrf.mxu0
      %v1091 = vadd.f32 %v890, %v1090
      %v1092 = vpop.f32.mrf.mxu0
      %1093 = vmatprep.mubr.f32.mxu0 0.0
      %v1094 = vand.u32 %v243, 4294901760
      %v1095 = vsub.f32 %v243, %v1094
      %v1096 = vand.u32 %v1095, 4294901760
      %1097 = vmatmul.mubr.f32.gmra.mxu0 %v1096
      %v1098 = vpop.f32.mrf.mxu0
      %v1099 = vadd.f32 %v897, %v1098
      %v1100 = vpop.f32.mrf.mxu0
      %1101 = vmatprep.mubr.f32.mxu0 0.0
      %v1102 = vand.u32 %v246, 4294901760
      %v1103 = vsub.f32 %v246, %v1102
      %v1104 = vand.u32 %v1103, 4294901760
      %1105 = vmatmul.mubr.f32.gmra.mxu0 %v1104
      %v1106 = vpop.f32.mrf.mxu0
      %v1107 = vadd.f32 %v904, %v1106
      %v1108 = vpop.f32.mrf.mxu0
      %1109 = vmatprep.mubr.f32.mxu0 0.0
      %v1110 = vand.u32 %v249, 4294901760
      %v1111 = vsub.f32 %v249, %v1110
      %v1112 = vand.u32 %v1111, 4294901760
      %1113 = vmatmul.mubr.f32.gmra.mxu0 %v1112
      %v1114 = vpop.f32.mrf.mxu0
      %v1115 = vadd.f32 %v911, %v1114
      %v1116 = vpop.f32.mrf.mxu0
      %1117 = vmatprep.mubr.f32.mxu0 0.0
      %v1118 = vand.u32 %v252, 4294901760
      %v1119 = vsub.f32 %v252, %v1118
      %v1120 = vand.u32 %v1119, 4294901760
      %1121 = vmatmul.mubr.f32.gmra.mxu0 %v1120
      %v1122 = vpop.f32.mrf.mxu0
      %v1123 = vadd.f32 %v918, %v1122
      %v1124 = vpop.f32.mrf.mxu0
      %1125 = vmatprep.mubr.f32.mxu0 0.0
      %v1126 = vand.u32 %v255, 4294901760
      %v1127 = vsub.f32 %v255, %v1126
      %v1128 = vand.u32 %v1127, 4294901760
      %1129 = vmatmul.mubr.f32.gmra.mxu0 %v1128
      %v1130 = vpop.f32.mrf.mxu0
      %v1131 = vadd.f32 %v925, %v1130
      %v1132 = vpop.f32.mrf.mxu0
      %1133 = vmatprep.mubr.f32.mxu0 0.0
      %v1134 = vand.u32 %v258, 4294901760
      %v1135 = vsub.f32 %v258, %v1134
      %v1136 = vand.u32 %v1135, 4294901760
      %1137 = vmatmul.mubr.f32.gmra.mxu0 %v1136
      %v1138 = vpop.f32.mrf.mxu0
      %v1139 = vadd.f32 %v932, %v1138
      %v1140 = vpop.f32.mrf.mxu0
      %1141 = vdwg.mxu0
      %1142 = vmatprep.subr.mxu0 0.0
      %1143 = vmatpush1.msra.mxu0 0.0
      %1144 = vmatprep.subr.mxu0 0.0
      %1145 = vmatpush1.msra.mxu0 0.0
      %1146 = vmatprep.subr.mxu0 0.0
      %v1147 = vand.u32 %v203, 4294901760
      %v1148 = vsub.f32 %v203, %v1147
      %v1149 = vand.u32 %v1148, 4294901760
      %1150 = vmatpush1.msra.mxu0 %v1149
      %1151 = vmatprep.subr.mxu0 0.0
      %v1152 = vand.u32 %v202, 4294901760
      %v1153 = vsub.f32 %v202, %v1152
      %v1154 = vand.u32 %v1153, 4294901760
      %1155 = vmatpush1.msra.mxu0 %v1154
      %1156 = vmatprep.subr.mxu0 0.0
      %v1157 = vand.u32 %v201, 4294901760
      %v1158 = vsub.f32 %v201, %v1157
      %v1159 = vand.u32 %v1158, 4294901760
      %1160 = vmatpush1.msra.mxu0 %v1159
      %1161 = vmatprep.subr.mxu0 0.0
      %v1162 = vand.u32 %v200, 4294901760
      %v1163 = vsub.f32 %v200, %v1162
      %v1164 = vand.u32 %v1163, 4294901760
      %1165 = vmatpush1.msra.mxu0 %v1164
      %1166 = vmatprep.subr.mxu0 0.0
      %v1167 = vand.u32 %v199, 4294901760
      %v1168 = vsub.f32 %v199, %v1167
      %v1169 = vand.u32 %v1168, 4294901760
      %1170 = vmatpush1.msra.mxu0 %v1169
      %1171 = vmatprep.subr.mxu0 0.0
      %v1172 = vand.u32 %v198, 4294901760
      %v1173 = vsub.f32 %v198, %v1172
      %v1174 = vand.u32 %v1173, 4294901760
      %1175 = vmatpush1.msra.mxu0 %v1174
      %1176 = vmatprep.subr.mxu0 0.0
      %v1177 = vand.u32 %v197, 4294901760
      %v1178 = vsub.f32 %v197, %v1177
      %v1179 = vand.u32 %v1178, 4294901760
      %1180 = vmatpush1.msra.mxu0 %v1179
      %1181 = vmatprep.subr.mxu0 0.0
      %v1182 = vand.u32 %v196, 4294901760
      %v1183 = vsub.f32 %v196, %v1182
      %v1184 = vand.u32 %v1183, 4294901760
      %1185 = vmatpush1.msra.mxu0 %v1184
      %1186 = vmatprep.subr.mxu0 0.0
      %v1187 = vand.u32 %v195, 4294901760
      %v1188 = vsub.f32 %v195, %v1187
      %v1189 = vand.u32 %v1188, 4294901760
      %1190 = vmatpush1.msra.mxu0 %v1189
      %1191 = vmatprep.subr.mxu0 0.0
      %v1192 = vand.u32 %v194, 4294901760
      %v1193 = vsub.f32 %v194, %v1192
      %v1194 = vand.u32 %v1193, 4294901760
      %1195 = vmatpush1.msra.mxu0 %v1194
      %1196 = vmatprep.subr.mxu0 0.0
      %v1197 = vand.u32 %v193, 4294901760
      %v1198 = vsub.f32 %v193, %v1197
      %v1199 = vand.u32 %v1198, 4294901760
      %1200 = vmatpush1.msra.mxu0 %v1199
      %1201 = vmatprep.subr.mxu0 0.0
      %v1202 = vand.u32 %v192, 4294901760
      %v1203 = vsub.f32 %v192, %v1202
      %v1204 = vand.u32 %v1203, 4294901760
      %1205 = vmatpush1.msra.mxu0 %v1204
      %1206 = vmatprep.subr.mxu0 0.0
      %v1207 = vand.u32 %v191, 4294901760
      %v1208 = vsub.f32 %v191, %v1207
      %v1209 = vand.u32 %v1208, 4294901760
      %1210 = vmatpush1.msra.mxu0 %v1209
      %1211 = vmatprep.subr.mxu0 0.0
      %v1212 = vand.u32 %v190, 4294901760
      %v1213 = vsub.f32 %v190, %v1212
      %v1214 = vand.u32 %v1213, 4294901760
      %1215 = vmatpush1.msra.mxu0 %v1214
      %1216 = vmatprep.subr.mxu0 0.0
      %1217 = vmatpush2.msra.mxu0 0.0
      %1218 = vmatprep.subr.mxu0 0.0
      %1219 = vmatpush2.msra.mxu0 0.0
      %1220 = vmatprep.subr.mxu0 0.0
      %1221 = vmatpush2.msra.mxu0 0.0
      %1222 = vmatprep.subr.mxu0 0.0
      %1223 = vmatpush2.msra.mxu0 0.0
      %1224 = vmatprep.subr.mxu0 0.0
      %1225 = vmatpush2.msra.mxu0 0.0
      %1226 = vmatprep.subr.mxu0 0.0
      %1227 = vmatpush2.msra.mxu0 0.0
      %1228 = vmatprep.subr.mxu0 0.0
      %1229 = vmatpush2.msra.mxu0 0.0
      %1230 = vmatprep.subr.mxu0 0.0
      %1231 = vmatpush2.msra.mxu0 0.0
      %1232 = vmatprep.subr.mxu0 0.0
      %1233 = vmatpush2.msra.mxu0 0.0
      %1234 = vmatprep.subr.mxu0 0.0
      %1235 = vmatpush2.msra.mxu0 0.0
      %1236 = vmatprep.subr.mxu0 0.0
      %1237 = vmatpush2.msra.mxu0 0.0
      %1238 = vmatprep.subr.mxu0 0.0
      %1239 = vmatpush2.msra.mxu0 0.0
      %1240 = vmatprep.subr.mxu0 0.0
      %1241 = vmatpush2.msra.mxu0 0.0
      %1242 = vmatprep.subr.mxu0 0.0
      %1243 = vmatpush2.msra.mxu0 0.0
      %1244 = vmatprep.subr.mxu0 0.0
      %1245 = vmatpush2.msra.mxu0 0.0
      %1246 = vmatprep.subr.mxu0 0.0
      %1247 = vmatpush2.msra.mxu0 0.0
      %1248 = vmatprep.mubr.f32.mxu0 0.0
      %v1249 = vand.u32 %v213, 4294901760
      %1250 = vmatmul.mubr.f32.gmra.mxu0 %v1249
      %v1251 = vpop.f32.mrf.mxu0
      %v1252 = vadd.f32 %v1019, %v1251
      %v1253 = vpop.f32.mrf.mxu0
      %1254 = vmatprep.mubr.f32.mxu0 0.0
      %v1255 = vand.u32 %v216, 4294901760
      %1256 = vmatmul.mubr.f32.gmra.mxu0 %v1255
      %v1257 = vpop.f32.mrf.mxu0
      %v1258 = vadd.f32 %v1027, %v1257
      %v1259 = vpop.f32.mrf.mxu0
      %1260 = vmatprep.mubr.f32.mxu0 0.0
      %v1261 = vand.u32 %v219, 4294901760
      %1262 = vmatmul.mubr.f32.gmra.mxu0 %v1261
      %v1263 = vpop.f32.mrf.mxu0
      %v1264 = vadd.f32 %v1035, %v1263
      %v1265 = vpop.f32.mrf.mxu0
      %1266 = vmatprep.mubr.f32.mxu0 0.0
      %v1267 = vand.u32 %v222, 4294901760
      %1268 = vmatmul.mubr.f32.gmra.mxu0 %v1267
      %v1269 = vpop.f32.mrf.mxu0
      %v1270 = vadd.f32 %v1043, %v1269
      %v1271 = vpop.f32.mrf.mxu0
      %1272 = vmatprep.mubr.f32.mxu0 0.0
      %v1273 = vand.u32 %v225, 4294901760
      %1274 = vmatmul.mubr.f32.gmra.mxu0 %v1273
      %v1275 = vpop.f32.mrf.mxu0
      %v1276 = vadd.f32 %v1051, %v1275
      %v1277 = vpop.f32.mrf.mxu0
      %1278 = vmatprep.mubr.f32.mxu0 0.0
      %v1279 = vand.u32 %v228, 4294901760
      %1280 = vmatmul.mubr.f32.gmra.mxu0 %v1279
      %v1281 = vpop.f32.mrf.mxu0
      %v1282 = vadd.f32 %v1059, %v1281
      %v1283 = vpop.f32.mrf.mxu0
      %1284 = vmatprep.mubr.f32.mxu0 0.0
      %v1285 = vand.u32 %v231, 4294901760
      %1286 = vmatmul.mubr.f32.gmra.mxu0 %v1285
      %v1287 = vpop.f32.mrf.mxu0
      %v1288 = vadd.f32 %v1067, %v1287
      %v1289 = vpop.f32.mrf.mxu0
      %1290 = vmatprep.mubr.f32.mxu0 0.0
      %v1291 = vand.u32 %v234, 4294901760
      %1292 = vmatmul.mubr.f32.gmra.mxu0 %v1291
      %v1293 = vpop.f32.mrf.mxu0
      %v1294 = vadd.f32 %v1075, %v1293
      %v1295 = vpop.f32.mrf.mxu0
      %1296 = vmatprep.mubr.f32.mxu0 0.0
      %v1297 = vand.u32 %v237, 4294901760
      %1298 = vmatmul.mubr.f32.gmra.mxu0 %v1297
      %v1299 = vpop.f32.mrf.mxu0
      %v1300 = vadd.f32 %v1083, %v1299
      %v1301 = vpop.f32.mrf.mxu0
      %1302 = vmatprep.mubr.f32.mxu0 0.0
      %v1303 = vand.u32 %v240, 4294901760
      %1304 = vmatmul.mubr.f32.gmra.mxu0 %v1303
      %v1305 = vpop.f32.mrf.mxu0
      %v1306 = vadd.f32 %v1091, %v1305
      %v1307 = vpop.f32.mrf.mxu0
      %1308 = vmatprep.mubr.f32.mxu0 0.0
      %v1309 = vand.u32 %v243, 4294901760
      %1310 = vmatmul.mubr.f32.gmra.mxu0 %v1309
      %v1311 = vpop.f32.mrf.mxu0
      %v1312 = vadd.f32 %v1099, %v1311
      %v1313 = vpop.f32.mrf.mxu0
      %1314 = vmatprep.mubr.f32.mxu0 0.0
      %v1315 = vand.u32 %v246, 4294901760
      %1316 = vmatmul.mubr.f32.gmra.mxu0 %v1315
      %v1317 = vpop.f32.mrf.mxu0
      %v1318 = vadd.f32 %v1107, %v1317
      %v1319 = vpop.f32.mrf.mxu0
      %1320 = vmatprep.mubr.f32.mxu0 0.0
      %v1321 = vand.u32 %v249, 4294901760
      %1322 = vmatmul.mubr.f32.gmra.mxu0 %v1321
      %v1323 = vpop.f32.mrf.mxu0
      %v1324 = vadd.f32 %v1115, %v1323
      %v1325 = vpop.f32.mrf.mxu0
      %1326 = vmatprep.mubr.f32.mxu0 0.0
      %v1327 = vand.u32 %v252, 4294901760
      %1328 = vmatmul.mubr.f32.gmra.mxu0 %v1327
      %v1329 = vpop.f32.mrf.mxu0
      %v1330 = vadd.f32 %v1123, %v1329
      %v1331 = vpop.f32.mrf.mxu0
      %1332 = vmatprep.mubr.f32.mxu0 0.0
      %v1333 = vand.u32 %v255, 4294901760
      %1334 = vmatmul.mubr.f32.gmra.mxu0 %v1333
      %v1335 = vpop.f32.mrf.mxu0
      %v1336 = vadd.f32 %v1131, %v1335
      %v1337 = vpop.f32.mrf.mxu0
      %1338 = vmatprep.mubr.f32.mxu0 0.0
      %v1339 = vand.u32 %v258, 4294901760
      %1340 = vmatmul.mubr.f32.gmra.mxu0 %v1339
      %v1341 = vpop.f32.mrf.mxu0
      %v1342 = vadd.f32 %v1139, %v1341
      %v1343 = vpop.f32.mrf.mxu0
      %1344 = vdwg.mxu0
      %1345 = vmatprep.subr.mxu0 0.0
      %1346 = vmatpush1.msra.mxu0 0.0
      %1347 = vmatprep.subr.mxu0 0.0
      %1348 = vmatpush1.msra.mxu0 0.0
      %1349 = vmatprep.subr.mxu0 0.0
      %v1350 = vand.u32 %v203, 4294901760
      %1351 = vmatpush1.msra.mxu0 %v1350
      %1352 = vmatprep.subr.mxu0 0.0
      %v1353 = vand.u32 %v202, 4294901760
      %1354 = vmatpush1.msra.mxu0 %v1353
      %1355 = vmatprep.subr.mxu0 0.0
      %v1356 = vand.u32 %v201, 4294901760
      %1357 = vmatpush1.msra.mxu0 %v1356
      %1358 = vmatprep.subr.mxu0 0.0
      %v1359 = vand.u32 %v200, 4294901760
      %1360 = vmatpush1.msra.mxu0 %v1359
      %1361 = vmatprep.subr.mxu0 0.0
      %v1362 = vand.u32 %v199, 4294901760
      %1363 = vmatpush1.msra.mxu0 %v1362
      %1364 = vmatprep.subr.mxu0 0.0
      %v1365 = vand.u32 %v198, 4294901760
      %1366 = vmatpush1.msra.mxu0 %v1365
      %1367 = vmatprep.subr.mxu0 0.0
      %v1368 = vand.u32 %v197, 4294901760
      %1369 = vmatpush1.msra.mxu0 %v1368
      %1370 = vmatprep.subr.mxu0 0.0
      %v1371 = vand.u32 %v196, 4294901760
      %1372 = vmatpush1.msra.mxu0 %v1371
      %1373 = vmatprep.subr.mxu0 0.0
      %v1374 = vand.u32 %v195, 4294901760
      %1375 = vmatpush1.msra.mxu0 %v1374
      %1376 = vmatprep.subr.mxu0 0.0
      %v1377 = vand.u32 %v194, 4294901760
      %1378 = vmatpush1.msra.mxu0 %v1377
      %1379 = vmatprep.subr.mxu0 0.0
      %v1380 = vand.u32 %v193, 4294901760
      %1381 = vmatpush1.msra.mxu0 %v1380
      %1382 = vmatprep.subr.mxu0 0.0
      %v1383 = vand.u32 %v192, 4294901760
      %1384 = vmatpush1.msra.mxu0 %v1383
      %1385 = vmatprep.subr.mxu0 0.0
      %v1386 = vand.u32 %v191, 4294901760
      %1387 = vmatpush1.msra.mxu0 %v1386
      %1388 = vmatprep.subr.mxu0 0.0
      %v1389 = vand.u32 %v190, 4294901760
      %1390 = vmatpush1.msra.mxu0 %v1389
      %1391 = vmatprep.subr.mxu0 0.0
      %1392 = vmatpush2.msra.mxu0 0.0
      %1393 = vmatprep.subr.mxu0 0.0
      %1394 = vmatpush2.msra.mxu0 0.0
      %1395 = vmatprep.subr.mxu0 0.0
      %1396 = vmatpush2.msra.mxu0 0.0
      %1397 = vmatprep.subr.mxu0 0.0
      %1398 = vmatpush2.msra.mxu0 0.0
      %1399 = vmatprep.subr.mxu0 0.0
      %1400 = vmatpush2.msra.mxu0 0.0
      %1401 = vmatprep.subr.mxu0 0.0
      %1402 = vmatpush2.msra.mxu0 0.0
      %1403 = vmatprep.subr.mxu0 0.0
      %1404 = vmatpush2.msra.mxu0 0.0
      %1405 = vmatprep.subr.mxu0 0.0
      %1406 = vmatpush2.msra.mxu0 0.0
      %1407 = vmatprep.subr.mxu0 0.0
      %1408 = vmatpush2.msra.mxu0 0.0
      %1409 = vmatprep.subr.mxu0 0.0
      %1410 = vmatpush2.msra.mxu0 0.0
      %1411 = vmatprep.subr.mxu0 0.0
      %1412 = vmatpush2.msra.mxu0 0.0
      %1413 = vmatprep.subr.mxu0 0.0
      %1414 = vmatpush2.msra.mxu0 0.0
      %1415 = vmatprep.subr.mxu0 0.0
      %1416 = vmatpush2.msra.mxu0 0.0
      %1417 = vmatprep.subr.mxu0 0.0
      %1418 = vmatpush2.msra.mxu0 0.0
      %1419 = vmatprep.subr.mxu0 0.0
      %1420 = vmatpush2.msra.mxu0 0.0
      %1421 = vmatprep.subr.mxu0 0.0
      %1422 = vmatpush2.msra.mxu0 0.0
      %1423 = vmatprep.mubr.f32.mxu0 0.0
      %v1424 = vand.u32 %v213, 4294901760
      %1425 = vmatmul.mubr.f32.gmra.mxu0 %v1424
      %v1426 = vpop.f32.mrf.mxu0
      %v1427 = vadd.f32 %v1252, %v1426
      %v1428 = vpop.f32.mrf.mxu0
      %1429 = vmatprep.mubr.f32.mxu0 0.0
      %v1430 = vand.u32 %v216, 4294901760
      %1431 = vmatmul.mubr.f32.gmra.mxu0 %v1430
      %v1432 = vpop.f32.mrf.mxu0
      %v1433 = vadd.f32 %v1258, %v1432
      %v1434 = vpop.f32.mrf.mxu0
      %1435 = vmatprep.mubr.f32.mxu0 0.0
      %v1436 = vand.u32 %v219, 4294901760
      %1437 = vmatmul.mubr.f32.gmra.mxu0 %v1436
      %v1438 = vpop.f32.mrf.mxu0
      %v1439 = vadd.f32 %v1264, %v1438
      %v1440 = vpop.f32.mrf.mxu0
      %1441 = vmatprep.mubr.f32.mxu0 0.0
      %v1442 = vand.u32 %v222, 4294901760
      %1443 = vmatmul.mubr.f32.gmra.mxu0 %v1442
      %v1444 = vpop.f32.mrf.mxu0
      %v1445 = vadd.f32 %v1270, %v1444
      %v1446 = vpop.f32.mrf.mxu0
      %1447 = vmatprep.mubr.f32.mxu0 0.0
      %v1448 = vand.u32 %v225, 4294901760
      %1449 = vmatmul.mubr.f32.gmra.mxu0 %v1448
      %v1450 = vpop.f32.mrf.mxu0
      %v1451 = vadd.f32 %v1276, %v1450
      %v1452 = vpop.f32.mrf.mxu0
      %1453 = vmatprep.mubr.f32.mxu0 0.0
      %v1454 = vand.u32 %v228, 4294901760
      %1455 = vmatmul.mubr.f32.gmra.mxu0 %v1454
      %v1456 = vpop.f32.mrf.mxu0
      %v1457 = vadd.f32 %v1282, %v1456
      %v1458 = vpop.f32.mrf.mxu0
      %1459 = vmatprep.mubr.f32.mxu0 0.0
      %v1460 = vand.u32 %v231, 4294901760
      %1461 = vmatmul.mubr.f32.gmra.mxu0 %v1460
      %v1462 = vpop.f32.mrf.mxu0
      %v1463 = vadd.f32 %v1288, %v1462
      %v1464 = vpop.f32.mrf.mxu0
      %1465 = vmatprep.mubr.f32.mxu0 0.0
      %v1466 = vand.u32 %v234, 4294901760
      %1467 = vmatmul.mubr.f32.gmra.mxu0 %v1466
      %v1468 = vpop.f32.mrf.mxu0
      %v1469 = vadd.f32 %v1294, %v1468
      %v1470 = vpop.f32.mrf.mxu0
      %1471 = vmatprep.mubr.f32.mxu0 0.0
      %v1472 = vand.u32 %v237, 4294901760
      %1473 = vmatmul.mubr.f32.gmra.mxu0 %v1472
      %v1474 = vpop.f32.mrf.mxu0
      %v1475 = vadd.f32 %v1300, %v1474
      %v1476 = vpop.f32.mrf.mxu0
      %1477 = vmatprep.mubr.f32.mxu0 0.0
      %v1478 = vand.u32 %v240, 4294901760
      %1479 = vmatmul.mubr.f32.gmra.mxu0 %v1478
      %v1480 = vpop.f32.mrf.mxu0
      %v1481 = vadd.f32 %v1306, %v1480
      %v1482 = vpop.f32.mrf.mxu0
      %1483 = vmatprep.mubr.f32.mxu0 0.0
      %v1484 = vand.u32 %v243, 4294901760
      %1485 = vmatmul.mubr.f32.gmra.mxu0 %v1484
      %v1486 = vpop.f32.mrf.mxu0
      %v1487 = vadd.f32 %v1312, %v1486
      %v1488 = vpop.f32.mrf.mxu0
      %1489 = vmatprep.mubr.f32.mxu0 0.0
      %v1490 = vand.u32 %v246, 4294901760
      %1491 = vmatmul.mubr.f32.gmra.mxu0 %v1490
      %v1492 = vpop.f32.mrf.mxu0
      %v1493 = vadd.f32 %v1318, %v1492
      %v1494 = vpop.f32.mrf.mxu0
      %1495 = vmatprep.mubr.f32.mxu0 0.0
      %v1496 = vand.u32 %v249, 4294901760
      %1497 = vmatmul.mubr.f32.gmra.mxu0 %v1496
      %v1498 = vpop.f32.mrf.mxu0
      %v1499 = vadd.f32 %v1324, %v1498
      %v1500 = vpop.f32.mrf.mxu0
      %1501 = vmatprep.mubr.f32.mxu0 0.0
      %v1502 = vand.u32 %v252, 4294901760
      %1503 = vmatmul.mubr.f32.gmra.mxu0 %v1502
      %v1504 = vpop.f32.mrf.mxu0
      %v1505 = vadd.f32 %v1330, %v1504
      %v1506 = vpop.f32.mrf.mxu0
      %1507 = vmatprep.mubr.f32.mxu0 0.0
      %v1508 = vand.u32 %v255, 4294901760
      %1509 = vmatmul.mubr.f32.gmra.mxu0 %v1508
      %v1510 = vpop.f32.mrf.mxu0
      %v1511 = vadd.f32 %v1336, %v1510
      %v1512 = vpop.f32.mrf.mxu0
      %1513 = vmatprep.mubr.f32.mxu0 0.0
      %v1514 = vand.u32 %v258, 4294901760
      %1515 = vmatmul.mubr.f32.gmra.mxu0 %v1514
      %v1516 = vpop.f32.mrf.mxu0
      %v1517 = vadd.f32 %v1342, %v1516
      %v1518 = vpop.f32.mrf.mxu0
      %1519 = vdwg.mxu0
      %vm1520 = vcmask 64512
      %1521 = vst.msk [vmem:[%s172] sm:$0xff] %vm1520, %v1427
      %1522 = vst.msk [vmem:[%s172 + $0x8] sm:$0xff] %vm1520, %v1433
      %1523 = vst.msk [vmem:[%s172 + $0x10] sm:$0xff] %vm1520, %v1439
      %1524 = vst.msk [vmem:[%s172 + $0x18] sm:$0xff] %vm1520, %v1445
      %1525 = vst.msk [vmem:[%s172 + $0x20] sm:$0xff] %vm1520, %v1451
      %1526 = vst.msk [vmem:[%s172 + $0x28] sm:$0xff] %vm1520, %v1457
      %1527 = vst.msk [vmem:[%s172 + $0x30] sm:$0xff] %vm1520, %v1463
      %1528 = vst.msk [vmem:[%s172 + $0x38] sm:$0xff] %vm1520, %v1469
      %1529 = vst.msk [vmem:[%s172 + $0x40] sm:$0xff] %vm1520, %v1475
      %1530 = vst.msk [vmem:[%s172 + $0x48] sm:$0xff] %vm1520, %v1481
      %1531 = vst.msk [vmem:[%s172 + $0x50] sm:$0xff] %vm1520, %v1487
      %1532 = vst.msk [vmem:[%s172 + $0x58] sm:$0xff] %vm1520, %v1493
      %1533 = vst.msk [vmem:[%s172 + $0x60] sm:$0xff] %vm1520, %v1499
      %1534 = vst.msk [vmem:[%s172 + $0x68] sm:$0xff] %vm1520, %v1505
      %1535 = vst.msk [vmem:[%s172 + $0x70] sm:$0xff] %vm1520, %v1511
      %1536 = vst.msk [vmem:[%s172 + $0x78] sm:$0xff] %vm1520, %v1517
      %s1537 = smul.u32 16, %s14
      %p1538 = scmp.lt.s32.totalorder %s1537, 31
      %s1539 = scalar_select %p1538, %s1537, 31
      %s1540 = smul.addr %s1539, 8
      %s1541 = scalar_lea.vmem %s3, %s1540
      // Predicated region
      $region33: #{up_block_batch_pallas.5} parent=31 // pred_check
        %p1542 = pneg %p100
      $region34: #{up_block_batch_pallas.5} parent=31 // pred_check_branch
        %1544 = sbr.rel (%p1542) target = $region36
      $region35: #{up_block_batch_pallas.5} parent=31 // pred_region
        %s1545 = smul.u32 16, %s14
      $region36: #{up_block_batch_pallas.5} parent=31 // pred_fallthru
        _
    $region32: #{up_block_batch_pallas.5} parent=5 // pred_fallthru
      _
    %p1546 = scmp.le.s32.totalorder 2, %s9
    // Predicated region
    $region37: #{up_block_batch_pallas.5} parent=5 // pred_check
      %p1547 = pneg %p1546
    $region38: #{up_block_batch_pallas.5} parent=5 // pred_check_branch
      %1549 = sbr.rel (%p1547) target = $region40
    $region39: #{up_block_batch_pallas.5} parent=5 // pred_region
      %s1550 = ssub.s32 %s9, 2
      // Predicated region
      $region41: #{up_block_batch_pallas.5} parent=39 // pred_check
        %p1551 = pneg %p106
      $region42: #{up_block_batch_pallas.5} parent=39 // pred_check_branch
        %1553 = sbr.rel (%p1551) target = $region44
      $region43: #{up_block_batch_pallas.5} parent=39 // pred_region
        %s1554 = smul.u32 16, %s15
        %p1555 = scmp.lt.s32.totalorder %s1554, 31
        %s1556 = scalar_select %p1555, %s1554, 31
        %s1557 = smul.addr %s1556, 8
        %s1558 = scalar_lea.vmem %s3, %s1557
      $region44: #{up_block_batch_pallas.5} parent=39 // pred_fallthru
        _
    $region40: #{up_block_batch_pallas.5} parent=5 // pred_fallthru
      _
  $region6: #{up_block_batch_pallas.5} parent=0 // loop_footer
    %s13 = sadd.s32 1, %s9
  $region7: #{up_block_batch_pallas.5} parent=0 // loop_footer_branch
    %8 = sbr.rel target = $region3
  $region8: #{up_block_batch_pallas.5} parent=0 // loop_exit
    _

// kernel: tile.33
$region0: #{tile.33}
  #allocation0 [shape = 's32[1]{0}', space=sflag, size = 0x4, scoped, tag = 'scoped memory for tile.33']
  %s0 = inlined_call_operand.vmem [shape: f32[8], index: 0, kind: input, shape index: {}]
  %s1 = inlined_call_operand.vmem [shape: f32[16,8], index: 1, kind: output, shape index: {}]
  // Predicated region
  $region2: #{tile.33} parent=0 // pred_check
    _
  $region3: #{tile.33} parent=0 // pred_check_branch
    %3 = sbr.rel (0) target = $region5
  $region4: #{tile.33} parent=0 // pred_region
    _
  $region5: #{tile.33} parent=0 // pred_fallthru
    _
  %v4 = vld [vmem:[%s0] ss:$0 sm:$0xff]
  %5 = vst [vmem:[%s1] sm:$0xff] %v4
  %s6 = scalar_lea.vmem %s1, 8
  %7 = vst [vmem:[%s6] sm:$0xff] %v4

// kernel: tile.34
$region0: #{tile.34}
  %s0 = inlined_call_operand.vmem [shape: f32[16,8], index: 0, kind: input, shape index: {}]
  %s1 = inlined_call_operand.vmem [shape: f32[1,128], index: 1, kind: output, shape index: {}]
  $region1: #{tile.34} parent=0
    #allocation0 [shape = 'u8[4096]{0}', space=vmem, size = 0x1000, scoped, tag = 'scoped mem for output reshape']
    %v2 = vld [vmem:[%s0] sm:$0x1]
    %vm3 = vcmask 64512
    %4 = vst.msk [vmem:[#allocation0] sm:$0x1] %vm3, %v2
    %s5 = scalar_lea.vmem %s0, 15
    %v6 = vld [vmem:[%s5] sm:$0x1]
    %7 = vrot.lane.b32.xlu0 %v6, 120
    %v8 = vpop.permute.xlu0 %7
    %vm9 = vcmask 1048512
    %10 = vst.msk [vmem:[#allocation0] sm:$0x1] %vm9, %v8
    %s11 = scalar_lea.vmem %s0, 14
    %v12 = vld [vmem:[%s11] sm:$0x1]
    %13 = vrot.lane.b32.xlu0 %v12, 112
    %v14 = vpop.permute.xlu0 %13
    %vm15 = vcmask 982912
    %16 = vst.msk [vmem:[#allocation0] sm:$0x1] %vm15, %v14
    %s17 = scalar_lea.vmem %s0, 13
    %v18 = vld [vmem:[%s17] sm:$0x1]
    %19 = vrot.lane.b32.xlu0 %v18, 104
    %v20 = vpop.permute.xlu0 %19
    %vm21 = vcmask 917312
    %22 = vst.msk [vmem:[#allocation0] sm:$0x1] %vm21, %v20
    %s23 = scalar_lea.vmem %s0, 12
    %v24 = vld [vmem:[%s23] sm:$0x1]
    %25 = vrot.lane.b32.xlu0 %v24, 96
    %v26 = vpop.permute.xlu0 %25
    %vm27 = vcmask 851712
    %28 = vst.msk [vmem:[#allocation0] sm:$0x1] %vm27, %v26
    %s29 = scalar_lea.vmem %s0, 11
    %v30 = vld [vmem:[%s29] sm:$0x1]
    %31 = vrot.lane.b32.xlu0 %v30, 88
    %v32 = vpop.permute.xlu0 %31
    %vm33 = vcmask 786112
    %34 = vst.msk [vmem:[#allocation0] sm:$0x1] %vm33, %v32
    %s35 = scalar_lea.vmem %s0, 10
    %v36 = vld [vmem:[%s35] sm:$0x1]
    %37 = vrot.lane.b32.xlu0 %v36, 80
    %v38 = vpop.permute.xlu0 %37
    %vm39 = vcmask 720512
    %40 = vst.msk [vmem:[#allocation0] sm:$0x1] %vm39, %v38
    %s41 = scalar_lea.vmem %s0, 9
    %v42 = vld [vmem:[%s41] sm:$0x1]
    %43 = vrot.lane.b32.xlu0 %v42, 72
    %v44 = vpop.permute.xlu0 %43
    %vm45 = vcmask 654912
    %46 = vst.msk [vmem:[#allocation0] sm:$0x1] %vm45, %v44
    %s47 = scalar_lea.vmem %s0, 8
    %v48 = vld [vmem:[%s47] sm:$0x1]
    %49 = vrot.lane.b32.xlu0 %v48, 64
    %v50 = vpop.permute.xlu0 %49
    %vm51 = vcmask 589312
    %52 = vst.msk [vmem:[#allocation0] sm:$0x1] %vm51, %v50
    %s53 = scalar_lea.vmem %s0, 7
    %v54 = vld [vmem:[%s53] sm:$0x1]
    %55 = vrot.lane.b32.xlu0 %v54, 56
    %v56 = vpop.permute.xlu0 %55
    %vm57 = vcmask 523712
    %58 = vst.msk [vmem:[#allocation0] sm:$0x1] %vm57, %v56
    %s59 = scalar_lea.vmem %s0, 6
    %v60 = vld [vmem:[%s59] sm:$0x1]
    %61 = vrot.lane.b32.xlu0 %v60, 48
    %v62 = vpop.permute.xlu0 %61
    %vm63 = vcmask 458112
    %64 = vst.msk [vmem:[#allocation0] sm:$0x1] %vm63, %v62
    %s65 = scalar_lea.vmem %s0, 5
    %v66 = vld [vmem:[%s65] sm:$0x1]
    %67 = vrot.lane.b32.xlu0 %v66, 40
    %v68 = vpop.permute.xlu0 %67
    %vm69 = vcmask 392512
    %70 = vst.msk [vmem:[#allocation0] sm:$0x1] %vm69, %v68
    %s71 = scalar_lea.vmem %s0, 4
    %v72 = vld [vmem:[%s71] sm:$0x1]
    %73 = vrot.lane.b32.xlu0 %v72, 32
    %v74 = vpop.permute.xlu0 %73
    %vm75 = vcmask 326912
    %76 = vst.msk [vmem:[#allocation0] sm:$0x1] %vm75, %v74
    %s77 = scalar_lea.vmem %s0, 3
    %v78 = vld [vmem:[%s77] sm:$0x1]
    %79 = vrot.lane.b32.xlu0 %v78, 24
    %v80 = vpop.permute.xlu0 %79
    %vm81 = vcmask 261312
    %82 = vst.msk [vmem:[#allocation0] sm:$0x1] %vm81, %v80
    %s83 = scalar_lea.vmem %s0, 2
    %v84 = vld [vmem:[%s83] sm:$0x1]
    %85 = vrot.lane.b32.xlu0 %v84, 16
    %v86 = vpop.permute.xlu0 %85
    %vm87 = vcmask 195712
    %88 = vst.msk [vmem:[#allocation0] sm:$0x1] %vm87, %v86
    %s89 = scalar_lea.vmem %s0, 1
    %v90 = vld [vmem:[%s89] sm:$0x1]
    %91 = vrot.lane.b32.xlu0 %v90, 8
    %v92 = vpop.permute.xlu0 %91
    %vm93 = vcmask 130112
    %94 = vst.msk [vmem:[#allocation0] sm:$0x1] %vm93, %v92
    %s96 = sshll.u32 1, 1
    %s97 = ssub.s32 %s96, 1
    %v99 = vld [vmem:[#allocation0] sm:%s97]
    %s100 = sshll.u32 1, 1
    %s101 = ssub.s32 %s100, 1
    %102 = vst [vmem:[%s1] sm:%s101] %v99

// kernel: up_block_batch_pallas.6
$region0: #{up_block_batch_pallas.6}
  #allocation0 [shape = 'u32[]', space=smem, size = 0x4, offset = 0x4, fixed_abs, tag = 'smem constant byte address 0x4 - core index']
  #allocation1 [shape = 'u32[144,128]{1,0:T(1,128)}', space=vmem, size = 0x12000, scoped, tag = 'internal scratch']
  %s0 = inlined_call_operand.vmem [shape: f32[256,56], index: 0, kind: input, shape index: {}]
  %s1 = inlined_call_operand.vmem [shape: f32[56,8], index: 1, kind: input, shape index: {}]
  %s2 = inlined_call_operand.vmem [shape: f32[1,8], index: 2, kind: input, shape index: {}]
  %s3 = inlined_call_operand.vmem [shape: f32[1,56], index: 3, kind: input, shape index: {}]
  %s4 = inlined_call_operand.vmem [shape: f32[1,56], index: 4, kind: input, shape index: {}]
  %s5 = inlined_call_operand.vmem [shape: f32[256,8], index: 5, kind: output, shape index: {}]
  %s6 = sld [smem:[#allocation0]]
  $region53: #{up_block_batch_pallas.6} parent=0
    _
  %s8 = ssub.s32 1, %s6
  %s9 = scalar_select 0, %s8, %s6
  loop: start=0, step=1, limit=4
  $region2: #{up_block_batch_pallas.6} parent=0 // loop_pre_header
    _
  $region3: #{up_block_batch_pallas.6} parent=0 // loop_header
    %s11 = sphi 0, %s15
    %p12 = scmp.ge.s32.totalorder %s11, 4
    %s21 = sphi 0, %s23
    %s24 = sphi 0, %s21
    %s25 = sphi 0, %s24
    %s41 = sphi 0, %s25
    %s45 = sphi 0, %s45
    %s47 = sphi 0, %s45
    %s48 = sphi 0, %s47
    %s62 = sphi 0, %s48
    %s66 = sphi 0, %s66
    %s68 = sphi 0, %s66
    %s69 = sphi 0, %s68
    %s83 = sphi 0, %s69
    %s87 = sphi 0, %s87
    %s89 = sphi 0, %s87
    %s90 = sphi 0, %s89
    %s104 = sphi 0, %s90
    %s108 = sphi 0, %s108
    %s110 = sphi 0, %s108
    %s111 = sphi 0, %s110
    %s125 = sphi 0, %s111
    %s131 = sphi 0, %s133
    %s134 = sphi 0, %s131
    %s135 = sphi 0, %s134
    %s151 = sphi 0, %s135
  $region4: #{up_block_batch_pallas.6} parent=0 // loop_header_branch
    %14 = sbr.rel (%p12) target = $region8
  $region5: #{up_block_batch_pallas.6} parent=0 // loop_body
    %s16 = ssub.s32 %s11, 1
    %s17 = ssub.s32 %s11, 2
    %s18 = sadd.s32 %s11, 1
    %s19 = ssub.s32 %s11, %s18
    %p20 = scmp.eq.s32.totalorder %s19, 0
    %s22 = sadd.s32 %s21, 1
    %s23 = scalar_select %p20, %s21, %s22
    %p26 = pneg %p20
    %p27 = scmp.eq.s32.totalorder %s11, 1
    %p28 = por %p26, %p27
    %p29 = scmp.ne.s32.totalorder %s21, %s24
    %p30 = scmp.eq.s32.totalorder %s11, 0
    %p31 = por %p29, %p30
    %p32 = scmp.ne.s32.totalorder %s21, %s24
    %p33 = scmp.eq.s32.totalorder %s16, 1
    %p34 = por %p32, %p33
    %p35 = scmp.ne.s32.totalorder %s24, %s25
    %p36 = scmp.eq.s32.totalorder %s16, 0
    %p37 = por %p35, %p36
    %p38 = scmp.ne.s32.totalorder %s24, %s25
    %p39 = scmp.eq.s32.totalorder %s17, 1
    %p40 = por %p38, %p39
    %p42 = scmp.ne.s32.totalorder %s25, %s41
    %p43 = scmp.eq.s32.totalorder %s17, 0
    %p44 = por %p42, %p43
    %s46 = sadd.s32 %s45, 1
    %p49 = scmp.eq.s32.totalorder %s11, 1
    %p50 = scmp.ne.s32.totalorder %s45, %s47
    %p51 = scmp.eq.s32.totalorder %s11, 0
    %p52 = por %p50, %p51
    %p53 = scmp.ne.s32.totalorder %s45, %s47
    %p54 = scmp.eq.s32.totalorder %s16, 1
    %p55 = por %p53, %p54
    %p56 = scmp.ne.s32.totalorder %s47, %s48
    %p57 = scmp.eq.s32.totalorder %s16, 0
    %p58 = por %p56, %p57
    %p59 = scmp.ne.s32.totalorder %s47, %s48
    %p60 = scmp.eq.s32.totalorder %s17, 1
    %p61 = por %p59, %p60
    %p63 = scmp.ne.s32.totalorder %s48, %s62
    %p64 = scmp.eq.s32.totalorder %s17, 0
    %p65 = por %p63, %p64
    %s67 = sadd.s32 %s66, 1
    %p70 = scmp.eq.s32.totalorder %s11, 1
    %p71 = scmp.ne.s32.totalorder %s66, %s68
    %p72 = scmp.eq.s32.totalorder %s11, 0
    %p73 = por %p71, %p72
    %p74 = scmp.ne.s32.totalorder %s66, %s68
    %p75 = scmp.eq.s32.totalorder %s16, 1
    %p76 = por %p74, %p75
    %p77 = scmp.ne.s32.totalorder %s68, %s69
    %p78 = scmp.eq.s32.totalorder %s16, 0
    %p79 = por %p77, %p78
    %p80 = scmp.ne.s32.totalorder %s68, %s69
    %p81 = scmp.eq.s32.totalorder %s17, 1
    %p82 = por %p80, %p81
    %p84 = scmp.ne.s32.totalorder %s69, %s83
    %p85 = scmp.eq.s32.totalorder %s17, 0
    %p86 = por %p84, %p85
    %s88 = sadd.s32 %s87, 1
    %p91 = scmp.eq.s32.totalorder %s11, 1
    %p92 = scmp.ne.s32.totalorder %s87, %s89
    %p93 = scmp.eq.s32.totalorder %s11, 0
    %p94 = por %p92, %p93
    %p95 = scmp.ne.s32.totalorder %s87, %s89
    %p96 = scmp.eq.s32.totalorder %s16, 1
    %p97 = por %p95, %p96
    %p98 = scmp.ne.s32.totalorder %s89, %s90
    %p99 = scmp.eq.s32.totalorder %s16, 0
    %p100 = por %p98, %p99
    %p101 = scmp.ne.s32.totalorder %s89, %s90
    %p102 = scmp.eq.s32.totalorder %s17, 1
    %p103 = por %p101, %p102
    %p105 = scmp.ne.s32.totalorder %s90, %s104
    %p106 = scmp.eq.s32.totalorder %s17, 0
    %p107 = por %p105, %p106
    %s109 = sadd.s32 %s108, 1
    %p112 = scmp.eq.s32.totalorder %s11, 1
    %p113 = scmp.ne.s32.totalorder %s108, %s110
    %p114 = scmp.eq.s32.totalorder %s11, 0
    %p115 = por %p113, %p114
    %p116 = scmp.ne.s32.totalorder %s108, %s110
    %p117 = scmp.eq.s32.totalorder %s16, 1
    %p118 = por %p116, %p117
    %p119 = scmp.ne.s32.totalorder %s110, %s111
    %p120 = scmp.eq.s32.totalorder %s16, 0
    %p121 = por %p119, %p120
    %p122 = scmp.ne.s32.totalorder %s110, %s111
    %p123 = scmp.eq.s32.totalorder %s17, 1
    %p124 = por %p122, %p123
    %p126 = scmp.ne.s32.totalorder %s111, %s125
    %p127 = scmp.eq.s32.totalorder %s17, 0
    %p128 = por %p126, %p127
    %s129 = ssub.s32 %s11, %s18
    %p130 = scmp.eq.s32.totalorder %s129, 0
    %s132 = sadd.s32 %s131, 1
    %s133 = scalar_select %p130, %s131, %s132
    %p136 = pneg %p130
    %p137 = scmp.eq.s32.totalorder %s11, 1
    %p138 = por %p136, %p137
    %p139 = scmp.ne.s32.totalorder %s131, %s134
    %p140 = scmp.eq.s32.totalorder %s11, 0
    %p141 = por %p139, %p140
    %p142 = scmp.ne.s32.totalorder %s131, %s134
    %p143 = scmp.eq.s32.totalorder %s16, 1
    %p144 = por %p142, %p143
    %p145 = scmp.ne.s32.totalorder %s134, %s135
    %p146 = scmp.eq.s32.totalorder %s16, 0
    %p147 = por %p145, %p146
    %p148 = scmp.ne.s32.totalorder %s134, %s135
    %p149 = scmp.eq.s32.totalorder %s17, 1
    %p150 = por %p148, %p149
    %p152 = scmp.ne.s32.totalorder %s135, %s151
    %p153 = scmp.eq.s32.totalorder %s17, 0
    %p154 = por %p152, %p153
    %p155 = scmp.le.s32.totalorder 1, %s11
    %p156 = scmp.lt.s32.totalorder %s11, 3
    %p157 = pnand %p155, %p156
    %p158 = pneg %p157
    // Predicated region
    $region9: #{up_block_batch_pallas.6} parent=5 // pred_check
      _
    $region10: #{up_block_batch_pallas.6} parent=5 // pred_check_branch
      %160 = sbr.rel (%p157) target = $region12
    $region11: #{up_block_batch_pallas.6} parent=5 // pred_region
      %s161 = ssub.s32 %s11, 1
      // Predicated region
      $region13: #{up_block_batch_pallas.6} parent=11 // pred_check
        %p162 = pneg %p58
      $region14: #{up_block_batch_pallas.6} parent=11 // pred_check_branch
        %164 = sbr.rel (%p162) target = $region16
      $region15: #{up_block_batch_pallas.6} parent=11 // pred_region
        _
      $region16: #{up_block_batch_pallas.6} parent=11 // pred_fallthru
        _
      // Predicated region
      $region17: #{up_block_batch_pallas.6} parent=11 // pred_check
        %p165 = pneg %p79
      $region18: #{up_block_batch_pallas.6} parent=11 // pred_check_branch
        %167 = sbr.rel (%p165) target = $region20
      $region19: #{up_block_batch_pallas.6} parent=11 // pred_region
        _
      $region20: #{up_block_batch_pallas.6} parent=11 // pred_fallthru
        _
      // Predicated region
      $region21: #{up_block_batch_pallas.6} parent=11 // pred_check
        %p168 = pneg %p100
      $region22: #{up_block_batch_pallas.6} parent=11 // pred_check_branch
        %170 = sbr.rel (%p168) target = $region24
      $region23: #{up_block_batch_pallas.6} parent=11 // pred_region
        _
      $region24: #{up_block_batch_pallas.6} parent=11 // pred_fallthru
        _
      // Predicated region
      $region25: #{up_block_batch_pallas.6} parent=11 // pred_check
        %p171 = pneg %p121
      $region26: #{up_block_batch_pallas.6} parent=11 // pred_check_branch
        %173 = sbr.rel (%p171) target = $region28
      $region27: #{up_block_batch_pallas.6} parent=11 // pred_region
        _
      $region28: #{up_block_batch_pallas.6} parent=11 // pred_fallthru
        _
    $region12: #{up_block_batch_pallas.6} parent=5 // pred_fallthru
      _
    %p174 = scmp.lt.s32.totalorder %s11, 2
    // Predicated region
    $region29: #{up_block_batch_pallas.6} parent=5 // pred_check
      %p175 = pneg %p174
    $region30: #{up_block_batch_pallas.6} parent=5 // pred_check_branch
      %177 = sbr.rel (%p175) target = $region32
    $region31: #{up_block_batch_pallas.6} parent=5 // pred_region
      // Predicated region
      $region33: #{up_block_batch_pallas.6} parent=31 // pred_check
        %p178 = pneg %p31
      $region34: #{up_block_batch_pallas.6} parent=31 // pred_check_branch
        %180 = sbr.rel (%p178) target = $region36
      $region35: #{up_block_batch_pallas.6} parent=31 // pred_region
        %s181 = smul.u32 16, %s11
        %p182 = scmp.lt.s32.totalorder %s181, 31
        %s183 = scalar_select %p182, %s181, 31
        %s184 = smul.addr %s183, 8
        %s185 = scalar_lea.vmem %s0, %s184
        %s186 = smul.u32 16, %s11
      $region36: #{up_block_batch_pallas.6} parent=31 // pred_fallthru
        _
    $region32: #{up_block_batch_pallas.6} parent=5 // pred_fallthru
      _
    %p187 = scmp.le.s32.totalorder 1, %s11
    %p188 = scmp.lt.s32.totalorder %s11, 3
    %p189 = pnand %p187, %p188
    %p190 = pneg %p189
    // Predicated region
    $region37: #{up_block_batch_pallas.6} parent=5 // pred_check
      _
    $region38: #{up_block_batch_pallas.6} parent=5 // pred_check_branch
      %192 = sbr.rel (%p189) target = $region40
    $region39: #{up_block_batch_pallas.6} parent=5 // pred_region
      %s193 = ssub.s32 %s11, 1
      %s194 = smul.u32 16, %s16
      %p195 = scmp.lt.s32.totalorder %s194, 31
      %s196 = scalar_select %p195, %s194, 31
      %s197 = smul.addr %s196, 8
      %s198 = scalar_lea.vmem %s0, %s197
      %p199 = pneg %p37
      %p200 = pneg %p34
      %p201 = pneg %p58
      %p202 = pneg %p55
      %p203 = pneg %p79
      %p204 = pneg %p76
      %p205 = pneg %p100
      %p206 = pneg %p97
      %p207 = pneg %p121
      %p208 = pneg %p118
      %p209 = pneg %p147
      %p210 = pneg %p144
      %s211 = smul.u32 16, %s16
      %p212 = scmp.lt.s32.totalorder %s211, 31
      %s213 = scalar_select %p212, %s211, 31
      %s214 = smul.addr %s213, 8
      %s215 = scalar_lea.vmem %s5, %s214
      %s216 = smul.u32 16, %s16
      %p217 = scmp.lt.s32.totalorder %s216, 31
      %s218 = scalar_select %p217, %s216, 31
      %s219 = smul.addr %s218, 8
      %s220 = scalar_lea.vmem %s0, %s219
      %s221 = smul.u32 16, %s16
      %s222 = smul.u32 16, %s16
      %p223 = scmp.lt.s32.totalorder %s222, 31
      %s224 = scalar_select %p223, %s222, 31
      %s225 = smul.addr %s224, 8
      %s226 = scalar_lea.vmem %s5, %s225
      %s227 = smul.u32 16, %s16
      %v228 = vld [vmem:[%s220] sm:$0xff]
      %v229 = vld [vmem:[%s220 + $0x8] sm:$0xff]
      %v230 = vld [vmem:[%s220 + $0x10] sm:$0xff]
      %v231 = vld [vmem:[%s220 + $0x18] sm:$0xff]
      %v232 = vld [vmem:[%s220 + $0x20] sm:$0xff]
      %v233 = vld [vmem:[%s220 + $0x28] sm:$0xff]
      %v234 = vld [vmem:[%s220 + $0x30] sm:$0xff]
      %v235 = vld [vmem:[%s220 + $0x38] sm:$0xff]
      %v236 = vld [vmem:[%s220 + $0x40] sm:$0xff]
      %v237 = vld [vmem:[%s220 + $0x48] sm:$0xff]
      %v238 = vld [vmem:[%s220 + $0x50] sm:$0xff]
      %v239 = vld [vmem:[%s220 + $0x58] sm:$0xff]
      %v240 = vld [vmem:[%s220 + $0x60] sm:$0xff]
      %v241 = vld [vmem:[%s220 + $0x68] sm:$0xff]
      %v242 = vld [vmem:[%s220 + $0x70] sm:$0xff]
      %v243 = vld [vmem:[%s220 + $0x78] sm:$0xff]
      %v244 = vld [vmem:[%s3] sm:$0x1]
      %v246 = vlaneseq
      %v247 = vshrl.u32 %v246, 7
      %v248 = vsub.s32 0, %v247
      %v249 = vrot.slane %v244, %v248
      %v251 = vmul.f32 %v228, %v249
      %v252 = vmul.f32 %v229, %v249
      %v253 = vmul.f32 %v230, %v249
      %v254 = vmul.f32 %v231, %v249
      %v255 = vmul.f32 %v232, %v249
      %v256 = vmul.f32 %v233, %v249
      %v257 = vmul.f32 %v234, %v249
      %v258 = vmul.f32 %v235, %v249
      %v259 = vmul.f32 %v236, %v249
      %v260 = vmul.f32 %v237, %v249
      %v261 = vmul.f32 %v238, %v249
      %v262 = vmul.f32 %v239, %v249
      %v263 = vmul.f32 %v240, %v249
      %v264 = vmul.f32 %v241, %v249
      %v265 = vmul.f32 %v242, %v249
      %v266 = vmul.f32 %v243, %v249
      %v267 = vld [vmem:[%s4] sm:$0x1]
      %v269 = vlaneseq
      %v270 = vshrl.u32 %v269, 7
      %v271 = vsub.s32 0, %v270
      %v272 = vrot.slane %v267, %v271
      %v274 = vadd.f32 %v251, %v272
      %v275 = vadd.f32 %v252, %v272
      %v276 = vadd.f32 %v253, %v272
      %v277 = vadd.f32 %v254, %v272
      %v278 = vadd.f32 %v255, %v272
      %v279 = vadd.f32 %v256, %v272
      %v280 = vadd.f32 %v257, %v272
      %v281 = vadd.f32 %v258, %v272
      %v282 = vadd.f32 %v259, %v272
      %v283 = vadd.f32 %v260, %v272
      %v284 = vadd.f32 %v261, %v272
      %v285 = vadd.f32 %v262, %v272
      %v286 = vadd.f32 %v263, %v272
      %v287 = vadd.f32 %v264, %v272
      %v288 = vadd.f32 %v265, %v272
      %v289 = vadd.f32 %v266, %v272
      %vm290 = vcmp.ge.f32.partialorder %v274, 0.0
      %vm291 = vcmp.ge.f32.partialorder %v275, 0.0
      %vm292 = vcmp.ge.f32.partialorder %v276, 0.0
      %vm293 = vcmp.ge.f32.partialorder %v277, 0.0
      %vm294 = vcmp.ge.f32.partialorder %v278, 0.0
      %vm295 = vcmp.ge.f32.partialorder %v279, 0.0
      %vm296 = vcmp.ge.f32.partialorder %v280, 0.0
      %vm297 = vcmp.ge.f32.partialorder %v281, 0.0
      %vm298 = vcmp.ge.f32.partialorder %v282, 0.0
      %vm299 = vcmp.ge.f32.partialorder %v283, 0.0
      %vm300 = vcmp.ge.f32.partialorder %v284, 0.0
      %vm301 = vcmp.ge.f32.partialorder %v285, 0.0
      %vm302 = vcmp.ge.f32.partialorder %v286, 0.0
      %vm303 = vcmp.ge.f32.partialorder %v287, 0.0
      %vm304 = vcmp.ge.f32.partialorder %v288, 0.0
      %vm305 = vcmp.ge.f32.partialorder %v289, 0.0
      %v306 = vmul.f32 %v274, 0.2
      %v307 = vmul.f32 %v275, 0.2
      %v308 = vmul.f32 %v276, 0.2
      %v309 = vmul.f32 %v277, 0.2
      %v310 = vmul.f32 %v278, 0.2
      %v311 = vmul.f32 %v279, 0.2
      %v312 = vmul.f32 %v280, 0.2
      %v313 = vmul.f32 %v281, 0.2
      %v314 = vmul.f32 %v282, 0.2
      %v315 = vmul.f32 %v283, 0.2
      %v316 = vmul.f32 %v284, 0.2
      %v317 = vmul.f32 %v285, 0.2
      %v318 = vmul.f32 %v286, 0.2
      %v319 = vmul.f32 %v287, 0.2
      %v320 = vmul.f32 %v288, 0.2
      %v321 = vmul.f32 %v289, 0.2
      %v322 = vsel %vm290, %v274, %v306
      %v323 = vsel %vm291, %v275, %v307
      %v324 = vsel %vm292, %v276, %v308
      %v325 = vsel %vm293, %v277, %v309
      %v326 = vsel %vm294, %v278, %v310
      %v327 = vsel %vm295, %v279, %v311
      %v328 = vsel %vm296, %v280, %v312
      %v329 = vsel %vm297, %v281, %v313
      %v330 = vsel %vm298, %v282, %v314
      %v331 = vsel %vm299, %v283, %v315
      %v332 = vsel %vm300, %v284, %v316
      %v333 = vsel %vm301, %v285, %v317
      %v334 = vsel %vm302, %v286, %v318
      %v335 = vsel %vm303, %v287, %v319
      %v336 = vsel %vm304, %v288, %v320
      %v337 = vsel %vm305, %v289, %v321
      %v338 = vld [vmem:[%s1] sm:$0xff]
      %v339 = vld [vmem:[%s1 + $0x8] sm:$0xff]
      %v340 = vld [vmem:[%s1 + $0x10] sm:$0xff]
      %v341 = vld [vmem:[%s1 + $0x18] sm:$0xff]
      %v342 = vld [vmem:[%s1 + $0x20] sm:$0xff]
      %v343 = vld [vmem:[%s1 + $0x28] sm:$0xff]
      %v344 = vld [vmem:[%s1 + $0x30] sm:$0xff]
      %v345 = vld [vmem:[%s2] sm:$0x1]
      %v347 = vlaneseq
      %v348 = vshrl.u32 %v347, 7
      %v349 = vsub.s32 0, %v348
      %v350 = vrot.slane %v345, %v349
      %vm352 = vcmask 457728
      %v354 = vsel %vm352, %v322, 0
      %v357 = vsel %vm352, %v323, 0
      %v360 = vsel %vm352, %v324, 0
      %v363 = vsel %vm352, %v325, 0
      %v366 = vsel %vm352, %v326, 0
      %v369 = vsel %vm352, %v327, 0
      %v372 = vsel %vm352, %v328, 0
      %v375 = vsel %vm352, %v329, 0
      %v378 = vsel %vm352, %v330, 0
      %v381 = vsel %vm352, %v331, 0
      %v384 = vsel %vm352, %v332, 0
      %v387 = vsel %vm352, %v333, 0
      %v390 = vsel %vm352, %v334, 0
      %v393 = vsel %vm352, %v335, 0
      %v396 = vsel %vm352, %v336, 0
      %v399 = vsel %vm352, %v337, 0
      %401 = vmatprep.subr.mxu0 0.0
      %402 = vmatpush1.msra.mxu0 0.0
      %403 = vmatprep.subr.mxu0 0.0
      %404 = vmatpush1.msra.mxu0 0.0
      %405 = vmatprep.subr.mxu0 0.0
      %406 = vmatpush1.msra.mxu0 0.0
      %407 = vmatprep.subr.mxu0 0.0
      %408 = vmatpush1.msra.mxu0 0.0
      %409 = vmatprep.subr.mxu0 0.0
      %410 = vmatpush1.msra.mxu0 0.0
      %411 = vmatprep.subr.mxu0 0.0
      %412 = vmatpush1.msra.mxu0 0.0
      %413 = vmatprep.subr.mxu0 0.0
      %414 = vmatpush1.msra.mxu0 0.0
      %415 = vmatprep.subr.mxu0 0.0
      %416 = vmatpush1.msra.mxu0 0.0
      %417 = vmatprep.subr.mxu0 0.0
      %418 = vmatpush1.msra.mxu0 0.0
      %419 = vmatprep.subr.mxu0 0.0
      %v420 = vand.u32 %v344, 4294901760
      %421 = vmatpush1.msra.mxu0 %v420
      %422 = vmatprep.subr.mxu0 0.0
      %v423 = vand.u32 %v343, 4294901760
      %424 = vmatpush1.msra.mxu0 %v423
      %425 = vmatprep.subr.mxu0 0.0
      %v426 = vand.u32 %v342, 4294901760
      %427 = vmatpush1.msra.mxu0 %v426
      %428 = vmatprep.subr.mxu0 0.0
      %v429 = vand.u32 %v341, 4294901760
      %430 = vmatpush1.msra.mxu0 %v429
      %431 = vmatprep.subr.mxu0 0.0
      %v432 = vand.u32 %v340, 4294901760
      %433 = vmatpush1.msra.mxu0 %v432
      %434 = vmatprep.subr.mxu0 0.0
      %v435 = vand.u32 %v339, 4294901760
      %436 = vmatpush1.msra.mxu0 %v435
      %437 = vmatprep.subr.mxu0 0.0
      %v438 = vand.u32 %v338, 4294901760
      %439 = vmatpush1.msra.mxu0 %v438
      %440 = vmatprep.subr.mxu0 0.0
      %441 = vmatpush2.msra.mxu0 0.0
      %442 = vmatprep.subr.mxu0 0.0
      %443 = vmatpush2.msra.mxu0 0.0
      %444 = vmatprep.subr.mxu0 0.0
      %445 = vmatpush2.msra.mxu0 0.0
      %446 = vmatprep.subr.mxu0 0.0
      %447 = vmatpush2.msra.mxu0 0.0
      %448 = vmatprep.subr.mxu0 0.0
      %449 = vmatpush2.msra.mxu0 0.0
      %450 = vmatprep.subr.mxu0 0.0
      %451 = vmatpush2.msra.mxu0 0.0
      %452 = vmatprep.subr.mxu0 0.0
      %453 = vmatpush2.msra.mxu0 0.0
      %454 = vmatprep.subr.mxu0 0.0
      %455 = vmatpush2.msra.mxu0 0.0
      %456 = vmatprep.subr.mxu0 0.0
      %457 = vmatpush2.msra.mxu0 0.0
      %458 = vmatprep.subr.mxu0 0.0
      %459 = vmatpush2.msra.mxu0 0.0
      %460 = vmatprep.subr.mxu0 0.0
      %461 = vmatpush2.msra.mxu0 0.0
      %462 = vmatprep.subr.mxu0 0.0
      %463 = vmatpush2.msra.mxu0 0.0
      %464 = vmatprep.subr.mxu0 0.0
      %465 = vmatpush2.msra.mxu0 0.0
      %466 = vmatprep.subr.mxu0 0.0
      %467 = vmatpush2.msra.mxu0 0.0
      %468 = vmatprep.subr.mxu0 0.0
      %469 = vmatpush2.msra.mxu0 0.0
      %470 = vmatprep.subr.mxu0 0.0
      %471 = vmatpush2.msra.mxu0 0.0
      %472 = vmatprep.mubr.f32.mxu0 0.0
      %v473 = vand.u32 %v354, 4294901760
      %v474 = vsub.f32 %v354, %v473
      %v475 = vand.u32 %v474, 4294901760
      %v476 = vsub.f32 %v474, %v475
      %v477 = vand.u32 %v476, 4294901760
      %478 = vmatmul.mubr.f32.gmra.mxu0 %v477
      %v479 = vpop.f32.mrf.mxu0
      %v480 = vadd.f32 %v350, %v479
      %v481 = vpop.f32.mrf.mxu0
      %482 = vmatprep.mubr.f32.mxu0 0.0
      %v483 = vand.u32 %v357, 4294901760
      %v484 = vsub.f32 %v357, %v483
      %v485 = vand.u32 %v484, 4294901760
      %v486 = vsub.f32 %v484, %v485
      %v487 = vand.u32 %v486, 4294901760
      %488 = vmatmul.mubr.f32.gmra.mxu0 %v487
      %v489 = vpop.f32.mrf.mxu0
      %v490 = vadd.f32 %v350, %v489
      %v491 = vpop.f32.mrf.mxu0
      %492 = vmatprep.mubr.f32.mxu0 0.0
      %v493 = vand.u32 %v360, 4294901760
      %v494 = vsub.f32 %v360, %v493
      %v495 = vand.u32 %v494, 4294901760
      %v496 = vsub.f32 %v494, %v495
      %v497 = vand.u32 %v496, 4294901760
      %498 = vmatmul.mubr.f32.gmra.mxu0 %v497
      %v499 = vpop.f32.mrf.mxu0
      %v500 = vadd.f32 %v350, %v499
      %v501 = vpop.f32.mrf.mxu0
      %502 = vmatprep.mubr.f32.mxu0 0.0
      %v503 = vand.u32 %v363, 4294901760
      %v504 = vsub.f32 %v363, %v503
      %v505 = vand.u32 %v504, 4294901760
      %v506 = vsub.f32 %v504, %v505
      %v507 = vand.u32 %v506, 4294901760
      %508 = vmatmul.mubr.f32.gmra.mxu0 %v507
      %v509 = vpop.f32.mrf.mxu0
      %v510 = vadd.f32 %v350, %v509
      %v511 = vpop.f32.mrf.mxu0
      %512 = vmatprep.mubr.f32.mxu0 0.0
      %v513 = vand.u32 %v366, 4294901760
      %v514 = vsub.f32 %v366, %v513
      %v515 = vand.u32 %v514, 4294901760
      %v516 = vsub.f32 %v514, %v515
      %v517 = vand.u32 %v516, 4294901760
      %518 = vmatmul.mubr.f32.gmra.mxu0 %v517
      %v519 = vpop.f32.mrf.mxu0
      %v520 = vadd.f32 %v350, %v519
      %v521 = vpop.f32.mrf.mxu0
      %522 = vmatprep.mubr.f32.mxu0 0.0
      %v523 = vand.u32 %v369, 4294901760
      %v524 = vsub.f32 %v369, %v523
      %v525 = vand.u32 %v524, 4294901760
      %v526 = vsub.f32 %v524, %v525
      %v527 = vand.u32 %v526, 4294901760
      %528 = vmatmul.mubr.f32.gmra.mxu0 %v527
      %v529 = vpop.f32.mrf.mxu0
      %v530 = vadd.f32 %v350, %v529
      %v531 = vpop.f32.mrf.mxu0
      %532 = vmatprep.mubr.f32.mxu0 0.0
      %v533 = vand.u32 %v372, 4294901760
      %v534 = vsub.f32 %v372, %v533
      %v535 = vand.u32 %v534, 4294901760
      %v536 = vsub.f32 %v534, %v535
      %v537 = vand.u32 %v536, 4294901760
      %538 = vmatmul.mubr.f32.gmra.mxu0 %v537
      %v539 = vpop.f32.mrf.mxu0
      %v540 = vadd.f32 %v350, %v539
      %v541 = vpop.f32.mrf.mxu0
      %542 = vmatprep.mubr.f32.mxu0 0.0
      %v543 = vand.u32 %v375, 4294901760
      %v544 = vsub.f32 %v375, %v543
      %v545 = vand.u32 %v544, 4294901760
      %v546 = vsub.f32 %v544, %v545
      %v547 = vand.u32 %v546, 4294901760
      %548 = vmatmul.mubr.f32.gmra.mxu0 %v547
      %v549 = vpop.f32.mrf.mxu0
      %v550 = vadd.f32 %v350, %v549
      %v551 = vpop.f32.mrf.mxu0
      %552 = vmatprep.mubr.f32.mxu0 0.0
      %v553 = vand.u32 %v378, 4294901760
      %v554 = vsub.f32 %v378, %v553
      %v555 = vand.u32 %v554, 4294901760
      %v556 = vsub.f32 %v554, %v555
      %v557 = vand.u32 %v556, 4294901760
      %558 = vmatmul.mubr.f32.gmra.mxu0 %v557
      %v559 = vpop.f32.mrf.mxu0
      %v560 = vadd.f32 %v350, %v559
      %v561 = vpop.f32.mrf.mxu0
      %562 = vmatprep.mubr.f32.mxu0 0.0
      %v563 = vand.u32 %v381, 4294901760
      %v564 = vsub.f32 %v381, %v563
      %v565 = vand.u32 %v564, 4294901760
      %v566 = vsub.f32 %v564, %v565
      %v567 = vand.u32 %v566, 4294901760
      %568 = vmatmul.mubr.f32.gmra.mxu0 %v567
      %v569 = vpop.f32.mrf.mxu0
      %v570 = vadd.f32 %v350, %v569
      %v571 = vpop.f32.mrf.mxu0
      %572 = vmatprep.mubr.f32.mxu0 0.0
      %v573 = vand.u32 %v384, 4294901760
      %v574 = vsub.f32 %v384, %v573
      %v575 = vand.u32 %v574, 4294901760
      %v576 = vsub.f32 %v574, %v575
      %v577 = vand.u32 %v576, 4294901760
      %578 = vmatmul.mubr.f32.gmra.mxu0 %v577
      %v579 = vpop.f32.mrf.mxu0
      %v580 = vadd.f32 %v350, %v579
      %v581 = vpop.f32.mrf.mxu0
      %582 = vmatprep.mubr.f32.mxu0 0.0
      %v583 = vand.u32 %v387, 4294901760
      %v584 = vsub.f32 %v387, %v583
      %v585 = vand.u32 %v584, 4294901760
      %v586 = vsub.f32 %v584, %v585
      %v587 = vand.u32 %v586, 4294901760
      %588 = vmatmul.mubr.f32.gmra.mxu0 %v587
      %v589 = vpop.f32.mrf.mxu0
      %v590 = vadd.f32 %v350, %v589
      %v591 = vpop.f32.mrf.mxu0
      %592 = vmatprep.mubr.f32.mxu0 0.0
      %v593 = vand.u32 %v390, 4294901760
      %v594 = vsub.f32 %v390, %v593
      %v595 = vand.u32 %v594, 4294901760
      %v596 = vsub.f32 %v594, %v595
      %v597 = vand.u32 %v596, 4294901760
      %598 = vmatmul.mubr.f32.gmra.mxu0 %v597
      %v599 = vpop.f32.mrf.mxu0
      %v600 = vadd.f32 %v350, %v599
      %v601 = vpop.f32.mrf.mxu0
      %602 = vmatprep.mubr.f32.mxu0 0.0
      %v603 = vand.u32 %v393, 4294901760
      %v604 = vsub.f32 %v393, %v603
      %v605 = vand.u32 %v604, 4294901760
      %v606 = vsub.f32 %v604, %v605
      %v607 = vand.u32 %v606, 4294901760
      %608 = vmatmul.mubr.f32.gmra.mxu0 %v607
      %v609 = vpop.f32.mrf.mxu0
      %v610 = vadd.f32 %v350, %v609
      %v611 = vpop.f32.mrf.mxu0
      %612 = vmatprep.mubr.f32.mxu0 0.0
      %v613 = vand.u32 %v396, 4294901760
      %v614 = vsub.f32 %v396, %v613
      %v615 = vand.u32 %v614, 4294901760
      %v616 = vsub.f32 %v614, %v615
      %v617 = vand.u32 %v616, 4294901760
      %618 = vmatmul.mubr.f32.gmra.mxu0 %v617
      %v619 = vpop.f32.mrf.mxu0
      %v620 = vadd.f32 %v350, %v619
      %v621 = vpop.f32.mrf.mxu0
      %622 = vmatprep.mubr.f32.mxu0 0.0
      %v623 = vand.u32 %v399, 4294901760
      %v624 = vsub.f32 %v399, %v623
      %v625 = vand.u32 %v624, 4294901760
      %v626 = vsub.f32 %v624, %v625
      %v627 = vand.u32 %v626, 4294901760
      %628 = vmatmul.mubr.f32.gmra.mxu0 %v627
      %v629 = vpop.f32.mrf.mxu0
      %v630 = vadd.f32 %v350, %v629
      %v631 = vpop.f32.mrf.mxu0
      %632 = vdwg.mxu0
      %633 = vmatprep.subr.mxu0 0.0
      %634 = vmatpush1.msra.mxu0 0.0
      %635 = vmatprep.subr.mxu0 0.0
      %636 = vmatpush1.msra.mxu0 0.0
      %637 = vmatprep.subr.mxu0 0.0
      %638 = vmatpush1.msra.mxu0 0.0
      %639 = vmatprep.subr.mxu0 0.0
      %640 = vmatpush1.msra.mxu0 0.0
      %641 = vmatprep.subr.mxu0 0.0
      %642 = vmatpush1.msra.mxu0 0.0
      %643 = vmatprep.subr.mxu0 0.0
      %644 = vmatpush1.msra.mxu0 0.0
      %645 = vmatprep.subr.mxu0 0.0
      %646 = vmatpush1.msra.mxu0 0.0
      %647 = vmatprep.subr.mxu0 0.0
      %648 = vmatpush1.msra.mxu0 0.0
      %649 = vmatprep.subr.mxu0 0.0
      %650 = vmatpush1.msra.mxu0 0.0
      %651 = vmatprep.subr.mxu0 0.0
      %v652 = vand.u32 %v344, 4294901760
      %v653 = vsub.f32 %v344, %v652
      %v654 = vand.u32 %v653, 4294901760
      %v655 = vsub.f32 %v653, %v654
      %v656 = vand.u32 %v655, 4294901760
      %657 = vmatpush1.msra.mxu0 %v656
      %658 = vmatprep.subr.mxu0 0.0
      %v659 = vand.u32 %v343, 4294901760
      %v660 = vsub.f32 %v343, %v659
      %v661 = vand.u32 %v660, 4294901760
      %v662 = vsub.f32 %v660, %v661
      %v663 = vand.u32 %v662, 4294901760
      %664 = vmatpush1.msra.mxu0 %v663
      %665 = vmatprep.subr.mxu0 0.0
      %v666 = vand.u32 %v342, 4294901760
      %v667 = vsub.f32 %v342, %v666
      %v668 = vand.u32 %v667, 4294901760
      %v669 = vsub.f32 %v667, %v668
      %v670 = vand.u32 %v669, 4294901760
      %671 = vmatpush1.msra.mxu0 %v670
      %672 = vmatprep.subr.mxu0 0.0
      %v673 = vand.u32 %v341, 4294901760
      %v674 = vsub.f32 %v341, %v673
      %v675 = vand.u32 %v674, 4294901760
      %v676 = vsub.f32 %v674, %v675
      %v677 = vand.u32 %v676, 4294901760
      %678 = vmatpush1.msra.mxu0 %v677
      %679 = vmatprep.subr.mxu0 0.0
      %v680 = vand.u32 %v340, 4294901760
      %v681 = vsub.f32 %v340, %v680
      %v682 = vand.u32 %v681, 4294901760
      %v683 = vsub.f32 %v681, %v682
      %v684 = vand.u32 %v683, 4294901760
      %685 = vmatpush1.msra.mxu0 %v684
      %686 = vmatprep.subr.mxu0 0.0
      %v687 = vand.u32 %v339, 4294901760
      %v688 = vsub.f32 %v339, %v687
      %v689 = vand.u32 %v688, 4294901760
      %v690 = vsub.f32 %v688, %v689
      %v691 = vand.u32 %v690, 4294901760
      %692 = vmatpush1.msra.mxu0 %v691
      %693 = vmatprep.subr.mxu0 0.0
      %v694 = vand.u32 %v338, 4294901760
      %v695 = vsub.f32 %v338, %v694
      %v696 = vand.u32 %v695, 4294901760
      %v697 = vsub.f32 %v695, %v696
      %v698 = vand.u32 %v697, 4294901760
      %699 = vmatpush1.msra.mxu0 %v698
      %700 = vmatprep.subr.mxu0 0.0
      %701 = vmatpush2.msra.mxu0 0.0
      %702 = vmatprep.subr.mxu0 0.0
      %703 = vmatpush2.msra.mxu0 0.0
      %704 = vmatprep.subr.mxu0 0.0
      %705 = vmatpush2.msra.mxu0 0.0
      %706 = vmatprep.subr.mxu0 0.0
      %707 = vmatpush2.msra.mxu0 0.0
      %708 = vmatprep.subr.mxu0 0.0
      %709 = vmatpush2.msra.mxu0 0.0
      %710 = vmatprep.subr.mxu0 0.0
      %711 = vmatpush2.msra.mxu0 0.0
      %712 = vmatprep.subr.mxu0 0.0
      %713 = vmatpush2.msra.mxu0 0.0
      %714 = vmatprep.subr.mxu0 0.0
      %715 = vmatpush2.msra.mxu0 0.0
      %716 = vmatprep.subr.mxu0 0.0
      %717 = vmatpush2.msra.mxu0 0.0
      %718 = vmatprep.subr.mxu0 0.0
      %719 = vmatpush2.msra.mxu0 0.0
      %720 = vmatprep.subr.mxu0 0.0
      %721 = vmatpush2.msra.mxu0 0.0
      %722 = vmatprep.subr.mxu0 0.0
      %723 = vmatpush2.msra.mxu0 0.0
      %724 = vmatprep.subr.mxu0 0.0
      %725 = vmatpush2.msra.mxu0 0.0
      %726 = vmatprep.subr.mxu0 0.0
      %727 = vmatpush2.msra.mxu0 0.0
      %728 = vmatprep.subr.mxu0 0.0
      %729 = vmatpush2.msra.mxu0 0.0
      %730 = vmatprep.subr.mxu0 0.0
      %731 = vmatpush2.msra.mxu0 0.0
      %732 = vmatprep.mubr.f32.mxu0 0.0
      %v733 = vand.u32 %v354, 4294901760
      %734 = vmatmul.mubr.f32.gmra.mxu0 %v733
      %v735 = vpop.f32.mrf.mxu0
      %v736 = vadd.f32 %v480, %v735
      %v737 = vpop.f32.mrf.mxu0
      %738 = vmatprep.mubr.f32.mxu0 0.0
      %v739 = vand.u32 %v357, 4294901760
      %740 = vmatmul.mubr.f32.gmra.mxu0 %v739
      %v741 = vpop.f32.mrf.mxu0
      %v742 = vadd.f32 %v490, %v741
      %v743 = vpop.f32.mrf.mxu0
      %744 = vmatprep.mubr.f32.mxu0 0.0
      %v745 = vand.u32 %v360, 4294901760
      %746 = vmatmul.mubr.f32.gmra.mxu0 %v745
      %v747 = vpop.f32.mrf.mxu0
      %v748 = vadd.f32 %v500, %v747
      %v749 = vpop.f32.mrf.mxu0
      %750 = vmatprep.mubr.f32.mxu0 0.0
      %v751 = vand.u32 %v363, 4294901760
      %752 = vmatmul.mubr.f32.gmra.mxu0 %v751
      %v753 = vpop.f32.mrf.mxu0
      %v754 = vadd.f32 %v510, %v753
      %v755 = vpop.f32.mrf.mxu0
      %756 = vmatprep.mubr.f32.mxu0 0.0
      %v757 = vand.u32 %v366, 4294901760
      %758 = vmatmul.mubr.f32.gmra.mxu0 %v757
      %v759 = vpop.f32.mrf.mxu0
      %v760 = vadd.f32 %v520, %v759
      %v761 = vpop.f32.mrf.mxu0
      %762 = vmatprep.mubr.f32.mxu0 0.0
      %v763 = vand.u32 %v369, 4294901760
      %764 = vmatmul.mubr.f32.gmra.mxu0 %v763
      %v765 = vpop.f32.mrf.mxu0
      %v766 = vadd.f32 %v530, %v765
      %v767 = vpop.f32.mrf.mxu0
      %768 = vmatprep.mubr.f32.mxu0 0.0
      %v769 = vand.u32 %v372, 4294901760
      %770 = vmatmul.mubr.f32.gmra.mxu0 %v769
      %v771 = vpop.f32.mrf.mxu0
      %v772 = vadd.f32 %v540, %v771
      %v773 = vpop.f32.mrf.mxu0
      %774 = vmatprep.mubr.f32.mxu0 0.0
      %v775 = vand.u32 %v375, 4294901760
      %776 = vmatmul.mubr.f32.gmra.mxu0 %v775
      %v777 = vpop.f32.mrf.mxu0
      %v778 = vadd.f32 %v550, %v777
      %v779 = vpop.f32.mrf.mxu0
      %780 = vmatprep.mubr.f32.mxu0 0.0
      %v781 = vand.u32 %v378, 4294901760
      %782 = vmatmul.mubr.f32.gmra.mxu0 %v781
      %v783 = vpop.f32.mrf.mxu0
      %v784 = vadd.f32 %v560, %v783
      %v785 = vpop.f32.mrf.mxu0
      %786 = vmatprep.mubr.f32.mxu0 0.0
      %v787 = vand.u32 %v381, 4294901760
      %788 = vmatmul.mubr.f32.gmra.mxu0 %v787
      %v789 = vpop.f32.mrf.mxu0
      %v790 = vadd.f32 %v570, %v789
      %v791 = vpop.f32.mrf.mxu0
      %792 = vmatprep.mubr.f32.mxu0 0.0
      %v793 = vand.u32 %v384, 4294901760
      %794 = vmatmul.mubr.f32.gmra.mxu0 %v793
      %v795 = vpop.f32.mrf.mxu0
      %v796 = vadd.f32 %v580, %v795
      %v797 = vpop.f32.mrf.mxu0
      %798 = vmatprep.mubr.f32.mxu0 0.0
      %v799 = vand.u32 %v387, 4294901760
      %800 = vmatmul.mubr.f32.gmra.mxu0 %v799
      %v801 = vpop.f32.mrf.mxu0
      %v802 = vadd.f32 %v590, %v801
      %v803 = vpop.f32.mrf.mxu0
      %804 = vmatprep.mubr.f32.mxu0 0.0
      %v805 = vand.u32 %v390, 4294901760
      %806 = vmatmul.mubr.f32.gmra.mxu0 %v805
      %v807 = vpop.f32.mrf.mxu0
      %v808 = vadd.f32 %v600, %v807
      %v809 = vpop.f32.mrf.mxu0
      %810 = vmatprep.mubr.f32.mxu0 0.0
      %v811 = vand.u32 %v393, 4294901760
      %812 = vmatmul.mubr.f32.gmra.mxu0 %v811
      %v813 = vpop.f32.mrf.mxu0
      %v814 = vadd.f32 %v610, %v813
      %v815 = vpop.f32.mrf.mxu0
      %816 = vmatprep.mubr.f32.mxu0 0.0
      %v817 = vand.u32 %v396, 4294901760
      %818 = vmatmul.mubr.f32.gmra.mxu0 %v817
      %v819 = vpop.f32.mrf.mxu0
      %v820 = vadd.f32 %v620, %v819
      %v821 = vpop.f32.mrf.mxu0
      %822 = vmatprep.mubr.f32.mxu0 0.0
      %v823 = vand.u32 %v399, 4294901760
      %824 = vmatmul.mubr.f32.gmra.mxu0 %v823
      %v825 = vpop.f32.mrf.mxu0
      %v826 = vadd.f32 %v630, %v825
      %v827 = vpop.f32.mrf.mxu0
      %828 = vdwg.mxu0
      %829 = vmatprep.subr.mxu0 0.0
      %830 = vmatpush1.msra.mxu0 0.0
      %831 = vmatprep.subr.mxu0 0.0
      %832 = vmatpush1.msra.mxu0 0.0
      %833 = vmatprep.subr.mxu0 0.0
      %834 = vmatpush1.msra.mxu0 0.0
      %835 = vmatprep.subr.mxu0 0.0
      %836 = vmatpush1.msra.mxu0 0.0
      %837 = vmatprep.subr.mxu0 0.0
      %838 = vmatpush1.msra.mxu0 0.0
      %839 = vmatprep.subr.mxu0 0.0
      %840 = vmatpush1.msra.mxu0 0.0
      %841 = vmatprep.subr.mxu0 0.0
      %842 = vmatpush1.msra.mxu0 0.0
      %843 = vmatprep.subr.mxu0 0.0
      %844 = vmatpush1.msra.mxu0 0.0
      %845 = vmatprep.subr.mxu0 0.0
      %846 = vmatpush1.msra.mxu0 0.0
      %847 = vmatprep.subr.mxu0 0.0
      %v848 = vand.u32 %v344, 4294901760
      %v849 = vsub.f32 %v344, %v848
      %850 = vmatpush1.msra.mxu0 %v849
      %851 = vmatprep.subr.mxu0 0.0
      %v852 = vand.u32 %v343, 4294901760
      %v853 = vsub.f32 %v343, %v852
      %854 = vmatpush1.msra.mxu0 %v853
      %855 = vmatprep.subr.mxu0 0.0
      %v856 = vand.u32 %v342, 4294901760
      %v857 = vsub.f32 %v342, %v856
      %858 = vmatpush1.msra.mxu0 %v857
      %859 = vmatprep.subr.mxu0 0.0
      %v860 = vand.u32 %v341, 4294901760
      %v861 = vsub.f32 %v341, %v860
      %862 = vmatpush1.msra.mxu0 %v861
      %863 = vmatprep.subr.mxu0 0.0
      %v864 = vand.u32 %v340, 4294901760
      %v865 = vsub.f32 %v340, %v864
      %866 = vmatpush1.msra.mxu0 %v865
      %867 = vmatprep.subr.mxu0 0.0
      %v868 = vand.u32 %v339, 4294901760
      %v869 = vsub.f32 %v339, %v868
      %870 = vmatpush1.msra.mxu0 %v869
      %871 = vmatprep.subr.mxu0 0.0
      %v872 = vand.u32 %v338, 4294901760
      %v873 = vsub.f32 %v338, %v872
      %874 = vmatpush1.msra.mxu0 %v873
      %875 = vmatprep.subr.mxu0 0.0
      %876 = vmatpush2.msra.mxu0 0.0
      %877 = vmatprep.subr.mxu0 0.0
      %878 = vmatpush2.msra.mxu0 0.0
      %879 = vmatprep.subr.mxu0 0.0
      %880 = vmatpush2.msra.mxu0 0.0
      %881 = vmatprep.subr.mxu0 0.0
      %882 = vmatpush2.msra.mxu0 0.0
      %883 = vmatprep.subr.mxu0 0.0
      %884 = vmatpush2.msra.mxu0 0.0
      %885 = vmatprep.subr.mxu0 0.0
      %886 = vmatpush2.msra.mxu0 0.0
      %887 = vmatprep.subr.mxu0 0.0
      %888 = vmatpush2.msra.mxu0 0.0
      %889 = vmatprep.subr.mxu0 0.0
      %890 = vmatpush2.msra.mxu0 0.0
      %891 = vmatprep.subr.mxu0 0.0
      %892 = vmatpush2.msra.mxu0 0.0
      %893 = vmatprep.subr.mxu0 0.0
      %894 = vmatpush2.msra.mxu0 0.0
      %895 = vmatprep.subr.mxu0 0.0
      %896 = vmatpush2.msra.mxu0 0.0
      %897 = vmatprep.subr.mxu0 0.0
      %898 = vmatpush2.msra.mxu0 0.0
      %899 = vmatprep.subr.mxu0 0.0
      %900 = vmatpush2.msra.mxu0 0.0
      %901 = vmatprep.subr.mxu0 0.0
      %902 = vmatpush2.msra.mxu0 0.0
      %903 = vmatprep.subr.mxu0 0.0
      %904 = vmatpush2.msra.mxu0 0.0
      %905 = vmatprep.subr.mxu0 0.0
      %906 = vmatpush2.msra.mxu0 0.0
      %907 = vmatprep.mubr.f32.mxu0 0.0
      %v908 = vand.u32 %v354, 4294901760
      %v909 = vsub.f32 %v354, %v908
      %910 = vmatmul.mubr.f32.gmra.mxu0 %v909
      %v911 = vpop.f32.mrf.mxu0
      %v912 = vadd.f32 %v736, %v911
      %v913 = vpop.f32.mrf.mxu0
      %914 = vmatprep.mubr.f32.mxu0 0.0
      %v915 = vand.u32 %v357, 4294901760
      %v916 = vsub.f32 %v357, %v915
      %917 = vmatmul.mubr.f32.gmra.mxu0 %v916
      %v918 = vpop.f32.mrf.mxu0
      %v919 = vadd.f32 %v742, %v918
      %v920 = vpop.f32.mrf.mxu0
      %921 = vmatprep.mubr.f32.mxu0 0.0
      %v922 = vand.u32 %v360, 4294901760
      %v923 = vsub.f32 %v360, %v922
      %924 = vmatmul.mubr.f32.gmra.mxu0 %v923
      %v925 = vpop.f32.mrf.mxu0
      %v926 = vadd.f32 %v748, %v925
      %v927 = vpop.f32.mrf.mxu0
      %928 = vmatprep.mubr.f32.mxu0 0.0
      %v929 = vand.u32 %v363, 4294901760
      %v930 = vsub.f32 %v363, %v929
      %931 = vmatmul.mubr.f32.gmra.mxu0 %v930
      %v932 = vpop.f32.mrf.mxu0
      %v933 = vadd.f32 %v754, %v932
      %v934 = vpop.f32.mrf.mxu0
      %935 = vmatprep.mubr.f32.mxu0 0.0
      %v936 = vand.u32 %v366, 4294901760
      %v937 = vsub.f32 %v366, %v936
      %938 = vmatmul.mubr.f32.gmra.mxu0 %v937
      %v939 = vpop.f32.mrf.mxu0
      %v940 = vadd.f32 %v760, %v939
      %v941 = vpop.f32.mrf.mxu0
      %942 = vmatprep.mubr.f32.mxu0 0.0
      %v943 = vand.u32 %v369, 4294901760
      %v944 = vsub.f32 %v369, %v943
      %945 = vmatmul.mubr.f32.gmra.mxu0 %v944
      %v946 = vpop.f32.mrf.mxu0
      %v947 = vadd.f32 %v766, %v946
      %v948 = vpop.f32.mrf.mxu0
      %949 = vmatprep.mubr.f32.mxu0 0.0
      %v950 = vand.u32 %v372, 4294901760
      %v951 = vsub.f32 %v372, %v950
      %952 = vmatmul.mubr.f32.gmra.mxu0 %v951
      %v953 = vpop.f32.mrf.mxu0
      %v954 = vadd.f32 %v772, %v953
      %v955 = vpop.f32.mrf.mxu0
      %956 = vmatprep.mubr.f32.mxu0 0.0
      %v957 = vand.u32 %v375, 4294901760
      %v958 = vsub.f32 %v375, %v957
      %959 = vmatmul.mubr.f32.gmra.mxu0 %v958
      %v960 = vpop.f32.mrf.mxu0
      %v961 = vadd.f32 %v778, %v960
      %v962 = vpop.f32.mrf.mxu0
      %963 = vmatprep.mubr.f32.mxu0 0.0
      %v964 = vand.u32 %v378, 4294901760
      %v965 = vsub.f32 %v378, %v964
      %966 = vmatmul.mubr.f32.gmra.mxu0 %v965
      %v967 = vpop.f32.mrf.mxu0
      %v968 = vadd.f32 %v784, %v967
      %v969 = vpop.f32.mrf.mxu0
      %970 = vmatprep.mubr.f32.mxu0 0.0
      %v971 = vand.u32 %v381, 4294901760
      %v972 = vsub.f32 %v381, %v971
      %973 = vmatmul.mubr.f32.gmra.mxu0 %v972
      %v974 = vpop.f32.mrf.mxu0
      %v975 = vadd.f32 %v790, %v974
      %v976 = vpop.f32.mrf.mxu0
      %977 = vmatprep.mubr.f32.mxu0 0.0
      %v978 = vand.u32 %v384, 4294901760
      %v979 = vsub.f32 %v384, %v978
      %980 = vmatmul.mubr.f32.gmra.mxu0 %v979
      %v981 = vpop.f32.mrf.mxu0
      %v982 = vadd.f32 %v796, %v981
      %v983 = vpop.f32.mrf.mxu0
      %984 = vmatprep.mubr.f32.mxu0 0.0
      %v985 = vand.u32 %v387, 4294901760
      %v986 = vsub.f32 %v387, %v985
      %987 = vmatmul.mubr.f32.gmra.mxu0 %v986
      %v988 = vpop.f32.mrf.mxu0
      %v989 = vadd.f32 %v802, %v988
      %v990 = vpop.f32.mrf.mxu0
      %991 = vmatprep.mubr.f32.mxu0 0.0
      %v992 = vand.u32 %v390, 4294901760
      %v993 = vsub.f32 %v390, %v992
      %994 = vmatmul.mubr.f32.gmra.mxu0 %v993
      %v995 = vpop.f32.mrf.mxu0
      %v996 = vadd.f32 %v808, %v995
      %v997 = vpop.f32.mrf.mxu0
      %998 = vmatprep.mubr.f32.mxu0 0.0
      %v999 = vand.u32 %v393, 4294901760
      %v1000 = vsub.f32 %v393, %v999
      %1001 = vmatmul.mubr.f32.gmra.mxu0 %v1000
      %v1002 = vpop.f32.mrf.mxu0
      %v1003 = vadd.f32 %v814, %v1002
      %v1004 = vpop.f32.mrf.mxu0
      %1005 = vmatprep.mubr.f32.mxu0 0.0
      %v1006 = vand.u32 %v396, 4294901760
      %v1007 = vsub.f32 %v396, %v1006
      %1008 = vmatmul.mubr.f32.gmra.mxu0 %v1007
      %v1009 = vpop.f32.mrf.mxu0
      %v1010 = vadd.f32 %v820, %v1009
      %v1011 = vpop.f32.mrf.mxu0
      %1012 = vmatprep.mubr.f32.mxu0 0.0
      %v1013 = vand.u32 %v399, 4294901760
      %v1014 = vsub.f32 %v399, %v1013
      %1015 = vmatmul.mubr.f32.gmra.mxu0 %v1014
      %v1016 = vpop.f32.mrf.mxu0
      %v1017 = vadd.f32 %v826, %v1016
      %v1018 = vpop.f32.mrf.mxu0
      %1019 = vdwg.mxu0
      %1020 = vmatprep.subr.mxu0 0.0
      %1021 = vmatpush1.msra.mxu0 0.0
      %1022 = vmatprep.subr.mxu0 0.0
      %1023 = vmatpush1.msra.mxu0 0.0
      %1024 = vmatprep.subr.mxu0 0.0
      %1025 = vmatpush1.msra.mxu0 0.0
      %1026 = vmatprep.subr.mxu0 0.0
      %1027 = vmatpush1.msra.mxu0 0.0
      %1028 = vmatprep.subr.mxu0 0.0
      %1029 = vmatpush1.msra.mxu0 0.0
      %1030 = vmatprep.subr.mxu0 0.0
      %1031 = vmatpush1.msra.mxu0 0.0
      %1032 = vmatprep.subr.mxu0 0.0
      %1033 = vmatpush1.msra.mxu0 0.0
      %1034 = vmatprep.subr.mxu0 0.0
      %1035 = vmatpush1.msra.mxu0 0.0
      %1036 = vmatprep.subr.mxu0 0.0
      %1037 = vmatpush1.msra.mxu0 0.0
      %1038 = vmatprep.subr.mxu0 0.0
      %v1039 = vand.u32 %v344, 4294901760
      %1040 = vmatpush1.msra.mxu0 %v1039
      %1041 = vmatprep.subr.mxu0 0.0
      %v1042 = vand.u32 %v343, 4294901760
      %1043 = vmatpush1.msra.mxu0 %v1042
      %1044 = vmatprep.subr.mxu0 0.0
      %v1045 = vand.u32 %v342, 4294901760
      %1046 = vmatpush1.msra.mxu0 %v1045
      %1047 = vmatprep.subr.mxu0 0.0
      %v1048 = vand.u32 %v341, 4294901760
      %1049 = vmatpush1.msra.mxu0 %v1048
      %1050 = vmatprep.subr.mxu0 0.0
      %v1051 = vand.u32 %v340, 4294901760
      %1052 = vmatpush1.msra.mxu0 %v1051
      %1053 = vmatprep.subr.mxu0 0.0
      %v1054 = vand.u32 %v339, 4294901760
      %1055 = vmatpush1.msra.mxu0 %v1054
      %1056 = vmatprep.subr.mxu0 0.0
      %v1057 = vand.u32 %v338, 4294901760
      %1058 = vmatpush1.msra.mxu0 %v1057
      %1059 = vmatprep.subr.mxu0 0.0
      %1060 = vmatpush2.msra.mxu0 0.0
      %1061 = vmatprep.subr.mxu0 0.0
      %1062 = vmatpush2.msra.mxu0 0.0
      %1063 = vmatprep.subr.mxu0 0.0
      %1064 = vmatpush2.msra.mxu0 0.0
      %1065 = vmatprep.subr.mxu0 0.0
      %1066 = vmatpush2.msra.mxu0 0.0
      %1067 = vmatprep.subr.mxu0 0.0
      %1068 = vmatpush2.msra.mxu0 0.0
      %1069 = vmatprep.subr.mxu0 0.0
      %1070 = vmatpush2.msra.mxu0 0.0
      %1071 = vmatprep.subr.mxu0 0.0
      %1072 = vmatpush2.msra.mxu0 0.0
      %1073 = vmatprep.subr.mxu0 0.0
      %1074 = vmatpush2.msra.mxu0 0.0
      %1075 = vmatprep.subr.mxu0 0.0
      %1076 = vmatpush2.msra.mxu0 0.0
      %1077 = vmatprep.subr.mxu0 0.0
      %1078 = vmatpush2.msra.mxu0 0.0
      %1079 = vmatprep.subr.mxu0 0.0
      %1080 = vmatpush2.msra.mxu0 0.0
      %1081 = vmatprep.subr.mxu0 0.0
      %1082 = vmatpush2.msra.mxu0 0.0
      %1083 = vmatprep.subr.mxu0 0.0
      %1084 = vmatpush2.msra.mxu0 0.0
      %1085 = vmatprep.subr.mxu0 0.0
      %1086 = vmatpush2.msra.mxu0 0.0
      %1087 = vmatprep.subr.mxu0 0.0
      %1088 = vmatpush2.msra.mxu0 0.0
      %1089 = vmatprep.subr.mxu0 0.0
      %1090 = vmatpush2.msra.mxu0 0.0
      %1091 = vmatprep.mubr.f32.mxu0 0.0
      %v1092 = vand.u32 %v354, 4294901760
      %v1093 = vsub.f32 %v354, %v1092
      %v1094 = vand.u32 %v1093, 4294901760
      %1095 = vmatmul.mubr.f32.gmra.mxu0 %v1094
      %v1096 = vpop.f32.mrf.mxu0
      %v1097 = vadd.f32 %v912, %v1096
      %v1098 = vpop.f32.mrf.mxu0
      %1099 = vmatprep.mubr.f32.mxu0 0.0
      %v1100 = vand.u32 %v357, 4294901760
      %v1101 = vsub.f32 %v357, %v1100
      %v1102 = vand.u32 %v1101, 4294901760
      %1103 = vmatmul.mubr.f32.gmra.mxu0 %v1102
      %v1104 = vpop.f32.mrf.mxu0
      %v1105 = vadd.f32 %v919, %v1104
      %v1106 = vpop.f32.mrf.mxu0
      %1107 = vmatprep.mubr.f32.mxu0 0.0
      %v1108 = vand.u32 %v360, 4294901760
      %v1109 = vsub.f32 %v360, %v1108
      %v1110 = vand.u32 %v1109, 4294901760
      %1111 = vmatmul.mubr.f32.gmra.mxu0 %v1110
      %v1112 = vpop.f32.mrf.mxu0
      %v1113 = vadd.f32 %v926, %v1112
      %v1114 = vpop.f32.mrf.mxu0
      %1115 = vmatprep.mubr.f32.mxu0 0.0
      %v1116 = vand.u32 %v363, 4294901760
      %v1117 = vsub.f32 %v363, %v1116
      %v1118 = vand.u32 %v1117, 4294901760
      %1119 = vmatmul.mubr.f32.gmra.mxu0 %v1118
      %v1120 = vpop.f32.mrf.mxu0
      %v1121 = vadd.f32 %v933, %v1120
      %v1122 = vpop.f32.mrf.mxu0
      %1123 = vmatprep.mubr.f32.mxu0 0.0
      %v1124 = vand.u32 %v366, 4294901760
      %v1125 = vsub.f32 %v366, %v1124
      %v1126 = vand.u32 %v1125, 4294901760
      %1127 = vmatmul.mubr.f32.gmra.mxu0 %v1126
      %v1128 = vpop.f32.mrf.mxu0
      %v1129 = vadd.f32 %v940, %v1128
      %v1130 = vpop.f32.mrf.mxu0
      %1131 = vmatprep.mubr.f32.mxu0 0.0
      %v1132 = vand.u32 %v369, 4294901760
      %v1133 = vsub.f32 %v369, %v1132
      %v1134 = vand.u32 %v1133, 4294901760
      %1135 = vmatmul.mubr.f32.gmra.mxu0 %v1134
      %v1136 = vpop.f32.mrf.mxu0
      %v1137 = vadd.f32 %v947, %v1136
      %v1138 = vpop.f32.mrf.mxu0
      %1139 = vmatprep.mubr.f32.mxu0 0.0
      %v1140 = vand.u32 %v372, 4294901760
      %v1141 = vsub.f32 %v372, %v1140
      %v1142 = vand.u32 %v1141, 4294901760
      %1143 = vmatmul.mubr.f32.gmra.mxu0 %v1142
      %v1144 = vpop.f32.mrf.mxu0
      %v1145 = vadd.f32 %v954, %v1144
      %v1146 = vpop.f32.mrf.mxu0
      %1147 = vmatprep.mubr.f32.mxu0 0.0
      %v1148 = vand.u32 %v375, 4294901760
      %v1149 = vsub.f32 %v375, %v1148
      %v1150 = vand.u32 %v1149, 4294901760
      %1151 = vmatmul.mubr.f32.gmra.mxu0 %v1150
      %v1152 = vpop.f32.mrf.mxu0
      %v1153 = vadd.f32 %v961, %v1152
      %v1154 = vpop.f32.mrf.mxu0
      %1155 = vmatprep.mubr.f32.mxu0 0.0
      %v1156 = vand.u32 %v378, 4294901760
      %v1157 = vsub.f32 %v378, %v1156
      %v1158 = vand.u32 %v1157, 4294901760
      %1159 = vmatmul.mubr.f32.gmra.mxu0 %v1158
      %v1160 = vpop.f32.mrf.mxu0
      %v1161 = vadd.f32 %v968, %v1160
      %v1162 = vpop.f32.mrf.mxu0
      %1163 = vmatprep.mubr.f32.mxu0 0.0
      %v1164 = vand.u32 %v381, 4294901760
      %v1165 = vsub.f32 %v381, %v1164
      %v1166 = vand.u32 %v1165, 4294901760
      %1167 = vmatmul.mubr.f32.gmra.mxu0 %v1166
      %v1168 = vpop.f32.mrf.mxu0
      %v1169 = vadd.f32 %v975, %v1168
      %v1170 = vpop.f32.mrf.mxu0
      %1171 = vmatprep.mubr.f32.mxu0 0.0
      %v1172 = vand.u32 %v384, 4294901760
      %v1173 = vsub.f32 %v384, %v1172
      %v1174 = vand.u32 %v1173, 4294901760
      %1175 = vmatmul.mubr.f32.gmra.mxu0 %v1174
      %v1176 = vpop.f32.mrf.mxu0
      %v1177 = vadd.f32 %v982, %v1176
      %v1178 = vpop.f32.mrf.mxu0
      %1179 = vmatprep.mubr.f32.mxu0 0.0
      %v1180 = vand.u32 %v387, 4294901760
      %v1181 = vsub.f32 %v387, %v1180
      %v1182 = vand.u32 %v1181, 4294901760
      %1183 = vmatmul.mubr.f32.gmra.mxu0 %v1182
      %v1184 = vpop.f32.mrf.mxu0
      %v1185 = vadd.f32 %v989, %v1184
      %v1186 = vpop.f32.mrf.mxu0
      %1187 = vmatprep.mubr.f32.mxu0 0.0
      %v1188 = vand.u32 %v390, 4294901760
      %v1189 = vsub.f32 %v390, %v1188
      %v1190 = vand.u32 %v1189, 4294901760
      %1191 = vmatmul.mubr.f32.gmra.mxu0 %v1190
      %v1192 = vpop.f32.mrf.mxu0
      %v1193 = vadd.f32 %v996, %v1192
      %v1194 = vpop.f32.mrf.mxu0
      %1195 = vmatprep.mubr.f32.mxu0 0.0
      %v1196 = vand.u32 %v393, 4294901760
      %v1197 = vsub.f32 %v393, %v1196
      %v1198 = vand.u32 %v1197, 4294901760
      %1199 = vmatmul.mubr.f32.gmra.mxu0 %v1198
      %v1200 = vpop.f32.mrf.mxu0
      %v1201 = vadd.f32 %v1003, %v1200
      %v1202 = vpop.f32.mrf.mxu0
      %1203 = vmatprep.mubr.f32.mxu0 0.0
      %v1204 = vand.u32 %v396, 4294901760
      %v1205 = vsub.f32 %v396, %v1204
      %v1206 = vand.u32 %v1205, 4294901760
      %1207 = vmatmul.mubr.f32.gmra.mxu0 %v1206
      %v1208 = vpop.f32.mrf.mxu0
      %v1209 = vadd.f32 %v1010, %v1208
      %v1210 = vpop.f32.mrf.mxu0
      %1211 = vmatprep.mubr.f32.mxu0 0.0
      %v1212 = vand.u32 %v399, 4294901760
      %v1213 = vsub.f32 %v399, %v1212
      %v1214 = vand.u32 %v1213, 4294901760
      %1215 = vmatmul.mubr.f32.gmra.mxu0 %v1214
      %v1216 = vpop.f32.mrf.mxu0
      %v1217 = vadd.f32 %v1017, %v1216
      %v1218 = vpop.f32.mrf.mxu0
      %1219 = vdwg.mxu0
      %1220 = vmatprep.subr.mxu0 0.0
      %1221 = vmatpush1.msra.mxu0 0.0
      %1222 = vmatprep.subr.mxu0 0.0
      %1223 = vmatpush1.msra.mxu0 0.0
      %1224 = vmatprep.subr.mxu0 0.0
      %1225 = vmatpush1.msra.mxu0 0.0
      %1226 = vmatprep.subr.mxu0 0.0
      %1227 = vmatpush1.msra.mxu0 0.0
      %1228 = vmatprep.subr.mxu0 0.0
      %1229 = vmatpush1.msra.mxu0 0.0
      %1230 = vmatprep.subr.mxu0 0.0
      %1231 = vmatpush1.msra.mxu0 0.0
      %1232 = vmatprep.subr.mxu0 0.0
      %1233 = vmatpush1.msra.mxu0 0.0
      %1234 = vmatprep.subr.mxu0 0.0
      %1235 = vmatpush1.msra.mxu0 0.0
      %1236 = vmatprep.subr.mxu0 0.0
      %1237 = vmatpush1.msra.mxu0 0.0
      %1238 = vmatprep.subr.mxu0 0.0
      %v1239 = vand.u32 %v344, 4294901760
      %v1240 = vsub.f32 %v344, %v1239
      %v1241 = vand.u32 %v1240, 4294901760
      %1242 = vmatpush1.msra.mxu0 %v1241
      %1243 = vmatprep.subr.mxu0 0.0
      %v1244 = vand.u32 %v343, 4294901760
      %v1245 = vsub.f32 %v343, %v1244
      %v1246 = vand.u32 %v1245, 4294901760
      %1247 = vmatpush1.msra.mxu0 %v1246
      %1248 = vmatprep.subr.mxu0 0.0
      %v1249 = vand.u32 %v342, 4294901760
      %v1250 = vsub.f32 %v342, %v1249
      %v1251 = vand.u32 %v1250, 4294901760
      %1252 = vmatpush1.msra.mxu0 %v1251
      %1253 = vmatprep.subr.mxu0 0.0
      %v1254 = vand.u32 %v341, 4294901760
      %v1255 = vsub.f32 %v341, %v1254
      %v1256 = vand.u32 %v1255, 4294901760
      %1257 = vmatpush1.msra.mxu0 %v1256
      %1258 = vmatprep.subr.mxu0 0.0
      %v1259 = vand.u32 %v340, 4294901760
      %v1260 = vsub.f32 %v340, %v1259
      %v1261 = vand.u32 %v1260, 4294901760
      %1262 = vmatpush1.msra.mxu0 %v1261
      %1263 = vmatprep.subr.mxu0 0.0
      %v1264 = vand.u32 %v339, 4294901760
      %v1265 = vsub.f32 %v339, %v1264
      %v1266 = vand.u32 %v1265, 4294901760
      %1267 = vmatpush1.msra.mxu0 %v1266
      %1268 = vmatprep.subr.mxu0 0.0
      %v1269 = vand.u32 %v338, 4294901760
      %v1270 = vsub.f32 %v338, %v1269
      %v1271 = vand.u32 %v1270, 4294901760
      %1272 = vmatpush1.msra.mxu0 %v1271
      %1273 = vmatprep.subr.mxu0 0.0
      %1274 = vmatpush2.msra.mxu0 0.0
      %1275 = vmatprep.subr.mxu0 0.0
      %1276 = vmatpush2.msra.mxu0 0.0
      %1277 = vmatprep.subr.mxu0 0.0
      %1278 = vmatpush2.msra.mxu0 0.0
      %1279 = vmatprep.subr.mxu0 0.0
      %1280 = vmatpush2.msra.mxu0 0.0
      %1281 = vmatprep.subr.mxu0 0.0
      %1282 = vmatpush2.msra.mxu0 0.0
      %1283 = vmatprep.subr.mxu0 0.0
      %1284 = vmatpush2.msra.mxu0 0.0
      %1285 = vmatprep.subr.mxu0 0.0
      %1286 = vmatpush2.msra.mxu0 0.0
      %1287 = vmatprep.subr.mxu0 0.0
      %1288 = vmatpush2.msra.mxu0 0.0
      %1289 = vmatprep.subr.mxu0 0.0
      %1290 = vmatpush2.msra.mxu0 0.0
      %1291 = vmatprep.subr.mxu0 0.0
      %1292 = vmatpush2.msra.mxu0 0.0
      %1293 = vmatprep.subr.mxu0 0.0
      %1294 = vmatpush2.msra.mxu0 0.0
      %1295 = vmatprep.subr.mxu0 0.0
      %1296 = vmatpush2.msra.mxu0 0.0
      %1297 = vmatprep.subr.mxu0 0.0
      %1298 = vmatpush2.msra.mxu0 0.0
      %1299 = vmatprep.subr.mxu0 0.0
      %1300 = vmatpush2.msra.mxu0 0.0
      %1301 = vmatprep.subr.mxu0 0.0
      %1302 = vmatpush2.msra.mxu0 0.0
      %1303 = vmatprep.subr.mxu0 0.0
      %1304 = vmatpush2.msra.mxu0 0.0
      %1305 = vmatprep.mubr.f32.mxu0 0.0
      %v1306 = vand.u32 %v354, 4294901760
      %1307 = vmatmul.mubr.f32.gmra.mxu0 %v1306
      %v1308 = vpop.f32.mrf.mxu0
      %v1309 = vadd.f32 %v1097, %v1308
      %v1310 = vpop.f32.mrf.mxu0
      %1311 = vmatprep.mubr.f32.mxu0 0.0
      %v1312 = vand.u32 %v357, 4294901760
      %1313 = vmatmul.mubr.f32.gmra.mxu0 %v1312
      %v1314 = vpop.f32.mrf.mxu0
      %v1315 = vadd.f32 %v1105, %v1314
      %v1316 = vpop.f32.mrf.mxu0
      %1317 = vmatprep.mubr.f32.mxu0 0.0
      %v1318 = vand.u32 %v360, 4294901760
      %1319 = vmatmul.mubr.f32.gmra.mxu0 %v1318
      %v1320 = vpop.f32.mrf.mxu0
      %v1321 = vadd.f32 %v1113, %v1320
      %v1322 = vpop.f32.mrf.mxu0
      %1323 = vmatprep.mubr.f32.mxu0 0.0
      %v1324 = vand.u32 %v363, 4294901760
      %1325 = vmatmul.mubr.f32.gmra.mxu0 %v1324
      %v1326 = vpop.f32.mrf.mxu0
      %v1327 = vadd.f32 %v1121, %v1326
      %v1328 = vpop.f32.mrf.mxu0
      %1329 = vmatprep.mubr.f32.mxu0 0.0
      %v1330 = vand.u32 %v366, 4294901760
      %1331 = vmatmul.mubr.f32.gmra.mxu0 %v1330
      %v1332 = vpop.f32.mrf.mxu0
      %v1333 = vadd.f32 %v1129, %v1332
      %v1334 = vpop.f32.mrf.mxu0
      %1335 = vmatprep.mubr.f32.mxu0 0.0
      %v1336 = vand.u32 %v369, 4294901760
      %1337 = vmatmul.mubr.f32.gmra.mxu0 %v1336
      %v1338 = vpop.f32.mrf.mxu0
      %v1339 = vadd.f32 %v1137, %v1338
      %v1340 = vpop.f32.mrf.mxu0
      %1341 = vmatprep.mubr.f32.mxu0 0.0
      %v1342 = vand.u32 %v372, 4294901760
      %1343 = vmatmul.mubr.f32.gmra.mxu0 %v1342
      %v1344 = vpop.f32.mrf.mxu0
      %v1345 = vadd.f32 %v1145, %v1344
      %v1346 = vpop.f32.mrf.mxu0
      %1347 = vmatprep.mubr.f32.mxu0 0.0
      %v1348 = vand.u32 %v375, 4294901760
      %1349 = vmatmul.mubr.f32.gmra.mxu0 %v1348
      %v1350 = vpop.f32.mrf.mxu0
      %v1351 = vadd.f32 %v1153, %v1350
      %v1352 = vpop.f32.mrf.mxu0
      %1353 = vmatprep.mubr.f32.mxu0 0.0
      %v1354 = vand.u32 %v378, 4294901760
      %1355 = vmatmul.mubr.f32.gmra.mxu0 %v1354
      %v1356 = vpop.f32.mrf.mxu0
      %v1357 = vadd.f32 %v1161, %v1356
      %v1358 = vpop.f32.mrf.mxu0
      %1359 = vmatprep.mubr.f32.mxu0 0.0
      %v1360 = vand.u32 %v381, 4294901760
      %1361 = vmatmul.mubr.f32.gmra.mxu0 %v1360
      %v1362 = vpop.f32.mrf.mxu0
      %v1363 = vadd.f32 %v1169, %v1362
      %v1364 = vpop.f32.mrf.mxu0
      %1365 = vmatprep.mubr.f32.mxu0 0.0
      %v1366 = vand.u32 %v384, 4294901760
      %1367 = vmatmul.mubr.f32.gmra.mxu0 %v1366
      %v1368 = vpop.f32.mrf.mxu0
      %v1369 = vadd.f32 %v1177, %v1368
      %v1370 = vpop.f32.mrf.mxu0
      %1371 = vmatprep.mubr.f32.mxu0 0.0
      %v1372 = vand.u32 %v387, 4294901760
      %1373 = vmatmul.mubr.f32.gmra.mxu0 %v1372
      %v1374 = vpop.f32.mrf.mxu0
      %v1375 = vadd.f32 %v1185, %v1374
      %v1376 = vpop.f32.mrf.mxu0
      %1377 = vmatprep.mubr.f32.mxu0 0.0
      %v1378 = vand.u32 %v390, 4294901760
      %1379 = vmatmul.mubr.f32.gmra.mxu0 %v1378
      %v1380 = vpop.f32.mrf.mxu0
      %v1381 = vadd.f32 %v1193, %v1380
      %v1382 = vpop.f32.mrf.mxu0
      %1383 = vmatprep.mubr.f32.mxu0 0.0
      %v1384 = vand.u32 %v393, 4294901760
      %1385 = vmatmul.mubr.f32.gmra.mxu0 %v1384
      %v1386 = vpop.f32.mrf.mxu0
      %v1387 = vadd.f32 %v1201, %v1386
      %v1388 = vpop.f32.mrf.mxu0
      %1389 = vmatprep.mubr.f32.mxu0 0.0
      %v1390 = vand.u32 %v396, 4294901760
      %1391 = vmatmul.mubr.f32.gmra.mxu0 %v1390
      %v1392 = vpop.f32.mrf.mxu0
      %v1393 = vadd.f32 %v1209, %v1392
      %v1394 = vpop.f32.mrf.mxu0
      %1395 = vmatprep.mubr.f32.mxu0 0.0
      %v1396 = vand.u32 %v399, 4294901760
      %1397 = vmatmul.mubr.f32.gmra.mxu0 %v1396
      %v1398 = vpop.f32.mrf.mxu0
      %v1399 = vadd.f32 %v1217, %v1398
      %v1400 = vpop.f32.mrf.mxu0
      %1401 = vdwg.mxu0
      %1402 = vmatprep.subr.mxu0 0.0
      %1403 = vmatpush1.msra.mxu0 0.0
      %1404 = vmatprep.subr.mxu0 0.0
      %1405 = vmatpush1.msra.mxu0 0.0
      %1406 = vmatprep.subr.mxu0 0.0
      %1407 = vmatpush1.msra.mxu0 0.0
      %1408 = vmatprep.subr.mxu0 0.0
      %1409 = vmatpush1.msra.mxu0 0.0
      %1410 = vmatprep.subr.mxu0 0.0
      %1411 = vmatpush1.msra.mxu0 0.0
      %1412 = vmatprep.subr.mxu0 0.0
      %1413 = vmatpush1.msra.mxu0 0.0
      %1414 = vmatprep.subr.mxu0 0.0
      %1415 = vmatpush1.msra.mxu0 0.0
      %1416 = vmatprep.subr.mxu0 0.0
      %1417 = vmatpush1.msra.mxu0 0.0
      %1418 = vmatprep.subr.mxu0 0.0
      %1419 = vmatpush1.msra.mxu0 0.0
      %1420 = vmatprep.subr.mxu0 0.0
      %v1421 = vand.u32 %v344, 4294901760
      %1422 = vmatpush1.msra.mxu0 %v1421
      %1423 = vmatprep.subr.mxu0 0.0
      %v1424 = vand.u32 %v343, 4294901760
      %1425 = vmatpush1.msra.mxu0 %v1424
      %1426 = vmatprep.subr.mxu0 0.0
      %v1427 = vand.u32 %v342, 4294901760
      %1428 = vmatpush1.msra.mxu0 %v1427
      %1429 = vmatprep.subr.mxu0 0.0
      %v1430 = vand.u32 %v341, 4294901760
      %1431 = vmatpush1.msra.mxu0 %v1430
      %1432 = vmatprep.subr.mxu0 0.0
      %v1433 = vand.u32 %v340, 4294901760
      %1434 = vmatpush1.msra.mxu0 %v1433
      %1435 = vmatprep.subr.mxu0 0.0
      %v1436 = vand.u32 %v339, 4294901760
      %1437 = vmatpush1.msra.mxu0 %v1436
      %1438 = vmatprep.subr.mxu0 0.0
      %v1439 = vand.u32 %v338, 4294901760
      %1440 = vmatpush1.msra.mxu0 %v1439
      %1441 = vmatprep.subr.mxu0 0.0
      %1442 = vmatpush2.msra.mxu0 0.0
      %1443 = vmatprep.subr.mxu0 0.0
      %1444 = vmatpush2.msra.mxu0 0.0
      %1445 = vmatprep.subr.mxu0 0.0
      %1446 = vmatpush2.msra.mxu0 0.0
      %1447 = vmatprep.subr.mxu0 0.0
      %1448 = vmatpush2.msra.mxu0 0.0
      %1449 = vmatprep.subr.mxu0 0.0
      %1450 = vmatpush2.msra.mxu0 0.0
      %1451 = vmatprep.subr.mxu0 0.0
      %1452 = vmatpush2.msra.mxu0 0.0
      %1453 = vmatprep.subr.mxu0 0.0
      %1454 = vmatpush2.msra.mxu0 0.0
      %1455 = vmatprep.subr.mxu0 0.0
      %1456 = vmatpush2.msra.mxu0 0.0
      %1457 = vmatprep.subr.mxu0 0.0
      %1458 = vmatpush2.msra.mxu0 0.0
      %1459 = vmatprep.subr.mxu0 0.0
      %1460 = vmatpush2.msra.mxu0 0.0
      %1461 = vmatprep.subr.mxu0 0.0
      %1462 = vmatpush2.msra.mxu0 0.0
      %1463 = vmatprep.subr.mxu0 0.0
      %1464 = vmatpush2.msra.mxu0 0.0
      %1465 = vmatprep.subr.mxu0 0.0
      %1466 = vmatpush2.msra.mxu0 0.0
      %1467 = vmatprep.subr.mxu0 0.0
      %1468 = vmatpush2.msra.mxu0 0.0
      %1469 = vmatprep.subr.mxu0 0.0
      %1470 = vmatpush2.msra.mxu0 0.0
      %1471 = vmatprep.subr.mxu0 0.0
      %1472 = vmatpush2.msra.mxu0 0.0
      %1473 = vmatprep.mubr.f32.mxu0 0.0
      %v1474 = vand.u32 %v354, 4294901760
      %1475 = vmatmul.mubr.f32.gmra.mxu0 %v1474
      %v1476 = vpop.f32.mrf.mxu0
      %v1477 = vadd.f32 %v1309, %v1476
      %v1478 = vpop.f32.mrf.mxu0
      %1479 = vmatprep.mubr.f32.mxu0 0.0
      %v1480 = vand.u32 %v357, 4294901760
      %1481 = vmatmul.mubr.f32.gmra.mxu0 %v1480
      %v1482 = vpop.f32.mrf.mxu0
      %v1483 = vadd.f32 %v1315, %v1482
      %v1484 = vpop.f32.mrf.mxu0
      %1485 = vmatprep.mubr.f32.mxu0 0.0
      %v1486 = vand.u32 %v360, 4294901760
      %1487 = vmatmul.mubr.f32.gmra.mxu0 %v1486
      %v1488 = vpop.f32.mrf.mxu0
      %v1489 = vadd.f32 %v1321, %v1488
      %v1490 = vpop.f32.mrf.mxu0
      %1491 = vmatprep.mubr.f32.mxu0 0.0
      %v1492 = vand.u32 %v363, 4294901760
      %1493 = vmatmul.mubr.f32.gmra.mxu0 %v1492
      %v1494 = vpop.f32.mrf.mxu0
      %v1495 = vadd.f32 %v1327, %v1494
      %v1496 = vpop.f32.mrf.mxu0
      %1497 = vmatprep.mubr.f32.mxu0 0.0
      %v1498 = vand.u32 %v366, 4294901760
      %1499 = vmatmul.mubr.f32.gmra.mxu0 %v1498
      %v1500 = vpop.f32.mrf.mxu0
      %v1501 = vadd.f32 %v1333, %v1500
      %v1502 = vpop.f32.mrf.mxu0
      %1503 = vmatprep.mubr.f32.mxu0 0.0
      %v1504 = vand.u32 %v369, 4294901760
      %1505 = vmatmul.mubr.f32.gmra.mxu0 %v1504
      %v1506 = vpop.f32.mrf.mxu0
      %v1507 = vadd.f32 %v1339, %v1506
      %v1508 = vpop.f32.mrf.mxu0
      %1509 = vmatprep.mubr.f32.mxu0 0.0
      %v1510 = vand.u32 %v372, 4294901760
      %1511 = vmatmul.mubr.f32.gmra.mxu0 %v1510
      %v1512 = vpop.f32.mrf.mxu0
      %v1513 = vadd.f32 %v1345, %v1512
      %v1514 = vpop.f32.mrf.mxu0
      %1515 = vmatprep.mubr.f32.mxu0 0.0
      %v1516 = vand.u32 %v375, 4294901760
      %1517 = vmatmul.mubr.f32.gmra.mxu0 %v1516
      %v1518 = vpop.f32.mrf.mxu0
      %v1519 = vadd.f32 %v1351, %v1518
      %v1520 = vpop.f32.mrf.mxu0
      %1521 = vmatprep.mubr.f32.mxu0 0.0
      %v1522 = vand.u32 %v378, 4294901760
      %1523 = vmatmul.mubr.f32.gmra.mxu0 %v1522
      %v1524 = vpop.f32.mrf.mxu0
      %v1525 = vadd.f32 %v1357, %v1524
      %v1526 = vpop.f32.mrf.mxu0
      %1527 = vmatprep.mubr.f32.mxu0 0.0
      %v1528 = vand.u32 %v381, 4294901760
      %1529 = vmatmul.mubr.f32.gmra.mxu0 %v1528
      %v1530 = vpop.f32.mrf.mxu0
      %v1531 = vadd.f32 %v1363, %v1530
      %v1532 = vpop.f32.mrf.mxu0
      %1533 = vmatprep.mubr.f32.mxu0 0.0
      %v1534 = vand.u32 %v384, 4294901760
      %1535 = vmatmul.mubr.f32.gmra.mxu0 %v1534
      %v1536 = vpop.f32.mrf.mxu0
      %v1537 = vadd.f32 %v1369, %v1536
      %v1538 = vpop.f32.mrf.mxu0
      %1539 = vmatprep.mubr.f32.mxu0 0.0
      %v1540 = vand.u32 %v387, 4294901760
      %1541 = vmatmul.mubr.f32.gmra.mxu0 %v1540
      %v1542 = vpop.f32.mrf.mxu0
      %v1543 = vadd.f32 %v1375, %v1542
      %v1544 = vpop.f32.mrf.mxu0
      %1545 = vmatprep.mubr.f32.mxu0 0.0
      %v1546 = vand.u32 %v390, 4294901760
      %1547 = vmatmul.mubr.f32.gmra.mxu0 %v1546
      %v1548 = vpop.f32.mrf.mxu0
      %v1549 = vadd.f32 %v1381, %v1548
      %v1550 = vpop.f32.mrf.mxu0
      %1551 = vmatprep.mubr.f32.mxu0 0.0
      %v1552 = vand.u32 %v393, 4294901760
      %1553 = vmatmul.mubr.f32.gmra.mxu0 %v1552
      %v1554 = vpop.f32.mrf.mxu0
      %v1555 = vadd.f32 %v1387, %v1554
      %v1556 = vpop.f32.mrf.mxu0
      %1557 = vmatprep.mubr.f32.mxu0 0.0
      %v1558 = vand.u32 %v396, 4294901760
      %1559 = vmatmul.mubr.f32.gmra.mxu0 %v1558
      %v1560 = vpop.f32.mrf.mxu0
      %v1561 = vadd.f32 %v1393, %v1560
      %v1562 = vpop.f32.mrf.mxu0
      %1563 = vmatprep.mubr.f32.mxu0 0.0
      %v1564 = vand.u32 %v399, 4294901760
      %1565 = vmatmul.mubr.f32.gmra.mxu0 %v1564
      %v1566 = vpop.f32.mrf.mxu0
      %v1567 = vadd.f32 %v1399, %v1566
      %v1568 = vpop.f32.mrf.mxu0
      %1569 = vdwg.mxu0
      %vm1570 = vcmask 64512
      %1571 = vst.msk [vmem:[%s226] sm:$0xff] %vm1570, %v1477
      %1572 = vst.msk [vmem:[%s226 + $0x8] sm:$0xff] %vm1570, %v1483
      %1573 = vst.msk [vmem:[%s226 + $0x10] sm:$0xff] %vm1570, %v1489
      %1574 = vst.msk [vmem:[%s226 + $0x18] sm:$0xff] %vm1570, %v1495
      %1575 = vst.msk [vmem:[%s226 + $0x20] sm:$0xff] %vm1570, %v1501
      %1576 = vst.msk [vmem:[%s226 + $0x28] sm:$0xff] %vm1570, %v1507
      %1577 = vst.msk [vmem:[%s226 + $0x30] sm:$0xff] %vm1570, %v1513
      %1578 = vst.msk [vmem:[%s226 + $0x38] sm:$0xff] %vm1570, %v1519
      %1579 = vst.msk [vmem:[%s226 + $0x40] sm:$0xff] %vm1570, %v1525
      %1580 = vst.msk [vmem:[%s226 + $0x48] sm:$0xff] %vm1570, %v1531
      %1581 = vst.msk [vmem:[%s226 + $0x50] sm:$0xff] %vm1570, %v1537
      %1582 = vst.msk [vmem:[%s226 + $0x58] sm:$0xff] %vm1570, %v1543
      %1583 = vst.msk [vmem:[%s226 + $0x60] sm:$0xff] %vm1570, %v1549
      %1584 = vst.msk [vmem:[%s226 + $0x68] sm:$0xff] %vm1570, %v1555
      %1585 = vst.msk [vmem:[%s226 + $0x70] sm:$0xff] %vm1570, %v1561
      %1586 = vst.msk [vmem:[%s226 + $0x78] sm:$0xff] %vm1570, %v1567
      %s1587 = smul.u32 16, %s16
      %p1588 = scmp.lt.s32.totalorder %s1587, 31
      %s1589 = scalar_select %p1588, %s1587, 31
      %s1590 = smul.addr %s1589, 8
      %s1591 = scalar_lea.vmem %s5, %s1590
      // Predicated region
      $region41: #{up_block_batch_pallas.6} parent=39 // pred_check
        %p1592 = pneg %p144
      $region42: #{up_block_batch_pallas.6} parent=39 // pred_check_branch
        %1594 = sbr.rel (%p1592) target = $region44
      $region43: #{up_block_batch_pallas.6} parent=39 // pred_region
        %s1595 = smul.u32 16, %s16
      $region44: #{up_block_batch_pallas.6} parent=39 // pred_fallthru
        _
    $region40: #{up_block_batch_pallas.6} parent=5 // pred_fallthru
      _
    %p1596 = scmp.le.s32.totalorder 2, %s11
    // Predicated region
    $region45: #{up_block_batch_pallas.6} parent=5 // pred_check
      %p1597 = pneg %p1596
    $region46: #{up_block_batch_pallas.6} parent=5 // pred_check_branch
      %1599 = sbr.rel (%p1597) target = $region48
    $region47: #{up_block_batch_pallas.6} parent=5 // pred_region
      %s1600 = ssub.s32 %s11, 2
      // Predicated region
      $region49: #{up_block_batch_pallas.6} parent=47 // pred_check
        %p1601 = pneg %p150
      $region50: #{up_block_batch_pallas.6} parent=47 // pred_check_branch
        %1603 = sbr.rel (%p1601) target = $region52
      $region51: #{up_block_batch_pallas.6} parent=47 // pred_region
        %s1604 = smul.u32 16, %s17
        %p1605 = scmp.lt.s32.totalorder %s1604, 31
        %s1606 = scalar_select %p1605, %s1604, 31
        %s1607 = smul.addr %s1606, 8
        %s1608 = scalar_lea.vmem %s5, %s1607
      $region52: #{up_block_batch_pallas.6} parent=47 // pred_fallthru
        _
    $region48: #{up_block_batch_pallas.6} parent=5 // pred_fallthru
      _
  $region6: #{up_block_batch_pallas.6} parent=0 // loop_footer
    %s15 = sadd.s32 1, %s11
  $region7: #{up_block_batch_pallas.6} parent=0 // loop_footer_branch
    %10 = sbr.rel target = $region3
  $region8: #{up_block_batch_pallas.6} parent=0 // loop_exit
    _

// kernel: up_block_batch_pallas.7
$region0: #{up_block_batch_pallas.7}
  #allocation0 [shape = 'u32[]', space=smem, size = 0x4, offset = 0x4, fixed_abs, tag = 'smem constant byte address 0x4 - core index']
  #allocation1 [shape = 'u32[144,128]{1,0:T(1,128)}', space=vmem, size = 0x12000, scoped, tag = 'internal scratch']
  %s0 = inlined_call_operand.vmem [shape: f32[16,128], index: 0, kind: input, shape index: {}]
  %s1 = inlined_call_operand.vmem [shape: f32[1,128], index: 1, kind: input, shape index: {}]
  %s2 = inlined_call_operand.vmem [shape: f32[1,128], index: 2, kind: input, shape index: {}]
  %s3 = inlined_call_operand.vmem [shape: f32[16,128], index: 3, kind: output, shape index: {}]
  %s4 = sld [smem:[#allocation0]]
  $region22: #{up_block_batch_pallas.7} parent=0
    _
  %s6 = ssub.s32 1, %s4
  %s7 = scalar_select 0, %s6, %s4
  // Predicated region
  $region2: #{up_block_batch_pallas.7} parent=0 // pred_check
    _
  $region3: #{up_block_batch_pallas.7} parent=0 // pred_check_branch
    %9 = sbr.rel (0) target = $region5
  $region4: #{up_block_batch_pallas.7} parent=0 // pred_region
    _
  $region5: #{up_block_batch_pallas.7} parent=0 // pred_fallthru
    _
  // Predicated region
  $region6: #{up_block_batch_pallas.7} parent=0 // pred_check
    _
  $region7: #{up_block_batch_pallas.7} parent=0 // pred_check_branch
    %11 = sbr.rel (0) target = $region9
  $region8: #{up_block_batch_pallas.7} parent=0 // pred_region
    _
  $region9: #{up_block_batch_pallas.7} parent=0 // pred_fallthru
    _
  // Predicated region
  $region10: #{up_block_batch_pallas.7} parent=0 // pred_check
    _
  $region11: #{up_block_batch_pallas.7} parent=0 // pred_check_branch
    %13 = sbr.rel (0) target = $region13
  $region12: #{up_block_batch_pallas.7} parent=0 // pred_region
    _
  $region13: #{up_block_batch_pallas.7} parent=0 // pred_fallthru
    _
  %v14 = vld [vmem:[%s0] sm:$0xff]
  %v15 = vld [vmem:[%s0 + $0x8] sm:$0xff]
  %v16 = vld [vmem:[%s1] sm:$0x1]
  %v18 = vlaneseq
  %v19 = vshrl.u32 %v18, 7
  %v20 = vsub.s32 0, %v19
  %v21 = vrot.slane %v16, %v20
  %v23 = vmul.f32 %v14, %v21
  %v24 = vmul.f32 %v15, %v21
  %v25 = vld [vmem:[%s2] sm:$0x1]
  %v27 = vlaneseq
  %v28 = vshrl.u32 %v27, 7
  %v29 = vsub.s32 0, %v28
  %v30 = vrot.slane %v25, %v29
  %v32 = vadd.f32 %v23, %v30
  %v33 = vadd.f32 %v24, %v30
  %vm34 = vcmp.ge.f32.partialorder %v32, 0.0
  %vm35 = vcmp.ge.f32.partialorder %v33, 0.0
  %v36 = vmul.f32 %v32, 0.2
  %v37 = vmul.f32 %v33, 0.2
  %v38 = vsel %vm34, %v32, %v36
  %v39 = vsel %vm35, %v33, %v37
  %40 = vst [vmem:[%s3] sm:$0xff] %v38
  %41 = vst [vmem:[%s3 + $0x8] sm:$0xff] %v39
  // Predicated region
  $region14: #{up_block_batch_pallas.7} parent=0 // pred_check
    _
  $region15: #{up_block_batch_pallas.7} parent=0 // pred_check_branch
    %43 = sbr.rel (0) target = $region17
  $region16: #{up_block_batch_pallas.7} parent=0 // pred_region
    _
  $region17: #{up_block_batch_pallas.7} parent=0 // pred_fallthru
    _
  // Predicated region
  $region18: #{up_block_batch_pallas.7} parent=0 // pred_check
    _
  $region19: #{up_block_batch_pallas.7} parent=0 // pred_check_branch
    %45 = sbr.rel (0) target = $region21
  $region20: #{up_block_batch_pallas.7} parent=0 // pred_region
    _
  $region21: #{up_block_batch_pallas.7} parent=0 // pred_fallthru
    _

</llo_original>
